<compile_context>
chip_gen: v7x
topology: tpu7x:2x2x1
jax: 0.10.0
libtpu: 0.0.40
codegen_flags: <defaults>
</compile_context>

<pallas_src>
import jax
import jax.numpy as jnp
from jax.experimental import pallas as pl
from jax.experimental.pallas import tpu as pltpu

# ---- small, self-consistent config (scaled-down from the module's globals) ----
VOCAB_SIZE = 65          # len(chars) for char-level text
V_PAD      = 128         # vocab padded to a lane-dense multiple of 128
N_EMBD     = 128
N_HEAD     = 4
HEAD_SIZE  = N_EMBD // N_HEAD
N_LAYER    = 2
BLOCK_SIZE = 16          # max context length
EPS        = 1e-5        # PyTorch LayerNorm default


def _layer_norm(x, gamma, beta):
    # x: (N, C); gamma/beta: (1, C); f32 math
    mu  = jnp.mean(x, axis=-1, keepdims=True)
    var = jnp.mean((x - mu) ** 2, axis=-1, keepdims=True)
    return (x - mu) * jax.lax.rsqrt(var + EPS) * gamma + beta


# -------------------- fully fused forward kernel --------------------
def _make_fused_kernel():
    """Embedding gather -> N_LAYER blocks -> ln_f -> lm_head, one kernel, one tile."""

    def kernel(idx_ref, tok_ref, pos_oh_ref, pos_ref, bias_ref, *refs):
        o_ref = refs[-1]
        lnf_g, lnf_b, lm_w, lm_b = refs[-5:-1]
        layer_refs = refs[:-5]

        Ttot = idx_ref.shape[0]                                  # B*T (static)

        # ---- token embedding gather as an exact one-hot matmul (fused, no XLA gather) ----
        ids = idx_ref[...]                                       # (Ttot, 1) int32
        tok_oh = (jax.lax.broadcasted_iota(jnp.int32, (Ttot, V_PAD), 1) == ids
                  ).astype(jnp.float32)
        x = jnp.dot(tok_oh, tok_ref[...], preferred_element_type=jnp.float32)   # (Ttot, C)
        # positional embedding via precomputed (constant) one-hot: row r -> pos r % T
        x = x + jnp.dot(pos_oh_ref[...], pos_ref[...],
                        preferred_element_type=jnp.float32)

        attn_bias = bias_ref[...]                                # (Ttot, Ttot) 0 / -1e30
        scale = HEAD_SIZE ** -0.5
        trans_b = (((1,), (1,)), ((), ()))                       # contract last dims (q @ k^T)

        for l in range(N_LAYER):                                 # static unrolled layer loop
            (g1, b1, wq, wk, wv, wproj, bproj,
             g2, b2, w1, bb1, w2, bb2) = layer_refs[l * 13:(l + 1) * 13]

            # ---- multi-head causal self-attention (pre-LN) ----
            xn = _layer_norm(x, g1[...], b1[...]).astype(jnp.bfloat16)
            q = jnp.dot(xn, wq[...], preferred_element_type=jnp.float32)   # (Ttot, C)
            k = jnp.dot(xn, wk[...], preferred_element_type=jnp.float32)
            v = jnp.dot(xn, wv[...], preferred_element_type=jnp.float32)

            head_outs = []
            for h in range(N_HEAD):                              # static unrolled head loop
                sl = slice(h * HEAD_SIZE, (h + 1) * HEAD_SIZE)
                qh, kh, vh = q[:, sl], k[:, sl], v[:, sl]
                wei = jax.lax.dot_general(qh, kh, trans_b,
                                          preferred_element_type=jnp.float32)
                wei = wei * scale + attn_bias                    # block-diag causal mask
                wei = wei - jnp.max(wei, axis=-1, keepdims=True)
                p = jnp.exp(wei)
                p = p * pl.reciprocal(jnp.sum(p, axis=-1, keepdims=True), approx=True)
                head_outs.append(jnp.dot(p, vh, preferred_element_type=jnp.float32))
            attn = jnp.concatenate(head_outs, axis=-1)           # (Ttot, C)
            attn = jnp.dot(attn.astype(jnp.bfloat16), wproj[...],
                           preferred_element_type=jnp.float32) + bproj[...]
            x = x + attn                                         # dropout = identity (eval)

            # ---- feed-forward (pre-LN) ----
            xn2 = _layer_norm(x, g2[...], b2[...]).astype(jnp.bfloat16)
            h1 = jnp.dot(xn2, w1[...], preferred_element_type=jnp.float32) + bb1[...]
            h1 = jnp.maximum(h1, 0.0)                            # ReLU
            ff = jnp.dot(h1.astype(jnp.bfloat16), w2[...],
                         preferred_element_type=jnp.float32) + bb2[...]
            x = x + ff                                           # dropout = identity (eval)

        # ---- final LayerNorm + lm_head, lane-dense padded-vocab store ----
        xf = _layer_norm(x, lnf_g[...], lnf_b[...]).astype(jnp.bfloat16)
        logits = jnp.dot(xf, lm_w[...], preferred_element_type=jnp.float32) + lm_b[...]
        o_ref[...] = logits.astype(o_ref.dtype)                  # (Ttot, V_PAD)

    return kernel


# -------------------- wrapper --------------------
def _full_spec(shape):
    nd = len(shape)
    return pl.BlockSpec(shape, lambda i, nd=nd: (0,) * nd)


@jax.jit
def forward(idx, params):
    """BigramLanguageModel.forward(idx, targets=None) -> logits (loss is None)."""
    B, T = idx.shape
    Ttot = B * T

    # Constant index helpers (pure functions of static shapes -> XLA constant-folds them).
    r = jnp.arange(Ttot)
    bid = r // T
    allowed = (bid[:, None] == bid[None, :]) & (r[:, None] >= r[None, :])
    attn_bias = jnp.where(allowed, 0.0, -1e30).astype(jnp.float32)        # (Ttot, Ttot)
    pos_oh = ((r[:, None] % T) == jnp.arange(BLOCK_SIZE)[None, :]
              ).astype(jnp.float32)                                       # (Ttot, BLOCK_SIZE)

    flat = [p for blk in params["blocks"] for p in blk]
    operands = ([idx.reshape(Ttot, 1).astype(jnp.int32),
                 params["tok_emb"], pos_oh, params["pos_emb"], attn_bias]
                + flat
                + [params["lnf_g"], params["lnf_b"], params["lm_w"], params["lm_b"]])

    logits_pad = pl.pallas_call(
        _make_fused_kernel(),
        out_shape=jax.ShapeDtypeStruct((Ttot, V_PAD), jnp.float32),
        grid=(1,),
        in_specs=[_full_spec(a.shape) for a in operands],
        out_specs=pl.BlockSpec((Ttot, V_PAD), lambda i: (0, 0)),
        compiler_params=pltpu.CompilerParams(dimension_semantics=("arbitrary",)),
    )(*operands)

    # Drop padded vocab columns before anything downstream (softmax/loss/reference).
    return logits_pad[:, :VOCAB_SIZE].reshape(B, T, VOCAB_SIZE)


# -------------------- parameter init (deterministic, matches __init__ shapes) --------------------
def init_params(key):
    def normal(k, shape, dtype=jnp.float32):
        return (0.02 * jax.random.normal(k, shape)).astype(dtype)

    keys = iter(jax.random.split(key, 64))
    params = {}
    tok = normal(next(keys), (VOCAB_SIZE, N_EMBD))
    params["tok_emb"] = jnp.zeros((V_PAD, N_EMBD), jnp.float32).at[:VOCAB_SIZE].set(tok)
    params["pos_emb"] = normal(next(keys), (BLOCK_SIZE, N_EMBD))

    blocks = []
    for _ in range(N_LAYER):
        g1 = jnp.ones((1, N_EMBD), jnp.float32)
        b1 = jnp.zeros((1, N_EMBD), jnp.float32)
        # per-head Linear(n_embd, head_size, bias=False) stacked along output dim; bf16 weights
        wq = normal(next(keys), (N_EMBD, N_EMBD), jnp.bfloat16)
        wk = normal(next(keys), (N_EMBD, N_EMBD), jnp.bfloat16)
        wv = normal(next(keys), (N_EMBD, N_EMBD), jnp.bfloat16)
        wproj = normal(next(keys), (N_EMBD, N_EMBD), jnp.bfloat16)
        bproj = jnp.zeros((1, N_EMBD), jnp.float32)
        g2 = jnp.ones((1, N_EMBD), jnp.float32)
        b2 = jnp.zeros((1, N_EMBD), jnp.float32)
        w1 = normal(next(keys), (N_EMBD, 4 * N_EMBD), jnp.bfloat16)
        bb1 = jnp.zeros((1, 4 * N_EMBD), jnp.float32)
        w2 = normal(next(keys), (4 * N_EMBD, N_EMBD), jnp.bfloat16)
        bb2 = jnp.zeros((1, N_EMBD), jnp.float32)
        blocks.append((g1, b1, wq, wk, wv, wproj, bproj, g2, b2, w1, bb1, w2, bb2))
    params["blocks"] = blocks

    params["lnf_g"] = jnp.ones((1, N_EMBD), jnp.float32)
    params["lnf_b"] = jnp.zeros((1, N_EMBD), jnp.float32)
    lm_w = normal(next(keys), (N_EMBD, VOCAB_SIZE), jnp.bfloat16)
    params["lm_w"] = jnp.zeros((N_EMBD, V_PAD), jnp.bfloat16).at[:, :VOCAB_SIZE].set(lm_w)
    params["lm_b"] = jnp.zeros((1, V_PAD), jnp.float32)
    return params


# -------------------- pure-JAX reference for verification --------------------
def _ref_ln(x, g, b):
    mu = jnp.mean(x, axis=-1, keepdims=True)
    var = jnp.mean((x - mu) ** 2, axis=-1, keepdims=True)
    return (x - mu) / jnp.sqrt(var + EPS) * g + b


def forward_ref(idx, params):
    B, T = idx.shape
    f32 = lambda a: a.astype(jnp.float32)
    x = jnp.take(params["tok_emb"], idx, axis=0) + params["pos_emb"][:T]
    causal = jnp.tril(jnp.ones((T, T), bool))
    for (g1, b1, wq, wk, wv, wproj, bproj, g2, b2, w1, bb1, w2, bb2) in params["blocks"]:
        xn = _ref_ln(x, g1, b1)
        q, k, v = xn @ f32(wq), xn @ f32(wk), xn @ f32(wv)
        outs = []
        for h in range(N_HEAD):
            sl = slice(h * HEAD_SIZE, (h + 1) * HEAD_SIZE)
            wei = jnp.einsum("btd,bsd->bts", q[..., sl], k[..., sl]) * HEAD_SIZE ** -0.5
            wei = jnp.where(causal, wei, -jnp.inf)
            wei = jax.nn.softmax(wei, axis=-1)
            outs.append(jnp.einsum("bts,bsd->btd", wei, v[..., sl]))
        x = x + (jnp.concatenate(outs, -1) @ f32(wproj) + bproj)
        xn2 = _ref_ln(x, g2, b2)
        x = x + (jnp.maximum(xn2 @ f32(w1) + bb1, 0.0) @ f32(w2) + bb2)
    xf = _ref_ln(x, params["lnf_g"], params["lnf_b"])
    logits = xf @ f32(params["lm_w"]) + params["lm_b"]
    return logits[:, :, :VOCAB_SIZE]


if __name__ == "__main__":
    key = jax.random.PRNGKey(0)
    k_params, k_idx = jax.random.split(key)
    params = init_params(k_params)

    B, T = 2, BLOCK_SIZE                                      # (2, 16) token ids
    idx = jax.random.randint(k_idx, (B, T), 0, VOCAB_SIZE, dtype=jnp.int32)

    logits = forward(idx, params)
    jax.block_until_ready(logits)
    assert logits.shape == (B, T, VOCAB_SIZE), logits.shape

    ref = forward_ref(idx, params)
    max_err = float(jnp.max(jnp.abs(logits - ref)))
    assert jnp.allclose(logits, ref, atol=2e-2, rtol=2e-2), f"mismatch vs reference: {max_err}"

    # TODO(synk): cross-entropy loss branch (targets is not None) and multinomial
    # sampling in generate() are host-side glue, not implemented as kernels.
    print("KERNEL_OK")
</pallas_src>

<mosaic_0001>
module attributes {stable_mosaic.version = 11 : i64} {
  func.func @kernel(%arg0: i32, %arg1: memref<32x1xi32, #tpu.memory_space<vmem>>, %arg2: memref<128x128xf32, #tpu.memory_space<vmem>>, %arg3: memref<32x16xf32, #tpu.memory_space<vmem>>, %arg4: memref<16x128xf32, #tpu.memory_space<vmem>>, %arg5: memref<32x32xf32, #tpu.memory_space<vmem>>, %arg6: memref<1x128xf32, #tpu.memory_space<vmem>>, %arg7: memref<1x128xf32, #tpu.memory_space<vmem>>, %arg8: memref<128x128xbf16, #tpu.memory_space<vmem>>, %arg9: memref<128x128xbf16, #tpu.memory_space<vmem>>, %arg10: memref<128x128xbf16, #tpu.memory_space<vmem>>, %arg11: memref<128x128xbf16, #tpu.memory_space<vmem>>, %arg12: memref<1x128xf32, #tpu.memory_space<vmem>>, %arg13: memref<1x128xf32, #tpu.memory_space<vmem>>, %arg14: memref<1x128xf32, #tpu.memory_space<vmem>>, %arg15: memref<128x512xbf16, #tpu.memory_space<vmem>>, %arg16: memref<1x512xf32, #tpu.memory_space<vmem>>, %arg17: memref<512x128xbf16, #tpu.memory_space<vmem>>, %arg18: memref<1x128xf32, #tpu.memory_space<vmem>>, %arg19: memref<1x128xf32, #tpu.memory_space<vmem>>, %arg20: memref<1x128xf32, #tpu.memory_space<vmem>>, %arg21: memref<128x128xbf16, #tpu.memory_space<vmem>>, %arg22: memref<128x128xbf16, #tpu.memory_space<vmem>>, %arg23: memref<128x128xbf16, #tpu.memory_space<vmem>>, %arg24: memref<128x128xbf16, #tpu.memory_space<vmem>>, %arg25: memref<1x128xf32, #tpu.memory_space<vmem>>, %arg26: memref<1x128xf32, #tpu.memory_space<vmem>>, %arg27: memref<1x128xf32, #tpu.memory_space<vmem>>, %arg28: memref<128x512xbf16, #tpu.memory_space<vmem>>, %arg29: memref<1x512xf32, #tpu.memory_space<vmem>>, %arg30: memref<512x128xbf16, #tpu.memory_space<vmem>>, %arg31: memref<1x128xf32, #tpu.memory_space<vmem>>, %arg32: memref<1x128xf32, #tpu.memory_space<vmem>>, %arg33: memref<1x128xf32, #tpu.memory_space<vmem>>, %arg34: memref<128x128xbf16, #tpu.memory_space<vmem>>, %arg35: memref<1x128xf32, #tpu.memory_space<vmem>>, %arg36: memref<32x128xf32, #tpu.memory_space<vmem>>) attributes {dimension_semantics = [#tpu.dimension_semantics<arbitrary>], iteration_bounds = array<i64: 1>, scalar_prefetch = 0 : i64, scratch_operands = 0 : i64, tpu.core_type = #tpu.core_type<tc>, window_params = [{pipeline_mode = #tpu.pipeline_mode<synchronous>, transform_indices = @transform_0, window_bounds = array<i64: 32, 1>}, {pipeline_mode = #tpu.pipeline_mode<synchronous>, transform_indices = @transform_1, window_bounds = array<i64: 128, 128>}, {pipeline_mode = #tpu.pipeline_mode<synchronous>, transform_indices = @transform_2, window_bounds = array<i64: 32, 16>}, {pipeline_mode = #tpu.pipeline_mode<synchronous>, transform_indices = @transform_3, window_bounds = array<i64: 16, 128>}, {pipeline_mode = #tpu.pipeline_mode<synchronous>, transform_indices = @transform_4, window_bounds = array<i64: 32, 32>}, {pipeline_mode = #tpu.pipeline_mode<synchronous>, transform_indices = @transform_5, window_bounds = array<i64: 1, 128>}, {pipeline_mode = #tpu.pipeline_mode<synchronous>, transform_indices = @transform_6, window_bounds = array<i64: 1, 128>}, {pipeline_mode = #tpu.pipeline_mode<synchronous>, transform_indices = @transform_7, window_bounds = array<i64: 128, 128>}, {pipeline_mode = #tpu.pipeline_mode<synchronous>, transform_indices = @transform_8, window_bounds = array<i64: 128, 128>}, {pipeline_mode = #tpu.pipeline_mode<synchronous>, transform_indices = @transform_9, window_bounds = array<i64: 128, 128>}, {pipeline_mode = #tpu.pipeline_mode<synchronous>, transform_indices = @transform_10, window_bounds = array<i64: 128, 128>}, {pipeline_mode = #tpu.pipeline_mode<synchronous>, transform_indices = @transform_11, window_bounds = array<i64: 1, 128>}, {pipeline_mode = #tpu.pipeline_mode<synchronous>, transform_indices = @transform_12, window_bounds = array<i64: 1, 128>}, {pipeline_mode = #tpu.pipeline_mode<synchronous>, transform_indices = @transform_13, window_bounds = array<i64: 1, 128>}, {pipeline_mode = #tpu.pipeline_mode<synchronous>, transform_indices = @transform_14, window_bounds = array<i64: 128, 512>}, {pipeline_mode = #tpu.pipeline_mode<synchronous>, transform_indices = @transform_15, window_bounds = array<i64: 1, 512>}, {pipeline_mode = #tpu.pipeline_mode<synchronous>, transform_indices = @transform_16, window_bounds = array<i64: 512, 128>}, {pipeline_mode = #tpu.pipeline_mode<synchronous>, transform_indices = @transform_17, window_bounds = array<i64: 1, 128>}, {pipeline_mode = #tpu.pipeline_mode<synchronous>, transform_indices = @transform_18, window_bounds = array<i64: 1, 128>}, {pipeline_mode = #tpu.pipeline_mode<synchronous>, transform_indices = @transform_19, window_bounds = array<i64: 1, 128>}, {pipeline_mode = #tpu.pipeline_mode<synchronous>, transform_indices = @transform_20, window_bounds = array<i64: 128, 128>}, {pipeline_mode = #tpu.pipeline_mode<synchronous>, transform_indices = @transform_21, window_bounds = array<i64: 128, 128>}, {pipeline_mode = #tpu.pipeline_mode<synchronous>, transform_indices = @transform_22, window_bounds = array<i64: 128, 128>}, {pipeline_mode = #tpu.pipeline_mode<synchronous>, transform_indices = @transform_23, window_bounds = array<i64: 128, 128>}, {pipeline_mode = #tpu.pipeline_mode<synchronous>, transform_indices = @transform_24, window_bounds = array<i64: 1, 128>}, {pipeline_mode = #tpu.pipeline_mode<synchronous>, transform_indices = @transform_25, window_bounds = array<i64: 1, 128>}, {pipeline_mode = #tpu.pipeline_mode<synchronous>, transform_indices = @transform_26, window_bounds = array<i64: 1, 128>}, {pipeline_mode = #tpu.pipeline_mode<synchronous>, transform_indices = @transform_27, window_bounds = array<i64: 128, 512>}, {pipeline_mode = #tpu.pipeline_mode<synchronous>, transform_indices = @transform_28, window_bounds = array<i64: 1, 512>}, {pipeline_mode = #tpu.pipeline_mode<synchronous>, transform_indices = @transform_29, window_bounds = array<i64: 512, 128>}, {pipeline_mode = #tpu.pipeline_mode<synchronous>, transform_indices = @transform_30, window_bounds = array<i64: 1, 128>}, {pipeline_mode = #tpu.pipeline_mode<synchronous>, transform_indices = @transform_31, window_bounds = array<i64: 1, 128>}, {pipeline_mode = #tpu.pipeline_mode<synchronous>, transform_indices = @transform_32, window_bounds = array<i64: 1, 128>}, {pipeline_mode = #tpu.pipeline_mode<synchronous>, transform_indices = @transform_33, window_bounds = array<i64: 128, 128>}, {pipeline_mode = #tpu.pipeline_mode<synchronous>, transform_indices = @transform_34, window_bounds = array<i64: 1, 128>}, {pipeline_mode = #tpu.pipeline_mode<synchronous>, transform_indices = @transform_35, window_bounds = array<i64: 32, 128>}]} {
    %c0 = arith.constant 0 : index
    %c0_0 = arith.constant 0 : index
    %0 = vector.load %arg1[%c0, %c0_0] : memref<32x1xi32, #tpu.memory_space<vmem>>, vector<32x1xi32>
    %1 = tpu.iota {dimensions = array<i32: 1>} : vector<32x128xi32>
    %2 = vector.broadcast %0 : vector<32x1xi32> to vector<32x128xi32>
    %3 = arith.cmpi eq, %1, %2 : vector<32x128xi32>
    %4 = arith.extui %3 : vector<32x128xi1> to vector<32x128xi32>
    %5 = arith.sitofp %4 : vector<32x128xi32> to vector<32x128xf32>
    %c0_1 = arith.constant 0 : index
    %c0_2 = arith.constant 0 : index
    %6 = vector.load %arg2[%c0_1, %c0_2] : memref<128x128xf32, #tpu.memory_space<vmem>>, vector<128x128xf32>
    %cst = arith.constant dense<0.000000e+00> : vector<32x128xf32>
    %7 = tpu.matmul %5, %6, %cst {dimension_numbers = #tpu.dot_dimension_numbers<[1], [0], [0], [1], [0, 0, 1, 1], [], []>} : vector<32x128xf32>, vector<128x128xf32>, vector<32x128xf32> -> vector<32x128xf32>
    %c0_3 = arith.constant 0 : index
    %c0_4 = arith.constant 0 : index
    %8 = vector.load %arg3[%c0_3, %c0_4] : memref<32x16xf32, #tpu.memory_space<vmem>>, vector<32x16xf32>
    %c0_5 = arith.constant 0 : index
    %c0_6 = arith.constant 0 : index
    %9 = vector.load %arg4[%c0_5, %c0_6] : memref<16x128xf32, #tpu.memory_space<vmem>>, vector<16x128xf32>
    %cst_7 = arith.constant dense<0.000000e+00> : vector<32x128xf32>
    %10 = tpu.matmul %8, %9, %cst_7 {dimension_numbers = #tpu.dot_dimension_numbers<[1], [0], [0], [1], [0, 0, 1, 1], [], []>} : vector<32x16xf32>, vector<16x128xf32>, vector<32x128xf32> -> vector<32x128xf32>
    %11 = arith.addf %7, %10 : vector<32x128xf32>
    %c0_8 = arith.constant 0 : index
    %c0_9 = arith.constant 0 : index
    %12 = vector.load %arg5[%c0_8, %c0_9] : memref<32x32xf32, #tpu.memory_space<vmem>>, vector<32x32xf32>
    %c0_10 = arith.constant 0 : index
    %c0_11 = arith.constant 0 : index
    %13 = vector.load %arg6[%c0_10, %c0_11] : memref<1x128xf32, #tpu.memory_space<vmem>>, vector<1x128xf32>
    %c0_12 = arith.constant 0 : index
    %c0_13 = arith.constant 0 : index
    %14 = vector.load %arg7[%c0_12, %c0_13] : memref<1x128xf32, #tpu.memory_space<vmem>>, vector<1x128xf32>
    %cst_14 = arith.constant dense<0.000000e+00> : vector<32xf32>
    %15 = vector.multi_reduction <add>, %11, %cst_14 [1] : vector<32x128xf32> to vector<32xf32>
    %16 = vector.shape_cast %15 : vector<32xf32> to vector<32x1xf32>
    %cst_15 = arith.constant 1.280000e+02 : f32
    %17 = vector.broadcast %cst_15 : f32 to vector<32x1xf32>
    %18 = arith.divf %16, %17 : vector<32x1xf32>
    %19 = vector.broadcast %18 : vector<32x1xf32> to vector<32x128xf32>
    %20 = arith.subf %11, %19 : vector<32x128xf32>
    %21 = arith.mulf %20, %20 : vector<32x128xf32>
    %cst_16 = arith.constant dense<0.000000e+00> : vector<32xf32>
    %22 = vector.multi_reduction <add>, %21, %cst_16 [1] : vector<32x128xf32> to vector<32xf32>
    %23 = vector.shape_cast %22 : vector<32xf32> to vector<32x1xf32>
    %cst_17 = arith.constant 1.280000e+02 : f32
    %24 = vector.broadcast %cst_17 : f32 to vector<32x1xf32>
    %25 = arith.divf %23, %24 : vector<32x1xf32>
    %26 = vector.broadcast %18 : vector<32x1xf32> to vector<32x128xf32>
    %27 = arith.subf %11, %26 : vector<32x128xf32>
    %cst_18 = arith.constant 9.99999974E-6 : f32
    %28 = vector.broadcast %cst_18 : f32 to vector<32x1xf32>
    %29 = arith.addf %25, %28 : vector<32x1xf32>
    %30 = math.rsqrt %29 : vector<32x1xf32>
    %31 = vector.broadcast %30 : vector<32x1xf32> to vector<32x128xf32>
    %32 = arith.mulf %27, %31 : vector<32x128xf32>
    %33 = vector.broadcast %13 : vector<1x128xf32> to vector<32x128xf32>
    %34 = arith.mulf %32, %33 : vector<32x128xf32>
    %35 = vector.broadcast %14 : vector<1x128xf32> to vector<32x128xf32>
    %36 = arith.addf %34, %35 : vector<32x128xf32>
    %37 = arith.truncf %36 : vector<32x128xf32> to vector<32x128xbf16>
    %c0_19 = arith.constant 0 : index
    %c0_20 = arith.constant 0 : index
    %38 = vector.load %arg8[%c0_19, %c0_20] : memref<128x128xbf16, #tpu.memory_space<vmem>>, vector<128x128xbf16>
    %cst_21 = arith.constant dense<0.000000e+00> : vector<32x128xf32>
    %39 = tpu.matmul %37, %38, %cst_21 {dimension_numbers = #tpu.dot_dimension_numbers<[1], [0], [0], [1], [0, 0, 1, 1], [], []>} : vector<32x128xbf16>, vector<128x128xbf16>, vector<32x128xf32> -> vector<32x128xf32>
    %c0_22 = arith.constant 0 : index
    %c0_23 = arith.constant 0 : index
    %40 = vector.load %arg9[%c0_22, %c0_23] : memref<128x128xbf16, #tpu.memory_space<vmem>>, vector<128x128xbf16>
    %cst_24 = arith.constant dense<0.000000e+00> : vector<32x128xf32>
    %41 = tpu.matmul %37, %40, %cst_24 {dimension_numbers = #tpu.dot_dimension_numbers<[1], [0], [0], [1], [0, 0, 1, 1], [], []>} : vector<32x128xbf16>, vector<128x128xbf16>, vector<32x128xf32> -> vector<32x128xf32>
    %c0_25 = arith.constant 0 : index
    %c0_26 = arith.constant 0 : index
    %42 = vector.load %arg10[%c0_25, %c0_26] : memref<128x128xbf16, #tpu.memory_space<vmem>>, vector<128x128xbf16>
    %cst_27 = arith.constant dense<0.000000e+00> : vector<32x128xf32>
    %43 = tpu.matmul %37, %42, %cst_27 {dimension_numbers = #tpu.dot_dimension_numbers<[1], [0], [0], [1], [0, 0, 1, 1], [], []>} : vector<32x128xbf16>, vector<128x128xbf16>, vector<32x128xf32> -> vector<32x128xf32>
    %44 = vector.extract_strided_slice %39 {offsets = [0, 0], sizes = [32, 32], strides = [1, 1]} : vector<32x128xf32> to vector<32x32xf32>
    %45 = vector.extract_strided_slice %41 {offsets = [0, 0], sizes = [32, 32], strides = [1, 1]} : vector<32x128xf32> to vector<32x32xf32>
    %46 = vector.extract_strided_slice %43 {offsets = [0, 0], sizes = [32, 32], strides = [1, 1]} : vector<32x128xf32> to vector<32x32xf32>
    %cst_28 = arith.constant dense<0.000000e+00> : vector<32x32xf32>
    %47 = tpu.matmul %44, %45, %cst_28 {dimension_numbers = #tpu.dot_dimension_numbers<[1], [1], [0], [0], [0, 0, 1, 0], [], []>} : vector<32x32xf32>, vector<32x32xf32>, vector<32x32xf32> -> vector<32x32xf32>
    %cst_29 = arith.constant 0.176776692 : f32
    %48 = vector.broadcast %cst_29 : f32 to vector<32x32xf32>
    %49 = arith.mulf %47, %48 : vector<32x32xf32>
    %50 = arith.addf %49, %12 : vector<32x32xf32>
    %cst_30 = arith.constant dense<0xFF800000> : vector<32xf32>
    %51 = vector.multi_reduction <maximumf>, %50, %cst_30 [1] : vector<32x32xf32> to vector<32xf32>
    %52 = vector.shape_cast %51 : vector<32xf32> to vector<32x1xf32>
    %53 = vector.broadcast %52 : vector<32x1xf32> to vector<32x32xf32>
    %54 = arith.subf %50, %53 : vector<32x32xf32>
    %55 = math.exp %54 : vector<32x32xf32>
    %cst_31 = arith.constant dense<0.000000e+00> : vector<32xf32>
    %56 = vector.multi_reduction <add>, %55, %cst_31 [1] : vector<32x32xf32> to vector<32xf32>
    %57 = vector.shape_cast %56 : vector<32xf32> to vector<32x1xf32>
    %58 = tpu.reciprocal %57 {approx = true} : vector<32x1xf32> -> vector<32x1xf32>
    %59 = vector.broadcast %58 : vector<32x1xf32> to vector<32x32xf32>
    %60 = arith.mulf %55, %59 : vector<32x32xf32>
    %cst_32 = arith.constant dense<0.000000e+00> : vector<32x32xf32>
    %61 = tpu.matmul %60, %46, %cst_32 {dimension_numbers = #tpu.dot_dimension_numbers<[1], [0], [0], [1], [0, 0, 1, 1], [], []>} : vector<32x32xf32>, vector<32x32xf32>, vector<32x32xf32> -> vector<32x32xf32>
    %62 = vector.extract_strided_slice %39 {offsets = [0, 32], sizes = [32, 32], strides = [1, 1]} : vector<32x128xf32> to vector<32x32xf32>
    %63 = vector.extract_strided_slice %41 {offsets = [0, 32], sizes = [32, 32], strides = [1, 1]} : vector<32x128xf32> to vector<32x32xf32>
    %64 = vector.extract_strided_slice %43 {offsets = [0, 32], sizes = [32, 32], strides = [1, 1]} : vector<32x128xf32> to vector<32x32xf32>
    %cst_33 = arith.constant dense<0.000000e+00> : vector<32x32xf32>
    %65 = tpu.matmul %62, %63, %cst_33 {dimension_numbers = #tpu.dot_dimension_numbers<[1], [1], [0], [0], [0, 0, 1, 0], [], []>} : vector<32x32xf32>, vector<32x32xf32>, vector<32x32xf32> -> vector<32x32xf32>
    %cst_34 = arith.constant 0.176776692 : f32
    %66 = vector.broadcast %cst_34 : f32 to vector<32x32xf32>
    %67 = arith.mulf %65, %66 : vector<32x32xf32>
    %68 = arith.addf %67, %12 : vector<32x32xf32>
    %cst_35 = arith.constant dense<0xFF800000> : vector<32xf32>
    %69 = vector.multi_reduction <maximumf>, %68, %cst_35 [1] : vector<32x32xf32> to vector<32xf32>
    %70 = vector.shape_cast %69 : vector<32xf32> to vector<32x1xf32>
    %71 = vector.broadcast %70 : vector<32x1xf32> to vector<32x32xf32>
    %72 = arith.subf %68, %71 : vector<32x32xf32>
    %73 = math.exp %72 : vector<32x32xf32>
    %cst_36 = arith.constant dense<0.000000e+00> : vector<32xf32>
    %74 = vector.multi_reduction <add>, %73, %cst_36 [1] : vector<32x32xf32> to vector<32xf32>
    %75 = vector.shape_cast %74 : vector<32xf32> to vector<32x1xf32>
    %76 = tpu.reciprocal %75 {approx = true} : vector<32x1xf32> -> vector<32x1xf32>
    %77 = vector.broadcast %76 : vector<32x1xf32> to vector<32x32xf32>
    %78 = arith.mulf %73, %77 : vector<32x32xf32>
    %cst_37 = arith.constant dense<0.000000e+00> : vector<32x32xf32>
    %79 = tpu.matmul %78, %64, %cst_37 {dimension_numbers = #tpu.dot_dimension_numbers<[1], [0], [0], [1], [0, 0, 1, 1], [], []>} : vector<32x32xf32>, vector<32x32xf32>, vector<32x32xf32> -> vector<32x32xf32>
    %80 = vector.extract_strided_slice %39 {offsets = [0, 64], sizes = [32, 32], strides = [1, 1]} : vector<32x128xf32> to vector<32x32xf32>
    %81 = vector.extract_strided_slice %41 {offsets = [0, 64], sizes = [32, 32], strides = [1, 1]} : vector<32x128xf32> to vector<32x32xf32>
    %82 = vector.extract_strided_slice %43 {offsets = [0, 64], sizes = [32, 32], strides = [1, 1]} : vector<32x128xf32> to vector<32x32xf32>
    %cst_38 = arith.constant dense<0.000000e+00> : vector<32x32xf32>
    %83 = tpu.matmul %80, %81, %cst_38 {dimension_numbers = #tpu.dot_dimension_numbers<[1], [1], [0], [0], [0, 0, 1, 0], [], []>} : vector<32x32xf32>, vector<32x32xf32>, vector<32x32xf32> -> vector<32x32xf32>
    %cst_39 = arith.constant 0.176776692 : f32
    %84 = vector.broadcast %cst_39 : f32 to vector<32x32xf32>
    %85 = arith.mulf %83, %84 : vector<32x32xf32>
    %86 = arith.addf %85, %12 : vector<32x32xf32>
    %cst_40 = arith.constant dense<0xFF800000> : vector<32xf32>
    %87 = vector.multi_reduction <maximumf>, %86, %cst_40 [1] : vector<32x32xf32> to vector<32xf32>
    %88 = vector.shape_cast %87 : vector<32xf32> to vector<32x1xf32>
    %89 = vector.broadcast %88 : vector<32x1xf32> to vector<32x32xf32>
    %90 = arith.subf %86, %89 : vector<32x32xf32>
    %91 = math.exp %90 : vector<32x32xf32>
    %cst_41 = arith.constant dense<0.000000e+00> : vector<32xf32>
    %92 = vector.multi_reduction <add>, %91, %cst_41 [1] : vector<32x32xf32> to vector<32xf32>
    %93 = vector.shape_cast %92 : vector<32xf32> to vector<32x1xf32>
    %94 = tpu.reciprocal %93 {approx = true} : vector<32x1xf32> -> vector<32x1xf32>
    %95 = vector.broadcast %94 : vector<32x1xf32> to vector<32x32xf32>
    %96 = arith.mulf %91, %95 : vector<32x32xf32>
    %cst_42 = arith.constant dense<0.000000e+00> : vector<32x32xf32>
    %97 = tpu.matmul %96, %82, %cst_42 {dimension_numbers = #tpu.dot_dimension_numbers<[1], [0], [0], [1], [0, 0, 1, 1], [], []>} : vector<32x32xf32>, vector<32x32xf32>, vector<32x32xf32> -> vector<32x32xf32>
    %98 = vector.extract_strided_slice %39 {offsets = [0, 96], sizes = [32, 32], strides = [1, 1]} : vector<32x128xf32> to vector<32x32xf32>
    %99 = vector.extract_strided_slice %41 {offsets = [0, 96], sizes = [32, 32], strides = [1, 1]} : vector<32x128xf32> to vector<32x32xf32>
    %100 = vector.extract_strided_slice %43 {offsets = [0, 96], sizes = [32, 32], strides = [1, 1]} : vector<32x128xf32> to vector<32x32xf32>
    %cst_43 = arith.constant dense<0.000000e+00> : vector<32x32xf32>
    %101 = tpu.matmul %98, %99, %cst_43 {dimension_numbers = #tpu.dot_dimension_numbers<[1], [1], [0], [0], [0, 0, 1, 0], [], []>} : vector<32x32xf32>, vector<32x32xf32>, vector<32x32xf32> -> vector<32x32xf32>
    %cst_44 = arith.constant 0.176776692 : f32
    %102 = vector.broadcast %cst_44 : f32 to vector<32x32xf32>
    %103 = arith.mulf %101, %102 : vector<32x32xf32>
    %104 = arith.addf %103, %12 : vector<32x32xf32>
    %cst_45 = arith.constant dense<0xFF800000> : vector<32xf32>
    %105 = vector.multi_reduction <maximumf>, %104, %cst_45 [1] : vector<32x32xf32> to vector<32xf32>
    %106 = vector.shape_cast %105 : vector<32xf32> to vector<32x1xf32>
    %107 = vector.broadcast %106 : vector<32x1xf32> to vector<32x32xf32>
    %108 = arith.subf %104, %107 : vector<32x32xf32>
    %109 = math.exp %108 : vector<32x32xf32>
    %cst_46 = arith.constant dense<0.000000e+00> : vector<32xf32>
    %110 = vector.multi_reduction <add>, %109, %cst_46 [1] : vector<32x32xf32> to vector<32xf32>
    %111 = vector.shape_cast %110 : vector<32xf32> to vector<32x1xf32>
    %112 = tpu.reciprocal %111 {approx = true} : vector<32x1xf32> -> vector<32x1xf32>
    %113 = vector.broadcast %112 : vector<32x1xf32> to vector<32x32xf32>
    %114 = arith.mulf %109, %113 : vector<32x32xf32>
    %cst_47 = arith.constant dense<0.000000e+00> : vector<32x32xf32>
    %115 = tpu.matmul %114, %100, %cst_47 {dimension_numbers = #tpu.dot_dimension_numbers<[1], [0], [0], [1], [0, 0, 1, 1], [], []>} : vector<32x32xf32>, vector<32x32xf32>, vector<32x32xf32> -> vector<32x32xf32>
    %116 = tpu.concatenate %61, %79, %97, %115 in 1 : vector<32x32xf32>, vector<32x32xf32>, vector<32x32xf32>, vector<32x32xf32> -> vector<32x128xf32>
    %117 = arith.truncf %116 : vector<32x128xf32> to vector<32x128xbf16>
    %c0_48 = arith.constant 0 : index
    %c0_49 = arith.constant 0 : index
    %118 = vector.load %arg11[%c0_48, %c0_49] : memref<128x128xbf16, #tpu.memory_space<vmem>>, vector<128x128xbf16>
    %cst_50 = arith.constant dense<0.000000e+00> : vector<32x128xf32>
    %119 = tpu.matmul %117, %118, %cst_50 {dimension_numbers = #tpu.dot_dimension_numbers<[1], [0], [0], [1], [0, 0, 1, 1], [], []>} : vector<32x128xbf16>, vector<128x128xbf16>, vector<32x128xf32> -> vector<32x128xf32>
    %c0_51 = arith.constant 0 : index
    %c0_52 = arith.constant 0 : index
    %120 = vector.load %arg12[%c0_51, %c0_52] : memref<1x128xf32, #tpu.memory_space<vmem>>, vector<1x128xf32>
    %121 = vector.broadcast %120 : vector<1x128xf32> to vector<32x128xf32>
    %122 = arith.addf %119, %121 : vector<32x128xf32>
    %123 = arith.addf %11, %122 : vector<32x128xf32>
    %c0_53 = arith.constant 0 : index
    %c0_54 = arith.constant 0 : index
    %124 = vector.load %arg13[%c0_53, %c0_54] : memref<1x128xf32, #tpu.memory_space<vmem>>, vector<1x128xf32>
    %c0_55 = arith.constant 0 : index
    %c0_56 = arith.constant 0 : index
    %125 = vector.load %arg14[%c0_55, %c0_56] : memref<1x128xf32, #tpu.memory_space<vmem>>, vector<1x128xf32>
    %cst_57 = arith.constant dense<0.000000e+00> : vector<32xf32>
    %126 = vector.multi_reduction <add>, %123, %cst_57 [1] : vector<32x128xf32> to vector<32xf32>
    %127 = vector.shape_cast %126 : vector<32xf32> to vector<32x1xf32>
    %cst_58 = arith.constant 1.280000e+02 : f32
    %128 = vector.broadcast %cst_58 : f32 to vector<32x1xf32>
    %129 = arith.divf %127, %128 : vector<32x1xf32>
    %130 = vector.broadcast %129 : vector<32x1xf32> to vector<32x128xf32>
    %131 = arith.subf %123, %130 : vector<32x128xf32>
    %132 = arith.mulf %131, %131 : vector<32x128xf32>
    %cst_59 = arith.constant dense<0.000000e+00> : vector<32xf32>
    %133 = vector.multi_reduction <add>, %132, %cst_59 [1] : vector<32x128xf32> to vector<32xf32>
    %134 = vector.shape_cast %133 : vector<32xf32> to vector<32x1xf32>
    %cst_60 = arith.constant 1.280000e+02 : f32
    %135 = vector.broadcast %cst_60 : f32 to vector<32x1xf32>
    %136 = arith.divf %134, %135 : vector<32x1xf32>
    %137 = vector.broadcast %129 : vector<32x1xf32> to vector<32x128xf32>
    %138 = arith.subf %123, %137 : vector<32x128xf32>
    %cst_61 = arith.constant 9.99999974E-6 : f32
    %139 = vector.broadcast %cst_61 : f32 to vector<32x1xf32>
    %140 = arith.addf %136, %139 : vector<32x1xf32>
    %141 = math.rsqrt %140 : vector<32x1xf32>
    %142 = vector.broadcast %141 : vector<32x1xf32> to vector<32x128xf32>
    %143 = arith.mulf %138, %142 : vector<32x128xf32>
    %144 = vector.broadcast %124 : vector<1x128xf32> to vector<32x128xf32>
    %145 = arith.mulf %143, %144 : vector<32x128xf32>
    %146 = vector.broadcast %125 : vector<1x128xf32> to vector<32x128xf32>
    %147 = arith.addf %145, %146 : vector<32x128xf32>
    %148 = arith.truncf %147 : vector<32x128xf32> to vector<32x128xbf16>
    %c0_62 = arith.constant 0 : index
    %c0_63 = arith.constant 0 : index
    %149 = vector.load %arg15[%c0_62, %c0_63] : memref<128x512xbf16, #tpu.memory_space<vmem>>, vector<128x512xbf16>
    %cst_64 = arith.constant dense<0.000000e+00> : vector<32x512xf32>
    %150 = tpu.matmul %148, %149, %cst_64 {dimension_numbers = #tpu.dot_dimension_numbers<[1], [0], [0], [1], [0, 0, 1, 1], [], []>} : vector<32x128xbf16>, vector<128x512xbf16>, vector<32x512xf32> -> vector<32x512xf32>
    %c0_65 = arith.constant 0 : index
    %c0_66 = arith.constant 0 : index
    %151 = vector.load %arg16[%c0_65, %c0_66] : memref<1x512xf32, #tpu.memory_space<vmem>>, vector<1x512xf32>
    %152 = vector.broadcast %151 : vector<1x512xf32> to vector<32x512xf32>
    %153 = arith.addf %150, %152 : vector<32x512xf32>
    %cst_67 = arith.constant 0.000000e+00 : f32
    %154 = vector.broadcast %cst_67 : f32 to vector<32x512xf32>
    %155 = arith.maximumf %153, %154 : vector<32x512xf32>
    %156 = arith.truncf %155 : vector<32x512xf32> to vector<32x512xbf16>
    %c0_68 = arith.constant 0 : index
    %c0_69 = arith.constant 0 : index
    %157 = vector.load %arg17[%c0_68, %c0_69] : memref<512x128xbf16, #tpu.memory_space<vmem>>, vector<512x128xbf16>
    %cst_70 = arith.constant dense<0.000000e+00> : vector<32x128xf32>
    %158 = tpu.matmul %156, %157, %cst_70 {dimension_numbers = #tpu.dot_dimension_numbers<[1], [0], [0], [1], [0, 0, 1, 1], [], []>} : vector<32x512xbf16>, vector<512x128xbf16>, vector<32x128xf32> -> vector<32x128xf32>
    %c0_71 = arith.constant 0 : index
    %c0_72 = arith.constant 0 : index
    %159 = vector.load %arg18[%c0_71, %c0_72] : memref<1x128xf32, #tpu.memory_space<vmem>>, vector<1x128xf32>
    %160 = vector.broadcast %159 : vector<1x128xf32> to vector<32x128xf32>
    %161 = arith.addf %158, %160 : vector<32x128xf32>
    %162 = arith.addf %123, %161 : vector<32x128xf32>
    %c0_73 = arith.constant 0 : index
    %c0_74 = arith.constant 0 : index
    %163 = vector.load %arg19[%c0_73, %c0_74] : memref<1x128xf32, #tpu.memory_space<vmem>>, vector<1x128xf32>
    %c0_75 = arith.constant 0 : index
    %c0_76 = arith.constant 0 : index
    %164 = vector.load %arg20[%c0_75, %c0_76] : memref<1x128xf32, #tpu.memory_space<vmem>>, vector<1x128xf32>
    %cst_77 = arith.constant dense<0.000000e+00> : vector<32xf32>
    %165 = vector.multi_reduction <add>, %162, %cst_77 [1] : vector<32x128xf32> to vector<32xf32>
    %166 = vector.shape_cast %165 : vector<32xf32> to vector<32x1xf32>
    %cst_78 = arith.constant 1.280000e+02 : f32
    %167 = vector.broadcast %cst_78 : f32 to vector<32x1xf32>
    %168 = arith.divf %166, %167 : vector<32x1xf32>
    %169 = vector.broadcast %168 : vector<32x1xf32> to vector<32x128xf32>
    %170 = arith.subf %162, %169 : vector<32x128xf32>
    %171 = arith.mulf %170, %170 : vector<32x128xf32>
    %cst_79 = arith.constant dense<0.000000e+00> : vector<32xf32>
    %172 = vector.multi_reduction <add>, %171, %cst_79 [1] : vector<32x128xf32> to vector<32xf32>
    %173 = vector.shape_cast %172 : vector<32xf32> to vector<32x1xf32>
    %cst_80 = arith.constant 1.280000e+02 : f32
    %174 = vector.broadcast %cst_80 : f32 to vector<32x1xf32>
    %175 = arith.divf %173, %174 : vector<32x1xf32>
    %176 = vector.broadcast %168 : vector<32x1xf32> to vector<32x128xf32>
    %177 = arith.subf %162, %176 : vector<32x128xf32>
    %cst_81 = arith.constant 9.99999974E-6 : f32
    %178 = vector.broadcast %cst_81 : f32 to vector<32x1xf32>
    %179 = arith.addf %175, %178 : vector<32x1xf32>
    %180 = math.rsqrt %179 : vector<32x1xf32>
    %181 = vector.broadcast %180 : vector<32x1xf32> to vector<32x128xf32>
    %182 = arith.mulf %177, %181 : vector<32x128xf32>
    %183 = vector.broadcast %163 : vector<1x128xf32> to vector<32x128xf32>
    %184 = arith.mulf %182, %183 : vector<32x128xf32>
    %185 = vector.broadcast %164 : vector<1x128xf32> to vector<32x128xf32>
    %186 = arith.addf %184, %185 : vector<32x128xf32>
    %187 = arith.truncf %186 : vector<32x128xf32> to vector<32x128xbf16>
    %c0_82 = arith.constant 0 : index
    %c0_83 = arith.constant 0 : index
    %188 = vector.load %arg21[%c0_82, %c0_83] : memref<128x128xbf16, #tpu.memory_space<vmem>>, vector<128x128xbf16>
    %cst_84 = arith.constant dense<0.000000e+00> : vector<32x128xf32>
    %189 = tpu.matmul %187, %188, %cst_84 {dimension_numbers = #tpu.dot_dimension_numbers<[1], [0], [0], [1], [0, 0, 1, 1], [], []>} : vector<32x128xbf16>, vector<128x128xbf16>, vector<32x128xf32> -> vector<32x128xf32>
    %c0_85 = arith.constant 0 : index
    %c0_86 = arith.constant 0 : index
    %190 = vector.load %arg22[%c0_85, %c0_86] : memref<128x128xbf16, #tpu.memory_space<vmem>>, vector<128x128xbf16>
    %cst_87 = arith.constant dense<0.000000e+00> : vector<32x128xf32>
    %191 = tpu.matmul %187, %190, %cst_87 {dimension_numbers = #tpu.dot_dimension_numbers<[1], [0], [0], [1], [0, 0, 1, 1], [], []>} : vector<32x128xbf16>, vector<128x128xbf16>, vector<32x128xf32> -> vector<32x128xf32>
    %c0_88 = arith.constant 0 : index
    %c0_89 = arith.constant 0 : index
    %192 = vector.load %arg23[%c0_88, %c0_89] : memref<128x128xbf16, #tpu.memory_space<vmem>>, vector<128x128xbf16>
    %cst_90 = arith.constant dense<0.000000e+00> : vector<32x128xf32>
    %193 = tpu.matmul %187, %192, %cst_90 {dimension_numbers = #tpu.dot_dimension_numbers<[1], [0], [0], [1], [0, 0, 1, 1], [], []>} : vector<32x128xbf16>, vector<128x128xbf16>, vector<32x128xf32> -> vector<32x128xf32>
    %194 = vector.extract_strided_slice %189 {offsets = [0, 0], sizes = [32, 32], strides = [1, 1]} : vector<32x128xf32> to vector<32x32xf32>
    %195 = vector.extract_strided_slice %191 {offsets = [0, 0], sizes = [32, 32], strides = [1, 1]} : vector<32x128xf32> to vector<32x32xf32>
    %196 = vector.extract_strided_slice %193 {offsets = [0, 0], sizes = [32, 32], strides = [1, 1]} : vector<32x128xf32> to vector<32x32xf32>
    %cst_91 = arith.constant dense<0.000000e+00> : vector<32x32xf32>
    %197 = tpu.matmul %194, %195, %cst_91 {dimension_numbers = #tpu.dot_dimension_numbers<[1], [1], [0], [0], [0, 0, 1, 0], [], []>} : vector<32x32xf32>, vector<32x32xf32>, vector<32x32xf32> -> vector<32x32xf32>
    %cst_92 = arith.constant 0.176776692 : f32
    %198 = vector.broadcast %cst_92 : f32 to vector<32x32xf32>
    %199 = arith.mulf %197, %198 : vector<32x32xf32>
    %200 = arith.addf %199, %12 : vector<32x32xf32>
    %cst_93 = arith.constant dense<0xFF800000> : vector<32xf32>
    %201 = vector.multi_reduction <maximumf>, %200, %cst_93 [1] : vector<32x32xf32> to vector<32xf32>
    %202 = vector.shape_cast %201 : vector<32xf32> to vector<32x1xf32>
    %203 = vector.broadcast %202 : vector<32x1xf32> to vector<32x32xf32>
    %204 = arith.subf %200, %203 : vector<32x32xf32>
    %205 = math.exp %204 : vector<32x32xf32>
    %cst_94 = arith.constant dense<0.000000e+00> : vector<32xf32>
    %206 = vector.multi_reduction <add>, %205, %cst_94 [1] : vector<32x32xf32> to vector<32xf32>
    %207 = vector.shape_cast %206 : vector<32xf32> to vector<32x1xf32>
    %208 = tpu.reciprocal %207 {approx = true} : vector<32x1xf32> -> vector<32x1xf32>
    %209 = vector.broadcast %208 : vector<32x1xf32> to vector<32x32xf32>
    %210 = arith.mulf %205, %209 : vector<32x32xf32>
    %cst_95 = arith.constant dense<0.000000e+00> : vector<32x32xf32>
    %211 = tpu.matmul %210, %196, %cst_95 {dimension_numbers = #tpu.dot_dimension_numbers<[1], [0], [0], [1], [0, 0, 1, 1], [], []>} : vector<32x32xf32>, vector<32x32xf32>, vector<32x32xf32> -> vector<32x32xf32>
    %212 = vector.extract_strided_slice %189 {offsets = [0, 32], sizes = [32, 32], strides = [1, 1]} : vector<32x128xf32> to vector<32x32xf32>
    %213 = vector.extract_strided_slice %191 {offsets = [0, 32], sizes = [32, 32], strides = [1, 1]} : vector<32x128xf32> to vector<32x32xf32>
    %214 = vector.extract_strided_slice %193 {offsets = [0, 32], sizes = [32, 32], strides = [1, 1]} : vector<32x128xf32> to vector<32x32xf32>
    %cst_96 = arith.constant dense<0.000000e+00> : vector<32x32xf32>
    %215 = tpu.matmul %212, %213, %cst_96 {dimension_numbers = #tpu.dot_dimension_numbers<[1], [1], [0], [0], [0, 0, 1, 0], [], []>} : vector<32x32xf32>, vector<32x32xf32>, vector<32x32xf32> -> vector<32x32xf32>
    %cst_97 = arith.constant 0.176776692 : f32
    %216 = vector.broadcast %cst_97 : f32 to vector<32x32xf32>
    %217 = arith.mulf %215, %216 : vector<32x32xf32>
    %218 = arith.addf %217, %12 : vector<32x32xf32>
    %cst_98 = arith.constant dense<0xFF800000> : vector<32xf32>
    %219 = vector.multi_reduction <maximumf>, %218, %cst_98 [1] : vector<32x32xf32> to vector<32xf32>
    %220 = vector.shape_cast %219 : vector<32xf32> to vector<32x1xf32>
    %221 = vector.broadcast %220 : vector<32x1xf32> to vector<32x32xf32>
    %222 = arith.subf %218, %221 : vector<32x32xf32>
    %223 = math.exp %222 : vector<32x32xf32>
    %cst_99 = arith.constant dense<0.000000e+00> : vector<32xf32>
    %224 = vector.multi_reduction <add>, %223, %cst_99 [1] : vector<32x32xf32> to vector<32xf32>
    %225 = vector.shape_cast %224 : vector<32xf32> to vector<32x1xf32>
    %226 = tpu.reciprocal %225 {approx = true} : vector<32x1xf32> -> vector<32x1xf32>
    %227 = vector.broadcast %226 : vector<32x1xf32> to vector<32x32xf32>
    %228 = arith.mulf %223, %227 : vector<32x32xf32>
    %cst_100 = arith.constant dense<0.000000e+00> : vector<32x32xf32>
    %229 = tpu.matmul %228, %214, %cst_100 {dimension_numbers = #tpu.dot_dimension_numbers<[1], [0], [0], [1], [0, 0, 1, 1], [], []>} : vector<32x32xf32>, vector<32x32xf32>, vector<32x32xf32> -> vector<32x32xf32>
    %230 = vector.extract_strided_slice %189 {offsets = [0, 64], sizes = [32, 32], strides = [1, 1]} : vector<32x128xf32> to vector<32x32xf32>
    %231 = vector.extract_strided_slice %191 {offsets = [0, 64], sizes = [32, 32], strides = [1, 1]} : vector<32x128xf32> to vector<32x32xf32>
    %232 = vector.extract_strided_slice %193 {offsets = [0, 64], sizes = [32, 32], strides = [1, 1]} : vector<32x128xf32> to vector<32x32xf32>
    %cst_101 = arith.constant dense<0.000000e+00> : vector<32x32xf32>
    %233 = tpu.matmul %230, %231, %cst_101 {dimension_numbers = #tpu.dot_dimension_numbers<[1], [1], [0], [0], [0, 0, 1, 0], [], []>} : vector<32x32xf32>, vector<32x32xf32>, vector<32x32xf32> -> vector<32x32xf32>
    %cst_102 = arith.constant 0.176776692 : f32
    %234 = vector.broadcast %cst_102 : f32 to vector<32x32xf32>
    %235 = arith.mulf %233, %234 : vector<32x32xf32>
    %236 = arith.addf %235, %12 : vector<32x32xf32>
    %cst_103 = arith.constant dense<0xFF800000> : vector<32xf32>
    %237 = vector.multi_reduction <maximumf>, %236, %cst_103 [1] : vector<32x32xf32> to vector<32xf32>
    %238 = vector.shape_cast %237 : vector<32xf32> to vector<32x1xf32>
    %239 = vector.broadcast %238 : vector<32x1xf32> to vector<32x32xf32>
    %240 = arith.subf %236, %239 : vector<32x32xf32>
    %241 = math.exp %240 : vector<32x32xf32>
    %cst_104 = arith.constant dense<0.000000e+00> : vector<32xf32>
    %242 = vector.multi_reduction <add>, %241, %cst_104 [1] : vector<32x32xf32> to vector<32xf32>
    %243 = vector.shape_cast %242 : vector<32xf32> to vector<32x1xf32>
    %244 = tpu.reciprocal %243 {approx = true} : vector<32x1xf32> -> vector<32x1xf32>
    %245 = vector.broadcast %244 : vector<32x1xf32> to vector<32x32xf32>
    %246 = arith.mulf %241, %245 : vector<32x32xf32>
    %cst_105 = arith.constant dense<0.000000e+00> : vector<32x32xf32>
    %247 = tpu.matmul %246, %232, %cst_105 {dimension_numbers = #tpu.dot_dimension_numbers<[1], [0], [0], [1], [0, 0, 1, 1], [], []>} : vector<32x32xf32>, vector<32x32xf32>, vector<32x32xf32> -> vector<32x32xf32>
    %248 = vector.extract_strided_slice %189 {offsets = [0, 96], sizes = [32, 32], strides = [1, 1]} : vector<32x128xf32> to vector<32x32xf32>
    %249 = vector.extract_strided_slice %191 {offsets = [0, 96], sizes = [32, 32], strides = [1, 1]} : vector<32x128xf32> to vector<32x32xf32>
    %250 = vector.extract_strided_slice %193 {offsets = [0, 96], sizes = [32, 32], strides = [1, 1]} : vector<32x128xf32> to vector<32x32xf32>
    %cst_106 = arith.constant dense<0.000000e+00> : vector<32x32xf32>
    %251 = tpu.matmul %248, %249, %cst_106 {dimension_numbers = #tpu.dot_dimension_numbers<[1], [1], [0], [0], [0, 0, 1, 0], [], []>} : vector<32x32xf32>, vector<32x32xf32>, vector<32x32xf32> -> vector<32x32xf32>
    %cst_107 = arith.constant 0.176776692 : f32
    %252 = vector.broadcast %cst_107 : f32 to vector<32x32xf32>
    %253 = arith.mulf %251, %252 : vector<32x32xf32>
    %254 = arith.addf %253, %12 : vector<32x32xf32>
    %cst_108 = arith.constant dense<0xFF800000> : vector<32xf32>
    %255 = vector.multi_reduction <maximumf>, %254, %cst_108 [1] : vector<32x32xf32> to vector<32xf32>
    %256 = vector.shape_cast %255 : vector<32xf32> to vector<32x1xf32>
    %257 = vector.broadcast %256 : vector<32x1xf32> to vector<32x32xf32>
    %258 = arith.subf %254, %257 : vector<32x32xf32>
    %259 = math.exp %258 : vector<32x32xf32>
    %cst_109 = arith.constant dense<0.000000e+00> : vector<32xf32>
    %260 = vector.multi_reduction <add>, %259, %cst_109 [1] : vector<32x32xf32> to vector<32xf32>
    %261 = vector.shape_cast %260 : vector<32xf32> to vector<32x1xf32>
    %262 = tpu.reciprocal %261 {approx = true} : vector<32x1xf32> -> vector<32x1xf32>
    %263 = vector.broadcast %262 : vector<32x1xf32> to vector<32x32xf32>
    %264 = arith.mulf %259, %263 : vector<32x32xf32>
    %cst_110 = arith.constant dense<0.000000e+00> : vector<32x32xf32>
    %265 = tpu.matmul %264, %250, %cst_110 {dimension_numbers = #tpu.dot_dimension_numbers<[1], [0], [0], [1], [0, 0, 1, 1], [], []>} : vector<32x32xf32>, vector<32x32xf32>, vector<32x32xf32> -> vector<32x32xf32>
    %266 = tpu.concatenate %211, %229, %247, %265 in 1 : vector<32x32xf32>, vector<32x32xf32>, vector<32x32xf32>, vector<32x32xf32> -> vector<32x128xf32>
    %267 = arith.truncf %266 : vector<32x128xf32> to vector<32x128xbf16>
    %c0_111 = arith.constant 0 : index
    %c0_112 = arith.constant 0 : index
    %268 = vector.load %arg24[%c0_111, %c0_112] : memref<128x128xbf16, #tpu.memory_space<vmem>>, vector<128x128xbf16>
    %cst_113 = arith.constant dense<0.000000e+00> : vector<32x128xf32>
    %269 = tpu.matmul %267, %268, %cst_113 {dimension_numbers = #tpu.dot_dimension_numbers<[1], [0], [0], [1], [0, 0, 1, 1], [], []>} : vector<32x128xbf16>, vector<128x128xbf16>, vector<32x128xf32> -> vector<32x128xf32>
    %c0_114 = arith.constant 0 : index
    %c0_115 = arith.constant 0 : index
    %270 = vector.load %arg25[%c0_114, %c0_115] : memref<1x128xf32, #tpu.memory_space<vmem>>, vector<1x128xf32>
    %271 = vector.broadcast %270 : vector<1x128xf32> to vector<32x128xf32>
    %272 = arith.addf %269, %271 : vector<32x128xf32>
    %273 = arith.addf %162, %272 : vector<32x128xf32>
    %c0_116 = arith.constant 0 : index
    %c0_117 = arith.constant 0 : index
    %274 = vector.load %arg26[%c0_116, %c0_117] : memref<1x128xf32, #tpu.memory_space<vmem>>, vector<1x128xf32>
    %c0_118 = arith.constant 0 : index
    %c0_119 = arith.constant 0 : index
    %275 = vector.load %arg27[%c0_118, %c0_119] : memref<1x128xf32, #tpu.memory_space<vmem>>, vector<1x128xf32>
    %cst_120 = arith.constant dense<0.000000e+00> : vector<32xf32>
    %276 = vector.multi_reduction <add>, %273, %cst_120 [1] : vector<32x128xf32> to vector<32xf32>
    %277 = vector.shape_cast %276 : vector<32xf32> to vector<32x1xf32>
    %cst_121 = arith.constant 1.280000e+02 : f32
    %278 = vector.broadcast %cst_121 : f32 to vector<32x1xf32>
    %279 = arith.divf %277, %278 : vector<32x1xf32>
    %280 = vector.broadcast %279 : vector<32x1xf32> to vector<32x128xf32>
    %281 = arith.subf %273, %280 : vector<32x128xf32>
    %282 = arith.mulf %281, %281 : vector<32x128xf32>
    %cst_122 = arith.constant dense<0.000000e+00> : vector<32xf32>
    %283 = vector.multi_reduction <add>, %282, %cst_122 [1] : vector<32x128xf32> to vector<32xf32>
    %284 = vector.shape_cast %283 : vector<32xf32> to vector<32x1xf32>
    %cst_123 = arith.constant 1.280000e+02 : f32
    %285 = vector.broadcast %cst_123 : f32 to vector<32x1xf32>
    %286 = arith.divf %284, %285 : vector<32x1xf32>
    %287 = vector.broadcast %279 : vector<32x1xf32> to vector<32x128xf32>
    %288 = arith.subf %273, %287 : vector<32x128xf32>
    %cst_124 = arith.constant 9.99999974E-6 : f32
    %289 = vector.broadcast %cst_124 : f32 to vector<32x1xf32>
    %290 = arith.addf %286, %289 : vector<32x1xf32>
    %291 = math.rsqrt %290 : vector<32x1xf32>
    %292 = vector.broadcast %291 : vector<32x1xf32> to vector<32x128xf32>
    %293 = arith.mulf %288, %292 : vector<32x128xf32>
    %294 = vector.broadcast %274 : vector<1x128xf32> to vector<32x128xf32>
    %295 = arith.mulf %293, %294 : vector<32x128xf32>
    %296 = vector.broadcast %275 : vector<1x128xf32> to vector<32x128xf32>
    %297 = arith.addf %295, %296 : vector<32x128xf32>
    %298 = arith.truncf %297 : vector<32x128xf32> to vector<32x128xbf16>
    %c0_125 = arith.constant 0 : index
    %c0_126 = arith.constant 0 : index
    %299 = vector.load %arg28[%c0_125, %c0_126] : memref<128x512xbf16, #tpu.memory_space<vmem>>, vector<128x512xbf16>
    %cst_127 = arith.constant dense<0.000000e+00> : vector<32x512xf32>
    %300 = tpu.matmul %298, %299, %cst_127 {dimension_numbers = #tpu.dot_dimension_numbers<[1], [0], [0], [1], [0, 0, 1, 1], [], []>} : vector<32x128xbf16>, vector<128x512xbf16>, vector<32x512xf32> -> vector<32x512xf32>
    %c0_128 = arith.constant 0 : index
    %c0_129 = arith.constant 0 : index
    %301 = vector.load %arg29[%c0_128, %c0_129] : memref<1x512xf32, #tpu.memory_space<vmem>>, vector<1x512xf32>
    %302 = vector.broadcast %301 : vector<1x512xf32> to vector<32x512xf32>
    %303 = arith.addf %300, %302 : vector<32x512xf32>
    %cst_130 = arith.constant 0.000000e+00 : f32
    %304 = vector.broadcast %cst_130 : f32 to vector<32x512xf32>
    %305 = arith.maximumf %303, %304 : vector<32x512xf32>
    %306 = arith.truncf %305 : vector<32x512xf32> to vector<32x512xbf16>
    %c0_131 = arith.constant 0 : index
    %c0_132 = arith.constant 0 : index
    %307 = vector.load %arg30[%c0_131, %c0_132] : memref<512x128xbf16, #tpu.memory_space<vmem>>, vector<512x128xbf16>
    %cst_133 = arith.constant dense<0.000000e+00> : vector<32x128xf32>
    %308 = tpu.matmul %306, %307, %cst_133 {dimension_numbers = #tpu.dot_dimension_numbers<[1], [0], [0], [1], [0, 0, 1, 1], [], []>} : vector<32x512xbf16>, vector<512x128xbf16>, vector<32x128xf32> -> vector<32x128xf32>
    %c0_134 = arith.constant 0 : index
    %c0_135 = arith.constant 0 : index
    %309 = vector.load %arg31[%c0_134, %c0_135] : memref<1x128xf32, #tpu.memory_space<vmem>>, vector<1x128xf32>
    %310 = vector.broadcast %309 : vector<1x128xf32> to vector<32x128xf32>
    %311 = arith.addf %308, %310 : vector<32x128xf32>
    %312 = arith.addf %273, %311 : vector<32x128xf32>
    %c0_136 = arith.constant 0 : index
    %c0_137 = arith.constant 0 : index
    %313 = vector.load %arg32[%c0_136, %c0_137] : memref<1x128xf32, #tpu.memory_space<vmem>>, vector<1x128xf32>
    %c0_138 = arith.constant 0 : index
    %c0_139 = arith.constant 0 : index
    %314 = vector.load %arg33[%c0_138, %c0_139] : memref<1x128xf32, #tpu.memory_space<vmem>>, vector<1x128xf32>
    %cst_140 = arith.constant dense<0.000000e+00> : vector<32xf32>
    %315 = vector.multi_reduction <add>, %312, %cst_140 [1] : vector<32x128xf32> to vector<32xf32>
    %316 = vector.shape_cast %315 : vector<32xf32> to vector<32x1xf32>
    %cst_141 = arith.constant 1.280000e+02 : f32
    %317 = vector.broadcast %cst_141 : f32 to vector<32x1xf32>
    %318 = arith.divf %316, %317 : vector<32x1xf32>
    %319 = vector.broadcast %318 : vector<32x1xf32> to vector<32x128xf32>
    %320 = arith.subf %312, %319 : vector<32x128xf32>
    %321 = arith.mulf %320, %320 : vector<32x128xf32>
    %cst_142 = arith.constant dense<0.000000e+00> : vector<32xf32>
    %322 = vector.multi_reduction <add>, %321, %cst_142 [1] : vector<32x128xf32> to vector<32xf32>
    %323 = vector.shape_cast %322 : vector<32xf32> to vector<32x1xf32>
    %cst_143 = arith.constant 1.280000e+02 : f32
    %324 = vector.broadcast %cst_143 : f32 to vector<32x1xf32>
    %325 = arith.divf %323, %324 : vector<32x1xf32>
    %326 = vector.broadcast %318 : vector<32x1xf32> to vector<32x128xf32>
    %327 = arith.subf %312, %326 : vector<32x128xf32>
    %cst_144 = arith.constant 9.99999974E-6 : f32
    %328 = vector.broadcast %cst_144 : f32 to vector<32x1xf32>
    %329 = arith.addf %325, %328 : vector<32x1xf32>
    %330 = math.rsqrt %329 : vector<32x1xf32>
    %331 = vector.broadcast %330 : vector<32x1xf32> to vector<32x128xf32>
    %332 = arith.mulf %327, %331 : vector<32x128xf32>
    %333 = vector.broadcast %313 : vector<1x128xf32> to vector<32x128xf32>
    %334 = arith.mulf %332, %333 : vector<32x128xf32>
    %335 = vector.broadcast %314 : vector<1x128xf32> to vector<32x128xf32>
    %336 = arith.addf %334, %335 : vector<32x128xf32>
    %337 = arith.truncf %336 : vector<32x128xf32> to vector<32x128xbf16>
    %c0_145 = arith.constant 0 : index
    %c0_146 = arith.constant 0 : index
    %338 = vector.load %arg34[%c0_145, %c0_146] : memref<128x128xbf16, #tpu.memory_space<vmem>>, vector<128x128xbf16>
    %cst_147 = arith.constant dense<0.000000e+00> : vector<32x128xf32>
    %339 = tpu.matmul %337, %338, %cst_147 {dimension_numbers = #tpu.dot_dimension_numbers<[1], [0], [0], [1], [0, 0, 1, 1], [], []>} : vector<32x128xbf16>, vector<128x128xbf16>, vector<32x128xf32> -> vector<32x128xf32>
    %c0_148 = arith.constant 0 : index
    %c0_149 = arith.constant 0 : index
    %340 = vector.load %arg35[%c0_148, %c0_149] : memref<1x128xf32, #tpu.memory_space<vmem>>, vector<1x128xf32>
    %341 = vector.broadcast %340 : vector<1x128xf32> to vector<32x128xf32>
    %342 = arith.addf %339, %341 : vector<32x128xf32>
    %c0_150 = arith.constant 0 : index
    %c0_151 = arith.constant 0 : index
    %343 = vector.load %arg36[%c0_150, %c0_151] : memref<32x128xf32, #tpu.memory_space<vmem>>, vector<32x128xf32>
    tpu.vector_store %arg36[%c0_150, %c0_151], %342 {strides = array<i32>} : memref<32x128xf32, #tpu.memory_space<vmem>>, vector<32x128xf32>,
    return
  }
  func.func @transform_0(%arg0: i32) -> (i32, i32) {
    %c0_i32 = arith.constant 0 : i32
    %c0_i32_0 = arith.constant 0 : i32
    %c0_i32_1 = arith.constant 0 : i32
    return %c0_i32, %c0_i32_0 : i32, i32
  }
  func.func @transform_1(%arg0: i32) -> (i32, i32) {
    %c0_i32 = arith.constant 0 : i32
    %c0_i32_0 = arith.constant 0 : i32
    %c0_i32_1 = arith.constant 0 : i32
    return %c0_i32, %c0_i32_0 : i32, i32
  }
  func.func @transform_2(%arg0: i32) -> (i32, i32) {
    %c0_i32 = arith.constant 0 : i32
    %c0_i32_0 = arith.constant 0 : i32
    %c0_i32_1 = arith.constant 0 : i32
    return %c0_i32, %c0_i32_0 : i32, i32
  }
  func.func @transform_3(%arg0: i32) -> (i32, i32) {
    %c0_i32 = arith.constant 0 : i32
    %c0_i32_0 = arith.constant 0 : i32
    %c0_i32_1 = arith.constant 0 : i32
    return %c0_i32, %c0_i32_0 : i32, i32
  }
  func.func @transform_4(%arg0: i32) -> (i32, i32) {
    %c0_i32 = arith.constant 0 : i32
    %c0_i32_0 = arith.constant 0 : i32
    %c0_i32_1 = arith.constant 0 : i32
    return %c0_i32, %c0_i32_0 : i32, i32
  }
  func.func @transform_5(%arg0: i32) -> (i32, i32) {
    %c0_i32 = arith.constant 0 : i32
    %c0_i32_0 = arith.constant 0 : i32
    %c0_i32_1 = arith.constant 0 : i32
    return %c0_i32, %c0_i32_0 : i32, i32
  }
  func.func @transform_6(%arg0: i32) -> (i32, i32) {
    %c0_i32 = arith.constant 0 : i32
    %c0_i32_0 = arith.constant 0 : i32
    %c0_i32_1 = arith.constant 0 : i32
    return %c0_i32, %c0_i32_0 : i32, i32
  }
  func.func @transform_7(%arg0: i32) -> (i32, i32) {
    %c0_i32 = arith.constant 0 : i32
    %c0_i32_0 = arith.constant 0 : i32
    %c0_i32_1 = arith.constant 0 : i32
    return %c0_i32, %c0_i32_0 : i32, i32
  }
  func.func @transform_8(%arg0: i32) -> (i32, i32) {
    %c0_i32 = arith.constant 0 : i32
    %c0_i32_0 = arith.constant 0 : i32
    %c0_i32_1 = arith.constant 0 : i32
    return %c0_i32, %c0_i32_0 : i32, i32
  }
  func.func @transform_9(%arg0: i32) -> (i32, i32) {
    %c0_i32 = arith.constant 0 : i32
    %c0_i32_0 = arith.constant 0 : i32
    %c0_i32_1 = arith.constant 0 : i32
    return %c0_i32, %c0_i32_0 : i32, i32
  }
  func.func @transform_10(%arg0: i32) -> (i32, i32) {
    %c0_i32 = arith.constant 0 : i32
    %c0_i32_0 = arith.constant 0 : i32
    %c0_i32_1 = arith.constant 0 : i32
    return %c0_i32, %c0_i32_0 : i32, i32
  }
  func.func @transform_11(%arg0: i32) -> (i32, i32) {
    %c0_i32 = arith.constant 0 : i32
    %c0_i32_0 = arith.constant 0 : i32
    %c0_i32_1 = arith.constant 0 : i32
    return %c0_i32, %c0_i32_0 : i32, i32
  }
  func.func @transform_12(%arg0: i32) -> (i32, i32) {
    %c0_i32 = arith.constant 0 : i32
    %c0_i32_0 = arith.constant 0 : i32
    %c0_i32_1 = arith.constant 0 : i32
    return %c0_i32, %c0_i32_0 : i32, i32
  }
  func.func @transform_13(%arg0: i32) -> (i32, i32) {
    %c0_i32 = arith.constant 0 : i32
    %c0_i32_0 = arith.constant 0 : i32
    %c0_i32_1 = arith.constant 0 : i32
    return %c0_i32, %c0_i32_0 : i32, i32
  }
  func.func @transform_14(%arg0: i32) -> (i32, i32) {
    %c0_i32 = arith.constant 0 : i32
    %c0_i32_0 = arith.constant 0 : i32
    %c0_i32_1 = arith.constant 0 : i32
    return %c0_i32, %c0_i32_0 : i32, i32
  }
  func.func @transform_15(%arg0: i32) -> (i32, i32) {
    %c0_i32 = arith.constant 0 : i32
    %c0_i32_0 = arith.constant 0 : i32
    %c0_i32_1 = arith.constant 0 : i32
    return %c0_i32, %c0_i32_0 : i32, i32
  }
  func.func @transform_16(%arg0: i32) -> (i32, i32) {
    %c0_i32 = arith.constant 0 : i32
    %c0_i32_0 = arith.constant 0 : i32
    %c0_i32_1 = arith.constant 0 : i32
    return %c0_i32, %c0_i32_0 : i32, i32
  }
  func.func @transform_17(%arg0: i32) -> (i32, i32) {
    %c0_i32 = arith.constant 0 : i32
    %c0_i32_0 = arith.constant 0 : i32
    %c0_i32_1 = arith.constant 0 : i32
    return %c0_i32, %c0_i32_0 : i32, i32
  }
  func.func @transform_18(%arg0: i32) -> (i32, i32) {
    %c0_i32 = arith.constant 0 : i32
    %c0_i32_0 = arith.constant 0 : i32
    %c0_i32_1 = arith.constant 0 : i32
    return %c0_i32, %c0_i32_0 : i32, i32
  }
  func.func @transform_19(%arg0: i32) -> (i32, i32) {
    %c0_i32 = arith.constant 0 : i32
    %c0_i32_0 = arith.constant 0 : i32
    %c0_i32_1 = arith.constant 0 : i32
    return %c0_i32, %c0_i32_0 : i32, i32
  }
  func.func @transform_20(%arg0: i32) -> (i32, i32) {
    %c0_i32 = arith.constant 0 : i32
    %c0_i32_0 = arith.constant 0 : i32
    %c0_i32_1 = arith.constant 0 : i32
    return %c0_i32, %c0_i32_0 : i32, i32
  }
  func.func @transform_21(%arg0: i32) -> (i32, i32) {
    %c0_i32 = arith.constant 0 : i32
    %c0_i32_0 = arith.constant 0 : i32
    %c0_i32_1 = arith.constant 0 : i32
    return %c0_i32, %c0_i32_0 : i32, i32
  }
  func.func @transform_22(%arg0: i32) -> (i32, i32) {
    %c0_i32 = arith.constant 0 : i32
    %c0_i32_0 = arith.constant 0 : i32
    %c0_i32_1 = arith.constant 0 : i32
    return %c0_i32, %c0_i32_0 : i32, i32
  }
  func.func @transform_23(%arg0: i32) -> (i32, i32) {
    %c0_i32 = arith.constant 0 : i32
    %c0_i32_0 = arith.constant 0 : i32
    %c0_i32_1 = arith.constant 0 : i32
    return %c0_i32, %c0_i32_0 : i32, i32
  }
  func.func @transform_24(%arg0: i32) -> (i32, i32) {
    %c0_i32 = arith.constant 0 : i32
    %c0_i32_0 = arith.constant 0 : i32
    %c0_i32_1 = arith.constant 0 : i32
    return %c0_i32, %c0_i32_0 : i32, i32
  }
  func.func @transform_25(%arg0: i32) -> (i32, i32) {
    %c0_i32 = arith.constant 0 : i32
    %c0_i32_0 = arith.constant 0 : i32
    %c0_i32_1 = arith.constant 0 : i32
    return %c0_i32, %c0_i32_0 : i32, i32
  }
  func.func @transform_26(%arg0: i32) -> (i32, i32) {
    %c0_i32 = arith.constant 0 : i32
    %c0_i32_0 = arith.constant 0 : i32
    %c0_i32_1 = arith.constant 0 : i32
    return %c0_i32, %c0_i32_0 : i32, i32
  }
  func.func @transform_27(%arg0: i32) -> (i32, i32) {
    %c0_i32 = arith.constant 0 : i32
    %c0_i32_0 = arith.constant 0 : i32
    %c0_i32_1 = arith.constant 0 : i32
    return %c0_i32, %c0_i32_0 : i32, i32
  }
  func.func @transform_28(%arg0: i32) -> (i32, i32) {
    %c0_i32 = arith.constant 0 : i32
    %c0_i32_0 = arith.constant 0 : i32
    %c0_i32_1 = arith.constant 0 : i32
    return %c0_i32, %c0_i32_0 : i32, i32
  }
  func.func @transform_29(%arg0: i32) -> (i32, i32) {
    %c0_i32 = arith.constant 0 : i32
    %c0_i32_0 = arith.constant 0 : i32
    %c0_i32_1 = arith.constant 0 : i32
    return %c0_i32, %c0_i32_0 : i32, i32
  }
  func.func @transform_30(%arg0: i32) -> (i32, i32) {
    %c0_i32 = arith.constant 0 : i32
    %c0_i32_0 = arith.constant 0 : i32
    %c0_i32_1 = arith.constant 0 : i32
    return %c0_i32, %c0_i32_0 : i32, i32
  }
  func.func @transform_31(%arg0: i32) -> (i32, i32) {
    %c0_i32 = arith.constant 0 : i32
    %c0_i32_0 = arith.constant 0 : i32
    %c0_i32_1 = arith.constant 0 : i32
    return %c0_i32, %c0_i32_0 : i32, i32
  }
  func.func @transform_32(%arg0: i32) -> (i32, i32) {
    %c0_i32 = arith.constant 0 : i32
    %c0_i32_0 = arith.constant 0 : i32
    %c0_i32_1 = arith.constant 0 : i32
    return %c0_i32, %c0_i32_0 : i32, i32
  }
  func.func @transform_33(%arg0: i32) -> (i32, i32) {
    %c0_i32 = arith.constant 0 : i32
    %c0_i32_0 = arith.constant 0 : i32
    %c0_i32_1 = arith.constant 0 : i32
    return %c0_i32, %c0_i32_0 : i32, i32
  }
  func.func @transform_34(%arg0: i32) -> (i32, i32) {
    %c0_i32 = arith.constant 0 : i32
    %c0_i32_0 = arith.constant 0 : i32
    %c0_i32_1 = arith.constant 0 : i32
    return %c0_i32, %c0_i32_0 : i32, i32
  }
  func.func @transform_35(%arg0: i32) -> (i32, i32) {
    %c0_i32 = arith.constant 0 : i32
    %c0_i32_0 = arith.constant 0 : i32
    %c0_i32_1 = arith.constant 0 : i32
    return %c0_i32, %c0_i32_0 : i32, i32
  }
}

</mosaic_0001>

<llo_original>
// kernel: forward.1
$region0: #{forward.1}
  #allocation0 [shape = 'u32[]', space=smem, size = 0x4, offset = 0x4, fixed_abs, tag = 'smem constant byte address 0x4 - core index']
  #allocation1 [shape = 'u32[144,128]{1,0:T(1,128)}', space=vmem, size = 0x12000, scoped, tag = 'internal scratch']
  %s0 = inlined_call_operand.smem [shape: u32[36], index: -1, kind: input, shape index: {}]
  %s1 = sld [smem:[%s0]]
  %s2 = scalar_lea.smem %s0, 1
  %s3 = sld [smem:[%s2]]
  %s4 = scalar_lea.smem %s0, 2
  %s5 = sld [smem:[%s4]]
  %s6 = scalar_lea.smem %s0, 3
  %s7 = sld [smem:[%s6]]
  %s8 = scalar_lea.smem %s0, 4
  %s9 = sld [smem:[%s8]]
  %s10 = scalar_lea.smem %s0, 5
  %s11 = sld [smem:[%s10]]
  %s12 = scalar_lea.smem %s0, 6
  %s13 = sld [smem:[%s12]]
  %s14 = scalar_lea.smem %s0, 7
  %s15 = sld [smem:[%s14]]
  %s16 = scalar_lea.smem %s0, 8
  %s17 = sld [smem:[%s16]]
  %s18 = scalar_lea.smem %s0, 9
  %s19 = sld [smem:[%s18]]
  %s20 = scalar_lea.smem %s0, 10
  %s21 = sld [smem:[%s20]]
  %s22 = scalar_lea.smem %s0, 11
  %s23 = sld [smem:[%s22]]
  %s24 = scalar_lea.smem %s0, 12
  %s25 = sld [smem:[%s24]]
  %s26 = scalar_lea.smem %s0, 13
  %s27 = sld [smem:[%s26]]
  %s28 = scalar_lea.smem %s0, 14
  %s29 = sld [smem:[%s28]]
  %s30 = scalar_lea.smem %s0, 15
  %s31 = sld [smem:[%s30]]
  %s32 = scalar_lea.smem %s0, 16
  %s33 = sld [smem:[%s32]]
  %s34 = scalar_lea.smem %s0, 17
  %s35 = sld [smem:[%s34]]
  %s36 = scalar_lea.smem %s0, 18
  %s37 = sld [smem:[%s36]]
  %s38 = scalar_lea.smem %s0, 19
  %s39 = sld [smem:[%s38]]
  %s40 = scalar_lea.smem %s0, 20
  %s41 = sld [smem:[%s40]]
  %s42 = scalar_lea.smem %s0, 21
  %s43 = sld [smem:[%s42]]
  %s44 = scalar_lea.smem %s0, 22
  %s45 = sld [smem:[%s44]]
  %s46 = scalar_lea.smem %s0, 23
  %s47 = sld [smem:[%s46]]
  %s48 = scalar_lea.smem %s0, 24
  %s49 = sld [smem:[%s48]]
  %s50 = scalar_lea.smem %s0, 25
  %s51 = sld [smem:[%s50]]
  %s52 = scalar_lea.smem %s0, 26
  %s53 = sld [smem:[%s52]]
  %s54 = scalar_lea.smem %s0, 27
  %s55 = sld [smem:[%s54]]
  %s56 = scalar_lea.smem %s0, 28
  %s57 = sld [smem:[%s56]]
  %s58 = scalar_lea.smem %s0, 29
  %s59 = sld [smem:[%s58]]
  %s60 = scalar_lea.smem %s0, 30
  %s61 = sld [smem:[%s60]]
  %s62 = scalar_lea.smem %s0, 31
  %s63 = sld [smem:[%s62]]
  %s64 = scalar_lea.smem %s0, 32
  %s65 = sld [smem:[%s64]]
  %s66 = scalar_lea.smem %s0, 33
  %s67 = sld [smem:[%s66]]
  %s68 = scalar_lea.smem %s0, 34
  %s69 = sld [smem:[%s68]]
  %s70 = scalar_lea.smem %s0, 35
  %s71 = sld [smem:[%s70]]
  %s72 = sld [smem:[#allocation0]]
  $region214: #{forward.1} parent=0
    _
  %s74 = ssub.s32 1, %s72
  %s75 = scalar_select 0, %s74, %s72
  $region1: #{forward.1} parent=0
    #allocation2 [shape = 'u8[32768]{0}', space=vmem, size = 0x8000, scoped, tag = 'input window, operand 8, single buffered']
    #allocation3 [shape = 's32[1]{0}', space=sflag, size = 0x4, scoped, tag = 'scoped memory for forward.1']
    #allocation4 [shape = 's32[1]{0}', space=sflag, size = 0x4, scoped, tag = 'scoped memory for forward.1']
    #allocation5 [shape = 'u8[32768]{0}', space=vmem, size = 0x8000, scoped, tag = 'input window, operand 9, single buffered']
    #allocation6 [shape = 's32[1]{0}', space=sflag, size = 0x4, scoped, tag = 'scoped memory for forward.1']
    #allocation7 [shape = 'u8[32768]{0}', space=vmem, size = 0x8000, scoped, tag = 'input window, operand 10, single buffered']
    #allocation8 [shape = 'u8[131072]{0}', space=vmem, size = 0x20000, scoped, tag = 'input window, operand 14, single buffered']
    #allocation9 [shape = 's32[1]{0}', space=sflag, size = 0x4, scoped, tag = 'scoped memory for forward.1']
    #allocation10 [shape = 'u8[131072]{0}', space=vmem, size = 0x20000, scoped, tag = 'input window, operand 16, single buffered']
    #allocation11 [shape = 'u8[32768]{0}', space=vmem, size = 0x8000, scoped, tag = 'input window, operand 20, single buffered']
    #allocation12 [shape = 's32[1]{0}', space=sflag, size = 0x4, scoped, tag = 'scoped memory for forward.1']
    #allocation13 [shape = 'u8[32768]{0}', space=vmem, size = 0x8000, scoped, tag = 'input window, operand 21, single buffered']
    #allocation14 [shape = 'u8[32768]{0}', space=vmem, size = 0x8000, scoped, tag = 'input window, operand 22, single buffered']
    #allocation15 [shape = 's32[1]{0}', space=sflag, size = 0x4, scoped, tag = 'scoped memory for forward.1']
    #allocation16 [shape = 'u8[32768]{0}', space=vmem, size = 0x8000, scoped, tag = 'input window, operand 23, single buffered']
    #allocation17 [shape = 'u8[131072]{0}', space=vmem, size = 0x20000, scoped, tag = 'input window, operand 27, single buffered']
    #allocation18 [shape = 's32[1]{0}', space=sflag, size = 0x4, scoped, tag = 'scoped memory for forward.1']
    #allocation19 [shape = 'u8[131072]{0}', space=vmem, size = 0x20000, scoped, tag = 'input window, operand 29, single buffered']
    #allocation20 [shape = 'u8[512]{0}', space=vmem, size = 0x400, scoped, tag = 'input window, operand 30, single buffered']
    #allocation21 [shape = 's32[1]{0}', space=sflag, size = 0x4, scoped, tag = 'scoped memory for forward.1']
    #allocation22 [shape = 'u8[512]{0}', space=vmem, size = 0x400, scoped, tag = 'input window, operand 31, single buffered']
    #allocation23 [shape = 'u8[512]{0}', space=vmem, size = 0x400, scoped, tag = 'input window, operand 32, single buffered']
    #allocation24 [shape = 's32[1]{0}', space=sflag, size = 0x4, scoped, tag = 'scoped memory for forward.1']
    #allocation25 [shape = 'u8[32768]{0}', space=vmem, size = 0x8000, scoped, tag = 'input window, operand 33, single buffered']
    #allocation26 [shape = 'u8[512]{0}', space=vmem, size = 0x400, scoped, tag = 'input window, operand 34, single buffered']
    #allocation27 [shape = 's32[1]{0}', space=sflag, size = 0x4, scoped, tag = 'scoped memory for forward.1']
    #allocation28 [shape = 'u8[16384]{0}', space=vmem, size = 0x4000, scoped, tag = 'output window, operand 0, single buffered']
    %76 = vsyncpa [#allocation3], 0
    %77 = vsyncpa [#allocation6], 0
    %78 = vsyncpa [#allocation9], 0
    %79 = vsyncpa [#allocation12], 0
    %80 = vsyncpa [#allocation15], 0
    %81 = vsyncpa [#allocation18], 0
    %82 = vsyncpa [#allocation21], 0
    %83 = vsyncpa [#allocation24], 0
    %84 = vsyncpa [#allocation27], 0
    %85 = vsyncpa [#allocation4], 0
    // Predicated region
    $region2: #{forward.1} parent=1 // pred_check
      _
    $region3: #{forward.1} parent=1 // pred_check_branch
      %87 = sbr.rel (0) target = $region5
    $region4: #{forward.1} parent=1 // pred_region
      _
    $region5: #{forward.1} parent=1 // pred_fallthru
      _
    // Predicated region
    $region6: #{forward.1} parent=1 // pred_check
      _
    $region7: #{forward.1} parent=1 // pred_check_branch
      %89 = sbr.rel (0) target = $region9
    $region8: #{forward.1} parent=1 // pred_region
      _
    $region9: #{forward.1} parent=1 // pred_fallthru
      _
    // Predicated region
    $region10: #{forward.1} parent=1 // pred_check
      _
    $region11: #{forward.1} parent=1 // pred_check_branch
      %91 = sbr.rel (0) target = $region13
    $region12: #{forward.1} parent=1 // pred_region
      _
    $region13: #{forward.1} parent=1 // pred_fallthru
      _
    // Predicated region
    $region14: #{forward.1} parent=1 // pred_check
      _
    $region15: #{forward.1} parent=1 // pred_check_branch
      %93 = sbr.rel (0) target = $region17
    $region16: #{forward.1} parent=1 // pred_region
      _
    $region17: #{forward.1} parent=1 // pred_fallthru
      _
    // Predicated region
    $region18: #{forward.1} parent=1 // pred_check
      _
    $region19: #{forward.1} parent=1 // pred_check_branch
      %95 = sbr.rel (0) target = $region21
    $region20: #{forward.1} parent=1 // pred_region
      _
    $region21: #{forward.1} parent=1 // pred_fallthru
      _
    // Predicated region
    $region22: #{forward.1} parent=1 // pred_check
      _
    $region23: #{forward.1} parent=1 // pred_check_branch
      %97 = sbr.rel (0) target = $region25
    $region24: #{forward.1} parent=1 // pred_region
      _
    $region25: #{forward.1} parent=1 // pred_fallthru
      _
    // Predicated region
    $region26: #{forward.1} parent=1 // pred_check
      _
    $region27: #{forward.1} parent=1 // pred_check_branch
      %99 = sbr.rel (0) target = $region29
    $region28: #{forward.1} parent=1 // pred_region
      _
    $region29: #{forward.1} parent=1 // pred_fallthru
      _
    // Predicated region
    $region30: #{forward.1} parent=1 // pred_check
      _
    $region31: #{forward.1} parent=1 // pred_check_branch
      %101 = sbr.rel (0) target = $region33
    $region32: #{forward.1} parent=1 // pred_region
      _
    $region33: #{forward.1} parent=1 // pred_fallthru
      _
    // Predicated region
    $region34: #{forward.1} parent=1 // pred_check
      _
    $region35: #{forward.1} parent=1 // pred_check_branch
      %103 = sbr.rel (0) target = $region37
    $region36: #{forward.1} parent=1 // pred_region
      %s105 = ssub.s32 1024, 1024
      %106 = vsyncadd [#allocation3], %s105
      %s107 = sshll.u32 [#allocation2], 4
      %s108 = int_to_ptr.vmem [resolvable:$true] %s107
      %113 = dma.hbm_to_vmem [thread:$0]  %s17, 1024, %s108, [#allocation3], 64, 64, 4
    $region37: #{forward.1} parent=1 // pred_fallthru
      _
    // Predicated region
    $region38: #{forward.1} parent=1 // pred_check
      _
    $region39: #{forward.1} parent=1 // pred_check_branch
      %115 = sbr.rel (0) target = $region41
    $region40: #{forward.1} parent=1 // pred_region
      %s117 = ssub.s32 1024, 1024
      %118 = vsyncadd [#allocation6], %s117
      %s119 = sshll.u32 [#allocation5], 4
      %s120 = int_to_ptr.vmem [resolvable:$true] %s119
      %125 = dma.hbm_to_vmem [thread:$0]  %s19, 1024, %s120, [#allocation6], 64, 64, 4
    $region41: #{forward.1} parent=1 // pred_fallthru
      _
    // Predicated region
    $region42: #{forward.1} parent=1 // pred_check
      _
    $region43: #{forward.1} parent=1 // pred_check_branch
      %127 = sbr.rel (0) target = $region45
    $region44: #{forward.1} parent=1 // pred_region
      %s129 = ssub.s32 1024, 1024
      %130 = vsyncadd [#allocation6], %s129
      %s131 = sshll.u32 [#allocation7], 4
      %s132 = int_to_ptr.vmem [resolvable:$true] %s131
      %137 = dma.hbm_to_vmem [thread:$0]  %s21, 1024, %s132, [#allocation6], 64, 64, 4
    $region45: #{forward.1} parent=1 // pred_fallthru
      _
    // Predicated region
    $region46: #{forward.1} parent=1 // pred_check
      _
    $region47: #{forward.1} parent=1 // pred_check_branch
      %139 = sbr.rel (0) target = $region49
    $region48: #{forward.1} parent=1 // pred_region
      _
    $region49: #{forward.1} parent=1 // pred_fallthru
      _
    // Predicated region
    $region50: #{forward.1} parent=1 // pred_check
      _
    $region51: #{forward.1} parent=1 // pred_check_branch
      %141 = sbr.rel (0) target = $region53
    $region52: #{forward.1} parent=1 // pred_region
      _
    $region53: #{forward.1} parent=1 // pred_fallthru
      _
    // Predicated region
    $region54: #{forward.1} parent=1 // pred_check
      _
    $region55: #{forward.1} parent=1 // pred_check_branch
      %143 = sbr.rel (0) target = $region57
    $region56: #{forward.1} parent=1 // pred_region
      _
    $region57: #{forward.1} parent=1 // pred_fallthru
      _
    // Predicated region
    $region58: #{forward.1} parent=1 // pred_check
      _
    $region59: #{forward.1} parent=1 // pred_check_branch
      %145 = sbr.rel (0) target = $region61
    $region60: #{forward.1} parent=1 // pred_region
      %s147 = ssub.s32 4096, 4096
      %148 = vsyncadd [#allocation9], %s147
      %s149 = sshll.u32 [#allocation8], 4
      %s150 = int_to_ptr.vmem [resolvable:$true] %s149
      %155 = dma.hbm_to_vmem [thread:$0]  %s29, 4096, %s150, [#allocation9], 256, 256, 16
    $region61: #{forward.1} parent=1 // pred_fallthru
      _
    // Predicated region
    $region62: #{forward.1} parent=1 // pred_check
      _
    $region63: #{forward.1} parent=1 // pred_check_branch
      %157 = sbr.rel (0) target = $region65
    $region64: #{forward.1} parent=1 // pred_region
      _
    $region65: #{forward.1} parent=1 // pred_fallthru
      _
    // Predicated region
    $region66: #{forward.1} parent=1 // pred_check
      _
    $region67: #{forward.1} parent=1 // pred_check_branch
      %159 = sbr.rel (0) target = $region69
    $region68: #{forward.1} parent=1 // pred_region
      %s161 = ssub.s32 4096, 4096
      %162 = vsyncadd [#allocation9], %s161
      %s163 = sshll.u32 [#allocation10], 4
      %s164 = int_to_ptr.vmem [resolvable:$true] %s163
      %169 = dma.hbm_to_vmem [thread:$0]  %s33, 4096, %s164, [#allocation9], 64, 64, 4
    $region69: #{forward.1} parent=1 // pred_fallthru
      _
    // Predicated region
    $region70: #{forward.1} parent=1 // pred_check
      _
    $region71: #{forward.1} parent=1 // pred_check_branch
      %171 = sbr.rel (0) target = $region73
    $region72: #{forward.1} parent=1 // pred_region
      _
    $region73: #{forward.1} parent=1 // pred_fallthru
      _
    // Predicated region
    $region74: #{forward.1} parent=1 // pred_check
      _
    $region75: #{forward.1} parent=1 // pred_check_branch
      %173 = sbr.rel (0) target = $region77
    $region76: #{forward.1} parent=1 // pred_region
      _
    $region77: #{forward.1} parent=1 // pred_fallthru
      _
    // Predicated region
    $region78: #{forward.1} parent=1 // pred_check
      _
    $region79: #{forward.1} parent=1 // pred_check_branch
      %175 = sbr.rel (0) target = $region81
    $region80: #{forward.1} parent=1 // pred_region
      _
    $region81: #{forward.1} parent=1 // pred_fallthru
      _
    // Predicated region
    $region82: #{forward.1} parent=1 // pred_check
      _
    $region83: #{forward.1} parent=1 // pred_check_branch
      %177 = sbr.rel (0) target = $region85
    $region84: #{forward.1} parent=1 // pred_region
      %s179 = ssub.s32 1024, 1024
      %180 = vsyncadd [#allocation12], %s179
      %s181 = sshll.u32 [#allocation11], 4
      %s182 = int_to_ptr.vmem [resolvable:$true] %s181
      %187 = dma.hbm_to_vmem [thread:$0]  %s41, 1024, %s182, [#allocation12], 64, 64, 4
    $region85: #{forward.1} parent=1 // pred_fallthru
      _
    // Predicated region
    $region86: #{forward.1} parent=1 // pred_check
      _
    $region87: #{forward.1} parent=1 // pred_check_branch
      %189 = sbr.rel (0) target = $region89
    $region88: #{forward.1} parent=1 // pred_region
      %s191 = ssub.s32 1024, 1024
      %192 = vsyncadd [#allocation12], %s191
      %s193 = sshll.u32 [#allocation13], 4
      %s194 = int_to_ptr.vmem [resolvable:$true] %s193
      %199 = dma.hbm_to_vmem [thread:$0]  %s43, 1024, %s194, [#allocation12], 64, 64, 4
    $region89: #{forward.1} parent=1 // pred_fallthru
      _
    // Predicated region
    $region90: #{forward.1} parent=1 // pred_check
      _
    $region91: #{forward.1} parent=1 // pred_check_branch
      %201 = sbr.rel (0) target = $region93
    $region92: #{forward.1} parent=1 // pred_region
      %s203 = ssub.s32 1024, 1024
      %204 = vsyncadd [#allocation15], %s203
      %s205 = sshll.u32 [#allocation14], 4
      %s206 = int_to_ptr.vmem [resolvable:$true] %s205
      %211 = dma.hbm_to_vmem [thread:$0]  %s45, 1024, %s206, [#allocation15], 64, 64, 4
    $region93: #{forward.1} parent=1 // pred_fallthru
      _
    // Predicated region
    $region94: #{forward.1} parent=1 // pred_check
      _
    $region95: #{forward.1} parent=1 // pred_check_branch
      %213 = sbr.rel (0) target = $region97
    $region96: #{forward.1} parent=1 // pred_region
      %s215 = ssub.s32 1024, 1024
      %216 = vsyncadd [#allocation15], %s215
      %s217 = sshll.u32 [#allocation16], 4
      %s218 = int_to_ptr.vmem [resolvable:$true] %s217
      %223 = dma.hbm_to_vmem [thread:$0]  %s47, 1024, %s218, [#allocation15], 64, 64, 4
    $region97: #{forward.1} parent=1 // pred_fallthru
      _
    // Predicated region
    $region98: #{forward.1} parent=1 // pred_check
      _
    $region99: #{forward.1} parent=1 // pred_check_branch
      %225 = sbr.rel (0) target = $region101
    $region100: #{forward.1} parent=1 // pred_region
      _
    $region101: #{forward.1} parent=1 // pred_fallthru
      _
    // Predicated region
    $region102: #{forward.1} parent=1 // pred_check
      _
    $region103: #{forward.1} parent=1 // pred_check_branch
      %227 = sbr.rel (0) target = $region105
    $region104: #{forward.1} parent=1 // pred_region
      _
    $region105: #{forward.1} parent=1 // pred_fallthru
      _
    // Predicated region
    $region106: #{forward.1} parent=1 // pred_check
      _
    $region107: #{forward.1} parent=1 // pred_check_branch
      %229 = sbr.rel (0) target = $region109
    $region108: #{forward.1} parent=1 // pred_region
      _
    $region109: #{forward.1} parent=1 // pred_fallthru
      _
    // Predicated region
    $region110: #{forward.1} parent=1 // pred_check
      _
    $region111: #{forward.1} parent=1 // pred_check_branch
      %231 = sbr.rel (0) target = $region113
    $region112: #{forward.1} parent=1 // pred_region
      %s233 = ssub.s32 4096, 4096
      %234 = vsyncadd [#allocation18], %s233
      %s235 = sshll.u32 [#allocation17], 4
      %s236 = int_to_ptr.vmem [resolvable:$true] %s235
      %241 = dma.hbm_to_vmem [thread:$0]  %s55, 4096, %s236, [#allocation18], 256, 256, 16
    $region113: #{forward.1} parent=1 // pred_fallthru
      _
    // Predicated region
    $region114: #{forward.1} parent=1 // pred_check
      _
    $region115: #{forward.1} parent=1 // pred_check_branch
      %243 = sbr.rel (0) target = $region117
    $region116: #{forward.1} parent=1 // pred_region
      _
    $region117: #{forward.1} parent=1 // pred_fallthru
      _
    // Predicated region
    $region118: #{forward.1} parent=1 // pred_check
      _
    $region119: #{forward.1} parent=1 // pred_check_branch
      %245 = sbr.rel (0) target = $region121
    $region120: #{forward.1} parent=1 // pred_region
      %s247 = ssub.s32 4096, 4096
      %248 = vsyncadd [#allocation18], %s247
      %s249 = sshll.u32 [#allocation19], 4
      %s250 = int_to_ptr.vmem [resolvable:$true] %s249
      %255 = dma.hbm_to_vmem [thread:$0]  %s59, 4096, %s250, [#allocation18], 64, 64, 4
    $region121: #{forward.1} parent=1 // pred_fallthru
      _
    // Predicated region
    $region122: #{forward.1} parent=1 // pred_check
      _
    $region123: #{forward.1} parent=1 // pred_check_branch
      %257 = sbr.rel (0) target = $region125
    $region124: #{forward.1} parent=1 // pred_region
      %s259 = ssub.s32 16, 16
      %260 = vsyncadd [#allocation21], %s259
      %s262 = sshll.u32 [#allocation20], 4
      %s263 = int_to_ptr.vmem [resolvable:$true] %s262
      %265 = dma.hbm_to_vmem [thread:$0]  %s61, 16, %s263, [#allocation21]
    $region125: #{forward.1} parent=1 // pred_fallthru
      _
    // Predicated region
    $region126: #{forward.1} parent=1 // pred_check
      _
    $region127: #{forward.1} parent=1 // pred_check_branch
      %267 = sbr.rel (0) target = $region129
    $region128: #{forward.1} parent=1 // pred_region
      %s269 = ssub.s32 16, 16
      %270 = vsyncadd [#allocation21], %s269
      %s272 = sshll.u32 [#allocation22], 4
      %s273 = int_to_ptr.vmem [resolvable:$true] %s272
      %275 = dma.hbm_to_vmem [thread:$0]  %s63, 16, %s273, [#allocation21]
    $region129: #{forward.1} parent=1 // pred_fallthru
      _
    // Predicated region
    $region130: #{forward.1} parent=1 // pred_check
      _
    $region131: #{forward.1} parent=1 // pred_check_branch
      %277 = sbr.rel (0) target = $region133
    $region132: #{forward.1} parent=1 // pred_region
      %s279 = ssub.s32 16, 16
      %280 = vsyncadd [#allocation24], %s279
      %s282 = sshll.u32 [#allocation23], 4
      %s283 = int_to_ptr.vmem [resolvable:$true] %s282
      %285 = dma.hbm_to_vmem [thread:$0]  %s65, 16, %s283, [#allocation24]
    $region133: #{forward.1} parent=1 // pred_fallthru
      _
    // Predicated region
    $region134: #{forward.1} parent=1 // pred_check
      _
    $region135: #{forward.1} parent=1 // pred_check_branch
      %287 = sbr.rel (0) target = $region137
    $region136: #{forward.1} parent=1 // pred_region
      %s289 = ssub.s32 1024, 1024
      %290 = vsyncadd [#allocation24], %s289
      %s291 = sshll.u32 [#allocation25], 4
      %s292 = int_to_ptr.vmem [resolvable:$true] %s291
      %297 = dma.hbm_to_vmem [thread:$0]  %s67, 1024, %s292, [#allocation24], 64, 64, 4
    $region137: #{forward.1} parent=1 // pred_fallthru
      _
    // Predicated region
    $region138: #{forward.1} parent=1 // pred_check
      _
    $region139: #{forward.1} parent=1 // pred_check_branch
      %299 = sbr.rel (0) target = $region141
    $region140: #{forward.1} parent=1 // pred_region
      %s301 = ssub.s32 16, 16
      %302 = vsyncadd [#allocation27], %s301
      %s304 = sshll.u32 [#allocation26], 4
      %s305 = int_to_ptr.vmem [resolvable:$true] %s304
      %307 = dma.hbm_to_vmem [thread:$0]  %s69, 16, %s305, [#allocation27]
    $region141: #{forward.1} parent=1 // pred_fallthru
      _
    // Predicated region
    $region142: #{forward.1} parent=1 // pred_check
      _
    $region143: #{forward.1} parent=1 // pred_check_branch
      %309 = sbr.rel (0) target = $region145
    $region144: #{forward.1} parent=1 // pred_region
      %310 = dma.done [#allocation3], 1024
    $region145: #{forward.1} parent=1 // pred_fallthru
      _
    // Predicated region
    $region146: #{forward.1} parent=1 // pred_check
      _
    $region147: #{forward.1} parent=1 // pred_check_branch
      %312 = sbr.rel (0) target = $region149
    $region148: #{forward.1} parent=1 // pred_region
      %313 = dma.done [#allocation6], 1024
    $region149: #{forward.1} parent=1 // pred_fallthru
      _
    // Predicated region
    $region150: #{forward.1} parent=1 // pred_check
      _
    $region151: #{forward.1} parent=1 // pred_check_branch
      %315 = sbr.rel (0) target = $region153
    $region152: #{forward.1} parent=1 // pred_region
      %316 = dma.done [#allocation6], 1024
    $region153: #{forward.1} parent=1 // pred_fallthru
      _
    // Predicated region
    $region154: #{forward.1} parent=1 // pred_check
      _
    $region155: #{forward.1} parent=1 // pred_check_branch
      %318 = sbr.rel (0) target = $region157
    $region156: #{forward.1} parent=1 // pred_region
      %319 = dma.done [#allocation9], 4096
    $region157: #{forward.1} parent=1 // pred_fallthru
      _
    // Predicated region
    $region158: #{forward.1} parent=1 // pred_check
      _
    $region159: #{forward.1} parent=1 // pred_check_branch
      %321 = sbr.rel (0) target = $region161
    $region160: #{forward.1} parent=1 // pred_region
      %322 = dma.done [#allocation9], 4096
    $region161: #{forward.1} parent=1 // pred_fallthru
      _
    // Predicated region
    $region162: #{forward.1} parent=1 // pred_check
      _
    $region163: #{forward.1} parent=1 // pred_check_branch
      %324 = sbr.rel (0) target = $region165
    $region164: #{forward.1} parent=1 // pred_region
      %325 = dma.done [#allocation12], 1024
    $region165: #{forward.1} parent=1 // pred_fallthru
      _
    // Predicated region
    $region166: #{forward.1} parent=1 // pred_check
      _
    $region167: #{forward.1} parent=1 // pred_check_branch
      %327 = sbr.rel (0) target = $region169
    $region168: #{forward.1} parent=1 // pred_region
      %328 = dma.done [#allocation12], 1024
    $region169: #{forward.1} parent=1 // pred_fallthru
      _
    // Predicated region
    $region170: #{forward.1} parent=1 // pred_check
      _
    $region171: #{forward.1} parent=1 // pred_check_branch
      %330 = sbr.rel (0) target = $region173
    $region172: #{forward.1} parent=1 // pred_region
      %331 = dma.done [#allocation15], 1024
    $region173: #{forward.1} parent=1 // pred_fallthru
      _
    // Predicated region
    $region174: #{forward.1} parent=1 // pred_check
      _
    $region175: #{forward.1} parent=1 // pred_check_branch
      %333 = sbr.rel (0) target = $region177
    $region176: #{forward.1} parent=1 // pred_region
      %334 = dma.done [#allocation15], 1024
    $region177: #{forward.1} parent=1 // pred_fallthru
      _
    // Predicated region
    $region178: #{forward.1} parent=1 // pred_check
      _
    $region179: #{forward.1} parent=1 // pred_check_branch
      %336 = sbr.rel (0) target = $region181
    $region180: #{forward.1} parent=1 // pred_region
      %337 = dma.done [#allocation18], 4096
    $region181: #{forward.1} parent=1 // pred_fallthru
      _
    // Predicated region
    $region182: #{forward.1} parent=1 // pred_check
      _
    $region183: #{forward.1} parent=1 // pred_check_branch
      %339 = sbr.rel (0) target = $region185
    $region184: #{forward.1} parent=1 // pred_region
      %340 = dma.done [#allocation18], 4096
    $region185: #{forward.1} parent=1 // pred_fallthru
      _
    // Predicated region
    $region186: #{forward.1} parent=1 // pred_check
      _
    $region187: #{forward.1} parent=1 // pred_check_branch
      %342 = sbr.rel (0) target = $region189
    $region188: #{forward.1} parent=1 // pred_region
      %343 = dma.done [#allocation21], 16
    $region189: #{forward.1} parent=1 // pred_fallthru
      _
    // Predicated region
    $region190: #{forward.1} parent=1 // pred_check
      _
    $region191: #{forward.1} parent=1 // pred_check_branch
      %345 = sbr.rel (0) target = $region193
    $region192: #{forward.1} parent=1 // pred_region
      %346 = dma.done [#allocation21], 16
    $region193: #{forward.1} parent=1 // pred_fallthru
      _
    // Predicated region
    $region194: #{forward.1} parent=1 // pred_check
      _
    $region195: #{forward.1} parent=1 // pred_check_branch
      %348 = sbr.rel (0) target = $region197
    $region196: #{forward.1} parent=1 // pred_region
      %349 = dma.done [#allocation24], 16
    $region197: #{forward.1} parent=1 // pred_fallthru
      _
    // Predicated region
    $region198: #{forward.1} parent=1 // pred_check
      _
    $region199: #{forward.1} parent=1 // pred_check_branch
      %351 = sbr.rel (0) target = $region201
    $region200: #{forward.1} parent=1 // pred_region
      %352 = dma.done [#allocation24], 1024
    $region201: #{forward.1} parent=1 // pred_fallthru
      _
    // Predicated region
    $region202: #{forward.1} parent=1 // pred_check
      _
    $region203: #{forward.1} parent=1 // pred_check_branch
      %354 = sbr.rel (0) target = $region205
    $region204: #{forward.1} parent=1 // pred_region
      %355 = dma.done [#allocation27], 16
    $region205: #{forward.1} parent=1 // pred_fallthru
      _
    %v357 = vld [vmem:[%s1] sm:$0xff]
    %v358 = vld [vmem:[%s1 + $0x8] sm:$0xff]
    %v359 = vld [vmem:[%s1 + $0x10] sm:$0xff]
    %v360 = vld [vmem:[%s1 + $0x18] sm:$0xff]
    %v361 = vlaneseq
    %v362 = vand.u32 %v361, 127
    %363 = vset.pattern.permute.xlu0 0
    %364 = vperm.xlu0 %363, %v357
    %v365 = vpop.permute.xlu0 %364
    %366 = vset.pattern.permute.xlu0 0
    %367 = vperm.xlu0 %366, %v358
    %v368 = vpop.permute.xlu0 %367
    %369 = vset.pattern.permute.xlu0 0
    %370 = vperm.xlu0 %369, %v359
    %v371 = vpop.permute.xlu0 %370
    %372 = vset.pattern.permute.xlu0 0
    %373 = vperm.xlu0 %372, %v360
    %v374 = vpop.permute.xlu0 %373
    %vm375 = vcmp.eq.s32.totalorder %v362, %v365
    %vm376 = vcmp.eq.s32.totalorder %v362, %v368
    %vm377 = vcmp.eq.s32.totalorder %v362, %v371
    %vm378 = vcmp.eq.s32.totalorder %v362, %v374
    %v379 = vsel %vm375, 1, 0
    %v380 = vsel %vm376, 1, 0
    %v381 = vsel %vm377, 1, 0
    %v382 = vsel %vm378, 1, 0
    %v383 = vcvt.s32.f32 %v379
    %v384 = vcvt.s32.f32 %v380
    %v385 = vcvt.s32.f32 %v381
    %v386 = vcvt.s32.f32 %v382
    %v387 = vld [vmem:[%s3] sm:$0xff]
    %v388 = vld [vmem:[%s3 + $0x8] sm:$0xff]
    %v389 = vld [vmem:[%s3 + $0x10] sm:$0xff]
    %v390 = vld [vmem:[%s3 + $0x18] sm:$0xff]
    %v391 = vld [vmem:[%s3 + $0x20] sm:$0xff]
    %v392 = vld [vmem:[%s3 + $0x28] sm:$0xff]
    %v393 = vld [vmem:[%s3 + $0x30] sm:$0xff]
    %v394 = vld [vmem:[%s3 + $0x38] sm:$0xff]
    %v395 = vld [vmem:[%s3 + $0x40] sm:$0xff]
    %v396 = vld [vmem:[%s3 + $0x48] sm:$0xff]
    %v397 = vld [vmem:[%s3 + $0x50] sm:$0xff]
    %v398 = vld [vmem:[%s3 + $0x58] sm:$0xff]
    %v399 = vld [vmem:[%s3 + $0x60] sm:$0xff]
    %v400 = vld [vmem:[%s3 + $0x68] sm:$0xff]
    %v401 = vld [vmem:[%s3 + $0x70] sm:$0xff]
    %v402 = vld [vmem:[%s3 + $0x78] sm:$0xff]
    %v403 = vld [vmem:[%s5] sm:$0xff]
    %v404 = vld [vmem:[%s5 + $0x8] sm:$0xff]
    %v405 = vld [vmem:[%s5 + $0x10] sm:$0xff]
    %v406 = vld [vmem:[%s5 + $0x18] sm:$0xff]
    %v407 = vld [vmem:[%s7] sm:$0xff]
    %v408 = vld [vmem:[%s7 + $0x8] sm:$0xff]
    %vm409 = vcmask 130048
    %v411 = vsel %vm409, %v403, 0
    %v414 = vsel %vm409, %v404, 0
    %v417 = vsel %vm409, %v405, 0
    %v420 = vsel %vm409, %v406, 0
    %422 = vmatprep.subr.mxu0 0.0
    %423 = vmatpush1.msra.mxu0 %v407
    %424 = vmatprep.subr.mxu0 0.0
    %425 = vmatpush1.msra.mxu0 %v408
    %426 = vmatprep.subr.mxu0 0.0
    %427 = vmatpush1.msra.mxu0 0.0
    %428 = vmatprep.subr.mxu0 0.0
    %429 = vmatpush1.msra.mxu0 0.0
    %430 = vmatprep.subr.mxu0 0.0
    %431 = vmatpush1.msra.mxu0 0.0
    %432 = vmatprep.subr.mxu0 0.0
    %433 = vmatpush1.msra.mxu0 0.0
    %434 = vmatprep.subr.mxu0 0.0
    %435 = vmatpush1.msra.mxu0 0.0
    %436 = vmatprep.subr.mxu0 0.0
    %437 = vmatpush1.msra.mxu0 0.0
    %438 = vmatprep.subr.mxu0 0.0
    %439 = vmatpush1.msra.mxu0 0.0
    %440 = vmatprep.subr.mxu0 0.0
    %441 = vmatpush1.msra.mxu0 0.0
    %442 = vmatprep.subr.mxu0 0.0
    %443 = vmatpush1.msra.mxu0 0.0
    %444 = vmatprep.subr.mxu0 0.0
    %445 = vmatpush1.msra.mxu0 0.0
    %446 = vmatprep.subr.mxu0 0.0
    %447 = vmatpush1.msra.mxu0 0.0
    %448 = vmatprep.subr.mxu0 0.0
    %449 = vmatpush1.msra.mxu0 0.0
    %450 = vmatprep.subr.mxu0 0.0
    %451 = vmatpush1.msra.mxu0 0.0
    %452 = vmatprep.subr.mxu0 0.0
    %453 = vmatpush1.msra.mxu0 0.0
    %454 = vmatprep.subr.mxu0 0.0
    %455 = vmatpush1.msra.mxu0 0.0
    %456 = vmatprep.subr.mxu0 0.0
    %457 = vmatpush1.msra.mxu0 0.0
    %458 = vmatprep.subr.mxu0 0.0
    %459 = vmatpush1.msra.mxu0 0.0
    %460 = vmatprep.subr.mxu0 0.0
    %461 = vmatpush1.msra.mxu0 0.0
    %462 = vmatprep.subr.mxu0 0.0
    %463 = vmatpush1.msra.mxu0 0.0
    %464 = vmatprep.subr.mxu0 0.0
    %465 = vmatpush1.msra.mxu0 0.0
    %466 = vmatprep.subr.mxu0 0.0
    %467 = vmatpush1.msra.mxu0 0.0
    %468 = vmatprep.subr.mxu0 0.0
    %469 = vmatpush1.msra.mxu0 0.0
    %470 = vmatprep.subr.mxu0 0.0
    %471 = vmatpush1.msra.mxu0 0.0
    %472 = vmatprep.subr.mxu0 0.0
    %473 = vmatpush1.msra.mxu0 0.0
    %474 = vmatprep.subr.mxu0 0.0
    %475 = vmatpush1.msra.mxu0 0.0
    %476 = vmatprep.subr.mxu0 0.0
    %477 = vmatpush1.msra.mxu0 0.0
    %478 = vmatprep.subr.mxu0 0.0
    %479 = vmatpush1.msra.mxu0 0.0
    %480 = vmatprep.subr.mxu0 0.0
    %481 = vmatpush1.msra.mxu0 0.0
    %482 = vmatprep.subr.mxu0 0.0
    %483 = vmatpush1.msra.mxu0 0.0
    %484 = vmatprep.subr.mxu0 0.0
    %485 = vmatpush1.msra.mxu0 0.0
    %486 = vmatprep.mubr.f32.mxu0 0.0
    %487 = vmatmul.mubr.f32.gmra.mrb[0].mxu0 %v411
    %v488 = vpop.f32.mrb[0].mxu0
    %v489 = vadd.f32 0.0, %v488
    %v490 = vpop.f32.mrb[0].mxu0
    %491 = vmatprep.mubr.f32.mxu0 0.0
    %492 = vmatmul.mubr.f32.gmra.mrb[0].mxu0 %v414
    %v493 = vpop.f32.mrb[0].mxu0
    %v494 = vadd.f32 0.0, %v493
    %v495 = vpop.f32.mrb[0].mxu0
    %496 = vmatprep.mubr.f32.mxu0 0.0
    %497 = vmatmul.mubr.f32.gmra.mrb[0].mxu0 %v417
    %v498 = vpop.f32.mrb[0].mxu0
    %v499 = vadd.f32 0.0, %v498
    %v500 = vpop.f32.mrb[0].mxu0
    %501 = vmatprep.mubr.f32.mxu0 0.0
    %502 = vmatmul.mubr.f32.gmra.mrb[0].mxu0 %v420
    %v503 = vpop.f32.mrb[0].mxu0
    %v504 = vadd.f32 0.0, %v503
    %v505 = vpop.f32.mrb[0].mxu0
    %506 = vdwg.mxu0
    %507 = vmatprep.subr.mxu0 0.0
    %508 = vmatpush1.msra.mxu0 %v387
    %509 = vmatprep.subr.mxu0 0.0
    %510 = vmatpush1.msra.mxu0 %v388
    %511 = vmatprep.subr.mxu0 0.0
    %512 = vmatpush1.msra.mxu0 %v389
    %513 = vmatprep.subr.mxu0 0.0
    %514 = vmatpush1.msra.mxu0 %v390
    %515 = vmatprep.subr.mxu0 0.0
    %516 = vmatpush1.msra.mxu0 %v391
    %517 = vmatprep.subr.mxu0 0.0
    %518 = vmatpush1.msra.mxu0 %v392
    %519 = vmatprep.subr.mxu0 0.0
    %520 = vmatpush1.msra.mxu0 %v393
    %521 = vmatprep.subr.mxu0 0.0
    %522 = vmatpush1.msra.mxu0 %v394
    %523 = vmatprep.subr.mxu0 0.0
    %524 = vmatpush1.msra.mxu0 %v395
    %525 = vmatprep.subr.mxu0 0.0
    %526 = vmatpush1.msra.mxu0 %v396
    %527 = vmatprep.subr.mxu0 0.0
    %528 = vmatpush1.msra.mxu0 %v397
    %529 = vmatprep.subr.mxu0 0.0
    %530 = vmatpush1.msra.mxu0 %v398
    %531 = vmatprep.subr.mxu0 0.0
    %532 = vmatpush1.msra.mxu0 %v399
    %533 = vmatprep.subr.mxu0 0.0
    %534 = vmatpush1.msra.mxu0 %v400
    %535 = vmatprep.subr.mxu0 0.0
    %536 = vmatpush1.msra.mxu0 %v401
    %537 = vmatprep.subr.mxu0 0.0
    %538 = vmatpush1.msra.mxu0 %v402
    %539 = vmatprep.subr.mxu0 0.0
    %540 = vmatpush1.msra.mxu0 0.0
    %541 = vmatprep.subr.mxu0 0.0
    %542 = vmatpush1.msra.mxu0 0.0
    %543 = vmatprep.subr.mxu0 0.0
    %544 = vmatpush1.msra.mxu0 0.0
    %545 = vmatprep.subr.mxu0 0.0
    %546 = vmatpush1.msra.mxu0 0.0
    %547 = vmatprep.subr.mxu0 0.0
    %548 = vmatpush1.msra.mxu0 0.0
    %549 = vmatprep.subr.mxu0 0.0
    %550 = vmatpush1.msra.mxu0 0.0
    %551 = vmatprep.subr.mxu0 0.0
    %552 = vmatpush1.msra.mxu0 0.0
    %553 = vmatprep.subr.mxu0 0.0
    %554 = vmatpush1.msra.mxu0 0.0
    %555 = vmatprep.subr.mxu0 0.0
    %556 = vmatpush1.msra.mxu0 0.0
    %557 = vmatprep.subr.mxu0 0.0
    %558 = vmatpush1.msra.mxu0 0.0
    %559 = vmatprep.subr.mxu0 0.0
    %560 = vmatpush1.msra.mxu0 0.0
    %561 = vmatprep.subr.mxu0 0.0
    %562 = vmatpush1.msra.mxu0 0.0
    %563 = vmatprep.subr.mxu0 0.0
    %564 = vmatpush1.msra.mxu0 0.0
    %565 = vmatprep.subr.mxu0 0.0
    %566 = vmatpush1.msra.mxu0 0.0
    %567 = vmatprep.subr.mxu0 0.0
    %568 = vmatpush1.msra.mxu0 0.0
    %569 = vmatprep.subr.mxu0 0.0
    %570 = vmatpush1.msra.mxu0 0.0
    %571 = vmatprep.mubr.f32.mxu0 0.0
    %572 = vmatmul.mubr.f32.gmra.mrb[0].mxu0 %v383
    %v573 = vpop.f32.mrb[0].mxu0
    %v574 = vadd.f32 %v489, %v573
    %v575 = vpop.f32.mrb[0].mxu0
    %576 = vmatprep.mubr.f32.mxu0 0.0
    %577 = vmatmul.mubr.f32.gmra.mrb[0].mxu0 %v384
    %v578 = vpop.f32.mrb[0].mxu0
    %v579 = vadd.f32 %v494, %v578
    %v580 = vpop.f32.mrb[0].mxu0
    %581 = vmatprep.mubr.f32.mxu0 0.0
    %582 = vmatmul.mubr.f32.gmra.mrb[0].mxu0 %v385
    %v583 = vpop.f32.mrb[0].mxu0
    %v584 = vadd.f32 %v499, %v583
    %v585 = vpop.f32.mrb[0].mxu0
    %586 = vmatprep.mubr.f32.mxu0 0.0
    %587 = vmatmul.mubr.f32.gmra.mrb[0].mxu0 %v386
    %v588 = vpop.f32.mrb[0].mxu0
    %v589 = vadd.f32 %v504, %v588
    %v590 = vpop.f32.mrb[0].mxu0
    %591 = vdwg.mxu0
    %v592 = vld [vmem:[%s9] sm:$0xff]
    %v593 = vld [vmem:[%s9 + $0x8] sm:$0xff]
    %v594 = vld [vmem:[%s9 + $0x10] sm:$0xff]
    %v595 = vld [vmem:[%s9 + $0x18] sm:$0xff]
    %v596 = vld [vmem:[%s11] sm:$0x1]
    %v597 = vld [vmem:[%s13] sm:$0x1]
    %598 = vadd.xlane.f32.xlu0 %v574
    %v599 = vpop.xlane.xlu0 %598
    %600 = vadd.xlane.f32.xlu0 %v579
    %v601 = vpop.xlane.xlu0 %600
    %602 = vadd.xlane.f32.xlu0 %v584
    %v603 = vpop.xlane.xlu0 %602
    %604 = vadd.xlane.f32.xlu0 %v589
    %v605 = vpop.xlane.xlu0 %604
    %v606 = vrcp.pop 128.0
    %v607 = vmul.f32 %v599, %v606
    %v608 = vmul.f32 %v601, %v606
    %v609 = vmul.f32 %v603, %v606
    %v610 = vmul.f32 %v605, %v606
    %v611 = vsub.f32 %v574, %v607
    %v612 = vsub.f32 %v579, %v608
    %v613 = vsub.f32 %v584, %v609
    %v614 = vsub.f32 %v589, %v610
    %v615 = vmul.f32 %v611, %v611
    %v616 = vmul.f32 %v612, %v612
    %v617 = vmul.f32 %v613, %v613
    %v618 = vmul.f32 %v614, %v614
    %619 = vadd.xlane.f32.xlu0 %v615
    %v620 = vpop.xlane.xlu0 %619
    %621 = vadd.xlane.f32.xlu0 %v616
    %v622 = vpop.xlane.xlu0 %621
    %623 = vadd.xlane.f32.xlu0 %v617
    %v624 = vpop.xlane.xlu0 %623
    %625 = vadd.xlane.f32.xlu0 %v618
    %v626 = vpop.xlane.xlu0 %625
    %v627 = vmul.f32 %v620, %v606
    %v628 = vmul.f32 %v622, %v606
    %v629 = vmul.f32 %v624, %v606
    %v630 = vmul.f32 %v626, %v606
    %v631 = vadd.f32 %v627, 1e-05
    %v632 = vadd.f32 %v628, 1e-05
    %v633 = vadd.f32 %v629, 1e-05
    %v634 = vadd.f32 %v630, 1e-05
    %v635 = vrsqrt.pop %v631
    %v636 = vrsqrt.pop %v632
    %v637 = vrsqrt.pop %v633
    %v638 = vrsqrt.pop %v634
    %v639 = vmul.f32 %v611, %v635
    %v640 = vmul.f32 %v612, %v636
    %v641 = vmul.f32 %v613, %v637
    %v642 = vmul.f32 %v614, %v638
    %v644 = vlaneseq
    %v645 = vshrl.u32 %v644, 7
    %v646 = vsub.s32 0, %v645
    %v647 = vrot.slane %v596, %v646
    %v649 = vmul.f32 %v639, %v647
    %v650 = vmul.f32 %v640, %v647
    %v651 = vmul.f32 %v641, %v647
    %v652 = vmul.f32 %v642, %v647
    %v654 = vlaneseq
    %v655 = vshrl.u32 %v654, 7
    %v656 = vsub.s32 0, %v655
    %v657 = vrot.slane %v597, %v656
    %v659 = vadd.f32 %v649, %v657
    %v660 = vadd.f32 %v650, %v657
    %v661 = vadd.f32 %v651, %v657
    %v662 = vadd.f32 %v652, %v657
    %v663 = vpack.c.bf16 %v660, %v659
    %v664 = vpack.c.bf16 %v662, %v661
    %v665 = vld [vmem:[%s15] sm:$0xf]
    %v666 = vld [vmem:[%s15 + $0x4] sm:$0xf]
    %v667 = vld [vmem:[%s15 + $0x8] sm:$0xf]
    %v668 = vld [vmem:[%s15 + $0xc] sm:$0xf]
    %v669 = vld [vmem:[%s15 + $0x10] sm:$0xf]
    %v670 = vld [vmem:[%s15 + $0x14] sm:$0xf]
    %v671 = vld [vmem:[%s15 + $0x18] sm:$0xf]
    %v672 = vld [vmem:[%s15 + $0x1c] sm:$0xf]
    %v673 = vld [vmem:[%s15 + $0x20] sm:$0xf]
    %v674 = vld [vmem:[%s15 + $0x24] sm:$0xf]
    %v675 = vld [vmem:[%s15 + $0x28] sm:$0xf]
    %v676 = vld [vmem:[%s15 + $0x2c] sm:$0xf]
    %v677 = vld [vmem:[%s15 + $0x30] sm:$0xf]
    %v678 = vld [vmem:[%s15 + $0x34] sm:$0xf]
    %v679 = vld [vmem:[%s15 + $0x38] sm:$0xf]
    %v680 = vld [vmem:[%s15 + $0x3c] sm:$0xf]
    %v697 = vunpack.c.l.b16 %v665
    %v698 = vunpack.c.l.b16 %v666
    %v699 = vunpack.c.l.b16 %v667
    %v700 = vunpack.c.l.b16 %v668
    %v701 = vunpack.c.l.b16 %v669
    %v702 = vunpack.c.l.b16 %v670
    %v703 = vunpack.c.l.b16 %v671
    %v704 = vunpack.c.l.b16 %v672
    %v705 = vunpack.c.l.b16 %v673
    %v706 = vunpack.c.l.b16 %v674
    %v707 = vunpack.c.l.b16 %v675
    %v708 = vunpack.c.l.b16 %v676
    %v709 = vunpack.c.l.b16 %v677
    %v710 = vunpack.c.l.b16 %v678
    %v711 = vunpack.c.l.b16 %v679
    %v712 = vunpack.c.l.b16 %v680
    %v713 = vpack.c.b16 %v698, %v697
    %v714 = vpack.c.b16 %v700, %v699
    %v715 = vpack.c.b16 %v702, %v701
    %v716 = vpack.c.b16 %v704, %v703
    %v717 = vpack.c.b16 %v706, %v705
    %v718 = vpack.c.b16 %v708, %v707
    %v719 = vpack.c.b16 %v710, %v709
    %v720 = vpack.c.b16 %v712, %v711
    %729 = vmatprep.subr.bf16.mxu0 0
    %730 = vmatpush1.bf16.msra.mxu0 %v713
    %731 = vmatprep.subr.bf16.mxu0 0
    %732 = vmatpush1.bf16.msra.mxu0 %v714
    %733 = vmatprep.subr.bf16.mxu0 0
    %734 = vmatpush1.bf16.msra.mxu0 %v715
    %735 = vmatprep.subr.bf16.mxu0 0
    %736 = vmatpush1.bf16.msra.mxu0 %v716
    %737 = vmatprep.subr.bf16.mxu0 0
    %738 = vmatpush1.bf16.msra.mxu0 %v717
    %739 = vmatprep.subr.bf16.mxu0 0
    %740 = vmatpush1.bf16.msra.mxu0 %v718
    %741 = vmatprep.subr.bf16.mxu0 0
    %742 = vmatpush1.bf16.msra.mxu0 %v719
    %743 = vmatprep.subr.bf16.mxu0 0
    %744 = vmatpush1.bf16.msra.mxu0 %v720
    %745 = vmatprep.subr.bf16.mxu0 0
    %746 = vmatpush1.bf16.msra.mxu0 0
    %747 = vmatprep.subr.bf16.mxu0 0
    %748 = vmatpush1.bf16.msra.mxu0 0
    %749 = vmatprep.subr.bf16.mxu0 0
    %750 = vmatpush1.bf16.msra.mxu0 0
    %751 = vmatprep.subr.bf16.mxu0 0
    %752 = vmatpush1.bf16.msra.mxu0 0
    %753 = vmatprep.subr.bf16.mxu0 0
    %754 = vmatpush1.bf16.msra.mxu0 0
    %755 = vmatprep.subr.bf16.mxu0 0
    %756 = vmatpush1.bf16.msra.mxu0 0
    %757 = vmatprep.subr.bf16.mxu0 0
    %758 = vmatpush1.bf16.msra.mxu0 0
    %759 = vmatprep.subr.bf16.mxu0 0
    %760 = vmatpush1.bf16.msra.mxu0 0
    %761 = vmatprep.mubr.bf16.mxu0 0
    %762 = vmatmul.mubr.bf16.gmra.mrb[0].mxu0 %v663
    %v763 = vpop.f32.mrb[0].mxu0
    %v764 = vadd.f32 0.0, %v763
    %v765 = vpop.f32.mrb[0].mxu0
    %v766 = vpop.f32.mrb[0].mxu0
    %v767 = vadd.f32 0.0, %v766
    %v768 = vpop.f32.mrb[0].mxu0
    %769 = vmatprep.mubr.bf16.mxu0 0
    %770 = vmatmul.mubr.bf16.gmra.mrb[0].mxu0 %v664
    %v771 = vpop.f32.mrb[0].mxu0
    %v772 = vadd.f32 0.0, %v771
    %v773 = vpop.f32.mrb[0].mxu0
    %v774 = vpop.f32.mrb[0].mxu0
    %v775 = vadd.f32 0.0, %v774
    %v776 = vpop.f32.mrb[0].mxu0
    %777 = vdwg.mxu0
    %v778 = vld [vmem:[#allocation2] sm:$0xf]
    %v779 = vld [vmem:[#allocation2 + $0x4] sm:$0xf]
    %v780 = vld [vmem:[#allocation2 + $0x8] sm:$0xf]
    %v781 = vld [vmem:[#allocation2 + $0xc] sm:$0xf]
    %v782 = vld [vmem:[#allocation2 + $0x10] sm:$0xf]
    %v783 = vld [vmem:[#allocation2 + $0x14] sm:$0xf]
    %v784 = vld [vmem:[#allocation2 + $0x18] sm:$0xf]
    %v785 = vld [vmem:[#allocation2 + $0x1c] sm:$0xf]
    %v786 = vld [vmem:[#allocation2 + $0x20] sm:$0xf]
    %v787 = vld [vmem:[#allocation2 + $0x24] sm:$0xf]
    %v788 = vld [vmem:[#allocation2 + $0x28] sm:$0xf]
    %v789 = vld [vmem:[#allocation2 + $0x2c] sm:$0xf]
    %v790 = vld [vmem:[#allocation2 + $0x30] sm:$0xf]
    %v791 = vld [vmem:[#allocation2 + $0x34] sm:$0xf]
    %v792 = vld [vmem:[#allocation2 + $0x38] sm:$0xf]
    %v793 = vld [vmem:[#allocation2 + $0x3c] sm:$0xf]
    %v810 = vunpack.c.l.b16 %v778
    %v811 = vunpack.c.l.b16 %v779
    %v812 = vunpack.c.l.b16 %v780
    %v813 = vunpack.c.l.b16 %v781
    %v814 = vunpack.c.l.b16 %v782
    %v815 = vunpack.c.l.b16 %v783
    %v816 = vunpack.c.l.b16 %v784
    %v817 = vunpack.c.l.b16 %v785
    %v818 = vunpack.c.l.b16 %v786
    %v819 = vunpack.c.l.b16 %v787
    %v820 = vunpack.c.l.b16 %v788
    %v821 = vunpack.c.l.b16 %v789
    %v822 = vunpack.c.l.b16 %v790
    %v823 = vunpack.c.l.b16 %v791
    %v824 = vunpack.c.l.b16 %v792
    %v825 = vunpack.c.l.b16 %v793
    %v826 = vpack.c.b16 %v811, %v810
    %v827 = vpack.c.b16 %v813, %v812
    %v828 = vpack.c.b16 %v815, %v814
    %v829 = vpack.c.b16 %v817, %v816
    %v830 = vpack.c.b16 %v819, %v818
    %v831 = vpack.c.b16 %v821, %v820
    %v832 = vpack.c.b16 %v823, %v822
    %v833 = vpack.c.b16 %v825, %v824
    %842 = vmatprep.subr.bf16.mxu0 0
    %843 = vmatpush1.bf16.msra.mxu0 %v826
    %844 = vmatprep.subr.bf16.mxu0 0
    %845 = vmatpush1.bf16.msra.mxu0 %v827
    %846 = vmatprep.subr.bf16.mxu0 0
    %847 = vmatpush1.bf16.msra.mxu0 %v828
    %848 = vmatprep.subr.bf16.mxu0 0
    %849 = vmatpush1.bf16.msra.mxu0 %v829
    %850 = vmatprep.subr.bf16.mxu0 0
    %851 = vmatpush1.bf16.msra.mxu0 %v830
    %852 = vmatprep.subr.bf16.mxu0 0
    %853 = vmatpush1.bf16.msra.mxu0 %v831
    %854 = vmatprep.subr.bf16.mxu0 0
    %855 = vmatpush1.bf16.msra.mxu0 %v832
    %856 = vmatprep.subr.bf16.mxu0 0
    %857 = vmatpush1.bf16.msra.mxu0 %v833
    %858 = vmatprep.subr.bf16.mxu0 0
    %859 = vmatpush1.bf16.msra.mxu0 0
    %860 = vmatprep.subr.bf16.mxu0 0
    %861 = vmatpush1.bf16.msra.mxu0 0
    %862 = vmatprep.subr.bf16.mxu0 0
    %863 = vmatpush1.bf16.msra.mxu0 0
    %864 = vmatprep.subr.bf16.mxu0 0
    %865 = vmatpush1.bf16.msra.mxu0 0
    %866 = vmatprep.subr.bf16.mxu0 0
    %867 = vmatpush1.bf16.msra.mxu0 0
    %868 = vmatprep.subr.bf16.mxu0 0
    %869 = vmatpush1.bf16.msra.mxu0 0
    %870 = vmatprep.subr.bf16.mxu0 0
    %871 = vmatpush1.bf16.msra.mxu0 0
    %872 = vmatprep.subr.bf16.mxu0 0
    %873 = vmatpush1.bf16.msra.mxu0 0
    %874 = vmatprep.mubr.bf16.mxu0 0
    %875 = vmatmul.mubr.bf16.gmra.mrb[0].mxu0 %v663
    %v876 = vpop.f32.mrb[0].mxu0
    %v877 = vadd.f32 0.0, %v876
    %v878 = vpop.f32.mrb[0].mxu0
    %v879 = vpop.f32.mrb[0].mxu0
    %v880 = vadd.f32 0.0, %v879
    %v881 = vpop.f32.mrb[0].mxu0
    %882 = vmatprep.mubr.bf16.mxu0 0
    %883 = vmatmul.mubr.bf16.gmra.mrb[0].mxu0 %v664
    %v884 = vpop.f32.mrb[0].mxu0
    %v885 = vadd.f32 0.0, %v884
    %v886 = vpop.f32.mrb[0].mxu0
    %v887 = vpop.f32.mrb[0].mxu0
    %v888 = vadd.f32 0.0, %v887
    %v889 = vpop.f32.mrb[0].mxu0
    %890 = vdwg.mxu0
    %v891 = vld [vmem:[#allocation5] sm:$0xf]
    %v892 = vld [vmem:[#allocation5 + $0x4] sm:$0xf]
    %v893 = vld [vmem:[#allocation5 + $0x8] sm:$0xf]
    %v894 = vld [vmem:[#allocation5 + $0xc] sm:$0xf]
    %v895 = vld [vmem:[#allocation5 + $0x10] sm:$0xf]
    %v896 = vld [vmem:[#allocation5 + $0x14] sm:$0xf]
    %v897 = vld [vmem:[#allocation5 + $0x18] sm:$0xf]
    %v898 = vld [vmem:[#allocation5 + $0x1c] sm:$0xf]
    %v899 = vld [vmem:[#allocation5 + $0x20] sm:$0xf]
    %v900 = vld [vmem:[#allocation5 + $0x24] sm:$0xf]
    %v901 = vld [vmem:[#allocation5 + $0x28] sm:$0xf]
    %v902 = vld [vmem:[#allocation5 + $0x2c] sm:$0xf]
    %v903 = vld [vmem:[#allocation5 + $0x30] sm:$0xf]
    %v904 = vld [vmem:[#allocation5 + $0x34] sm:$0xf]
    %v905 = vld [vmem:[#allocation5 + $0x38] sm:$0xf]
    %v906 = vld [vmem:[#allocation5 + $0x3c] sm:$0xf]
    %v923 = vunpack.c.l.b16 %v891
    %v924 = vunpack.c.l.b16 %v892
    %v925 = vunpack.c.l.b16 %v893
    %v926 = vunpack.c.l.b16 %v894
    %v927 = vunpack.c.l.b16 %v895
    %v928 = vunpack.c.l.b16 %v896
    %v929 = vunpack.c.l.b16 %v897
    %v930 = vunpack.c.l.b16 %v898
    %v931 = vunpack.c.l.b16 %v899
    %v932 = vunpack.c.l.b16 %v900
    %v933 = vunpack.c.l.b16 %v901
    %v934 = vunpack.c.l.b16 %v902
    %v935 = vunpack.c.l.b16 %v903
    %v936 = vunpack.c.l.b16 %v904
    %v937 = vunpack.c.l.b16 %v905
    %v938 = vunpack.c.l.b16 %v906
    %v939 = vpack.c.b16 %v924, %v923
    %v940 = vpack.c.b16 %v926, %v925
    %v941 = vpack.c.b16 %v928, %v927
    %v942 = vpack.c.b16 %v930, %v929
    %v943 = vpack.c.b16 %v932, %v931
    %v944 = vpack.c.b16 %v934, %v933
    %v945 = vpack.c.b16 %v936, %v935
    %v946 = vpack.c.b16 %v938, %v937
    %955 = vmatprep.subr.bf16.mxu0 0
    %956 = vmatpush1.bf16.msra.mxu0 %v939
    %957 = vmatprep.subr.bf16.mxu0 0
    %958 = vmatpush1.bf16.msra.mxu0 %v940
    %959 = vmatprep.subr.bf16.mxu0 0
    %960 = vmatpush1.bf16.msra.mxu0 %v941
    %961 = vmatprep.subr.bf16.mxu0 0
    %962 = vmatpush1.bf16.msra.mxu0 %v942
    %963 = vmatprep.subr.bf16.mxu0 0
    %964 = vmatpush1.bf16.msra.mxu0 %v943
    %965 = vmatprep.subr.bf16.mxu0 0
    %966 = vmatpush1.bf16.msra.mxu0 %v944
    %967 = vmatprep.subr.bf16.mxu0 0
    %968 = vmatpush1.bf16.msra.mxu0 %v945
    %969 = vmatprep.subr.bf16.mxu0 0
    %970 = vmatpush1.bf16.msra.mxu0 %v946
    %971 = vmatprep.subr.bf16.mxu0 0
    %972 = vmatpush1.bf16.msra.mxu0 0
    %973 = vmatprep.subr.bf16.mxu0 0
    %974 = vmatpush1.bf16.msra.mxu0 0
    %975 = vmatprep.subr.bf16.mxu0 0
    %976 = vmatpush1.bf16.msra.mxu0 0
    %977 = vmatprep.subr.bf16.mxu0 0
    %978 = vmatpush1.bf16.msra.mxu0 0
    %979 = vmatprep.subr.bf16.mxu0 0
    %980 = vmatpush1.bf16.msra.mxu0 0
    %981 = vmatprep.subr.bf16.mxu0 0
    %982 = vmatpush1.bf16.msra.mxu0 0
    %983 = vmatprep.subr.bf16.mxu0 0
    %984 = vmatpush1.bf16.msra.mxu0 0
    %985 = vmatprep.subr.bf16.mxu0 0
    %986 = vmatpush1.bf16.msra.mxu0 0
    %987 = vmatprep.mubr.bf16.mxu0 0
    %988 = vmatmul.mubr.bf16.gmra.mrb[0].mxu0 %v663
    %v989 = vpop.f32.mrb[0].mxu0
    %v990 = vadd.f32 0.0, %v989
    %v991 = vpop.f32.mrb[0].mxu0
    %v992 = vpop.f32.mrb[0].mxu0
    %v993 = vadd.f32 0.0, %v992
    %v994 = vpop.f32.mrb[0].mxu0
    %995 = vmatprep.mubr.bf16.mxu0 0
    %996 = vmatmul.mubr.bf16.gmra.mrb[0].mxu0 %v664
    %v997 = vpop.f32.mrb[0].mxu0
    %v998 = vadd.f32 0.0, %v997
    %v999 = vpop.f32.mrb[0].mxu0
    %v1000 = vpop.f32.mrb[0].mxu0
    %v1001 = vadd.f32 0.0, %v1000
    %v1002 = vpop.f32.mrb[0].mxu0
    %1003 = vdwg.mxu0
    %vm1004 = vcmask 261120
    %v1006 = vsel %vm1004, %v764, 0
    %v1009 = vsel %vm1004, %v767, 0
    %v1012 = vsel %vm1004, %v772, 0
    %v1015 = vsel %vm1004, %v775, 0
    %v1018 = vsel %vm1004, %v877, 0
    %v1021 = vsel %vm1004, %v880, 0
    %v1024 = vsel %vm1004, %v885, 0
    %v1027 = vsel %vm1004, %v888, 0
    %1029 = vmatprep.subr.mxu0 0.0
    %1030 = vmatpush1.xpose.msra.mxu0 %v1018
    %1031 = vmatprep.subr.mxu0 0.0
    %1032 = vmatpush1.xpose.msra.mxu0 %v1021
    %1033 = vmatprep.subr.mxu0 0.0
    %1034 = vmatpush1.xpose.msra.mxu0 %v1024
    %1035 = vmatprep.subr.mxu0 0.0
    %1036 = vmatpush1.xpose.msra.mxu0 %v1027
    %1037 = vmatprep.subr.mxu0 0.0
    %1038 = vmatpush1.xpose.msra.mxu0 0.0
    %1039 = vmatprep.subr.mxu0 0.0
    %1040 = vmatpush1.xpose.msra.mxu0 0.0
    %1041 = vmatprep.subr.mxu0 0.0
    %1042 = vmatpush1.xpose.msra.mxu0 0.0
    %1043 = vmatprep.subr.mxu0 0.0
    %1044 = vmatpush1.xpose.msra.mxu0 0.0
    %1045 = vmatprep.subr.mxu0 0.0
    %1046 = vmatpush1.xpose.msra.mxu0 0.0
    %1047 = vmatprep.subr.mxu0 0.0
    %1048 = vmatpush1.xpose.msra.mxu0 0.0
    %1049 = vmatprep.subr.mxu0 0.0
    %1050 = vmatpush1.xpose.msra.mxu0 0.0
    %1051 = vmatprep.subr.mxu0 0.0
    %1052 = vmatpush1.xpose.msra.mxu0 0.0
    %1053 = vmatprep.subr.mxu0 0.0
    %1054 = vmatpush1.xpose.msra.mxu0 0.0
    %1055 = vmatprep.subr.mxu0 0.0
    %1056 = vmatpush1.xpose.msra.mxu0 0.0
    %1057 = vmatprep.subr.mxu0 0.0
    %1058 = vmatpush1.xpose.msra.mxu0 0.0
    %1059 = vmatprep.subr.mxu0 0.0
    %1060 = vmatpush1.xpose.msra.mxu0 0.0
    %1061 = vmatprep.subr.mxu0 0.0
    %1062 = vmatpush1.xpose.msra.mxu0 0.0
    %1063 = vmatprep.subr.mxu0 0.0
    %1064 = vmatpush1.xpose.msra.mxu0 0.0
    %1065 = vmatprep.subr.mxu0 0.0
    %1066 = vmatpush1.xpose.msra.mxu0 0.0
    %1067 = vmatprep.subr.mxu0 0.0
    %1068 = vmatpush1.xpose.msra.mxu0 0.0
    %1069 = vmatprep.subr.mxu0 0.0
    %1070 = vmatpush1.xpose.msra.mxu0 0.0
    %1071 = vmatprep.subr.mxu0 0.0
    %1072 = vmatpush1.xpose.msra.mxu0 0.0
    %1073 = vmatprep.subr.mxu0 0.0
    %1074 = vmatpush1.xpose.msra.mxu0 0.0
    %1075 = vmatprep.subr.mxu0 0.0
    %1076 = vmatpush1.xpose.msra.mxu0 0.0
    %1077 = vmatprep.subr.mxu0 0.0
    %1078 = vmatpush1.xpose.msra.mxu0 0.0
    %1079 = vmatprep.subr.mxu0 0.0
    %1080 = vmatpush1.xpose.msra.mxu0 0.0
    %1081 = vmatprep.subr.mxu0 0.0
    %1082 = vmatpush1.xpose.msra.mxu0 0.0
    %1083 = vmatprep.subr.mxu0 0.0
    %1084 = vmatpush1.xpose.msra.mxu0 0.0
    %1085 = vmatprep.subr.mxu0 0.0
    %1086 = vmatpush1.xpose.msra.mxu0 0.0
    %1087 = vmatprep.subr.mxu0 0.0
    %1088 = vmatpush1.xpose.msra.mxu0 0.0
    %1089 = vmatprep.subr.mxu0 0.0
    %1090 = vmatpush1.xpose.msra.mxu0 0.0
    %1091 = vmatprep.subr.mxu0 0.0
    %1092 = vmatpush1.xpose.msra.mxu0 0.0
    %1093 = vmatprep.mubr.f32.mxu0 0.0
    %1094 = vmatmul.mubr.f32.gmra.mrb[0].mxu0 %v1006
    %v1095 = vpop.f32.mrb[0].mxu0
    %v1096 = vadd.f32 0.0, %v1095
    %v1097 = vpop.f32.mrb[0].mxu0
    %1098 = vmatprep.mubr.f32.mxu0 0.0
    %1099 = vmatmul.mubr.f32.gmra.mrb[0].mxu0 %v1009
    %v1100 = vpop.f32.mrb[0].mxu0
    %v1101 = vadd.f32 0.0, %v1100
    %v1102 = vpop.f32.mrb[0].mxu0
    %1103 = vmatprep.mubr.f32.mxu0 0.0
    %1104 = vmatmul.mubr.f32.gmra.mrb[0].mxu0 %v1012
    %v1105 = vpop.f32.mrb[0].mxu0
    %v1106 = vadd.f32 0.0, %v1105
    %v1107 = vpop.f32.mrb[0].mxu0
    %1108 = vmatprep.mubr.f32.mxu0 0.0
    %1109 = vmatmul.mubr.f32.gmra.mrb[0].mxu0 %v1015
    %v1110 = vpop.f32.mrb[0].mxu0
    %v1111 = vadd.f32 0.0, %v1110
    %v1112 = vpop.f32.mrb[0].mxu0
    %1113 = vdwg.mxu0
    %v1114 = vmul.f32 %v1096, 0.17677669
    %v1115 = vmul.f32 %v1101, 0.17677669
    %v1116 = vmul.f32 %v1106, 0.17677669
    %v1117 = vmul.f32 %v1111, 0.17677669
    %v1118 = vadd.f32 %v1114, %v592
    %v1119 = vadd.f32 %v1115, %v593
    %v1120 = vadd.f32 %v1116, %v594
    %v1121 = vadd.f32 %v1117, %v595
    %v1122 = vsel %vm1004, %v1118, -inf
    %1123 = vmax.xlane.f32.xlu0 %v1122
    %v1124 = vpop.xlane.xlu0 %1123
    %v1125 = vsel %vm1004, %v1119, -inf
    %1126 = vmax.xlane.f32.xlu0 %v1125
    %v1127 = vpop.xlane.xlu0 %1126
    %v1128 = vsel %vm1004, %v1120, -inf
    %1129 = vmax.xlane.f32.xlu0 %v1128
    %v1130 = vpop.xlane.xlu0 %1129
    %v1131 = vsel %vm1004, %v1121, -inf
    %1132 = vmax.xlane.f32.xlu0 %v1131
    %v1133 = vpop.xlane.xlu0 %1132
    %v1134 = vsub.f32 %v1118, %v1124
    %v1135 = vsub.f32 %v1119, %v1127
    %v1136 = vsub.f32 %v1120, %v1130
    %v1137 = vsub.f32 %v1121, %v1133
    %v1138 = vmul.f32 %v1134, 1.442695
    %v1139 = vpow.pop %v1138
    %v1140 = vmul.f32 %v1135, 1.442695
    %v1141 = vpow.pop %v1140
    %v1142 = vmul.f32 %v1136, 1.442695
    %v1143 = vpow.pop %v1142
    %v1144 = vmul.f32 %v1137, 1.442695
    %v1145 = vpow.pop %v1144
    %v1146 = vsel %vm1004, %v1139, 0.0
    %1147 = vadd.xlane.f32.xlu0 %v1146
    %v1148 = vpop.xlane.xlu0 %1147
    %v1149 = vsel %vm1004, %v1141, 0.0
    %1150 = vadd.xlane.f32.xlu0 %v1149
    %v1151 = vpop.xlane.xlu0 %1150
    %v1152 = vsel %vm1004, %v1143, 0.0
    %1153 = vadd.xlane.f32.xlu0 %v1152
    %v1154 = vpop.xlane.xlu0 %1153
    %v1155 = vsel %vm1004, %v1145, 0.0
    %1156 = vadd.xlane.f32.xlu0 %v1155
    %v1157 = vpop.xlane.xlu0 %1156
    %v1158 = vrcp.pop %v1148
    %v1159 = vrcp.pop %v1151
    %v1160 = vrcp.pop %v1154
    %v1161 = vrcp.pop %v1157
    %v1162 = vmul.f32 %v1139, %v1158
    %v1163 = vmul.f32 %v1141, %v1159
    %v1164 = vmul.f32 %v1143, %v1160
    %v1165 = vmul.f32 %v1145, %v1161
    %v1167 = vsel %vm1004, %v1162, 0
    %v1170 = vsel %vm1004, %v1163, 0
    %v1173 = vsel %vm1004, %v1164, 0
    %v1176 = vsel %vm1004, %v1165, 0
    %1178 = vmatprep.subr.mxu0 0.0
    %1179 = vmatpush1.msra.mxu0 %v990
    %1180 = vmatprep.subr.mxu0 0.0
    %1181 = vmatpush1.msra.mxu0 %v993
    %1182 = vmatprep.subr.mxu0 0.0
    %1183 = vmatpush1.msra.mxu0 %v998
    %1184 = vmatprep.subr.mxu0 0.0
    %1185 = vmatpush1.msra.mxu0 %v1001
    %1186 = vmatprep.subr.mxu0 0.0
    %1187 = vmatpush1.msra.mxu0 0.0
    %1188 = vmatprep.subr.mxu0 0.0
    %1189 = vmatpush1.msra.mxu0 0.0
    %1190 = vmatprep.subr.mxu0 0.0
    %1191 = vmatpush1.msra.mxu0 0.0
    %1192 = vmatprep.subr.mxu0 0.0
    %1193 = vmatpush1.msra.mxu0 0.0
    %1194 = vmatprep.subr.mxu0 0.0
    %1195 = vmatpush1.msra.mxu0 0.0
    %1196 = vmatprep.subr.mxu0 0.0
    %1197 = vmatpush1.msra.mxu0 0.0
    %1198 = vmatprep.subr.mxu0 0.0
    %1199 = vmatpush1.msra.mxu0 0.0
    %1200 = vmatprep.subr.mxu0 0.0
    %1201 = vmatpush1.msra.mxu0 0.0
    %1202 = vmatprep.subr.mxu0 0.0
    %1203 = vmatpush1.msra.mxu0 0.0
    %1204 = vmatprep.subr.mxu0 0.0
    %1205 = vmatpush1.msra.mxu0 0.0
    %1206 = vmatprep.subr.mxu0 0.0
    %1207 = vmatpush1.msra.mxu0 0.0
    %1208 = vmatprep.subr.mxu0 0.0
    %1209 = vmatpush1.msra.mxu0 0.0
    %1210 = vmatprep.subr.mxu0 0.0
    %1211 = vmatpush1.msra.mxu0 0.0
    %1212 = vmatprep.subr.mxu0 0.0
    %1213 = vmatpush1.msra.mxu0 0.0
    %1214 = vmatprep.subr.mxu0 0.0
    %1215 = vmatpush1.msra.mxu0 0.0
    %1216 = vmatprep.subr.mxu0 0.0
    %1217 = vmatpush1.msra.mxu0 0.0
    %1218 = vmatprep.subr.mxu0 0.0
    %1219 = vmatpush1.msra.mxu0 0.0
    %1220 = vmatprep.subr.mxu0 0.0
    %1221 = vmatpush1.msra.mxu0 0.0
    %1222 = vmatprep.subr.mxu0 0.0
    %1223 = vmatpush1.msra.mxu0 0.0
    %1224 = vmatprep.subr.mxu0 0.0
    %1225 = vmatpush1.msra.mxu0 0.0
    %1226 = vmatprep.subr.mxu0 0.0
    %1227 = vmatpush1.msra.mxu0 0.0
    %1228 = vmatprep.subr.mxu0 0.0
    %1229 = vmatpush1.msra.mxu0 0.0
    %1230 = vmatprep.subr.mxu0 0.0
    %1231 = vmatpush1.msra.mxu0 0.0
    %1232 = vmatprep.subr.mxu0 0.0
    %1233 = vmatpush1.msra.mxu0 0.0
    %1234 = vmatprep.subr.mxu0 0.0
    %1235 = vmatpush1.msra.mxu0 0.0
    %1236 = vmatprep.subr.mxu0 0.0
    %1237 = vmatpush1.msra.mxu0 0.0
    %1238 = vmatprep.subr.mxu0 0.0
    %1239 = vmatpush1.msra.mxu0 0.0
    %1240 = vmatprep.subr.mxu0 0.0
    %1241 = vmatpush1.msra.mxu0 0.0
    %1242 = vmatprep.mubr.f32.mxu0 0.0
    %1243 = vmatmul.mubr.f32.gmra.mrb[0].mxu0 %v1167
    %v1244 = vpop.f32.mrb[0].mxu0
    %v1245 = vadd.f32 0.0, %v1244
    %v1246 = vpop.f32.mrb[0].mxu0
    %1247 = vmatprep.mubr.f32.mxu0 0.0
    %1248 = vmatmul.mubr.f32.gmra.mrb[0].mxu0 %v1170
    %v1249 = vpop.f32.mrb[0].mxu0
    %v1250 = vadd.f32 0.0, %v1249
    %v1251 = vpop.f32.mrb[0].mxu0
    %1252 = vmatprep.mubr.f32.mxu0 0.0
    %1253 = vmatmul.mubr.f32.gmra.mrb[0].mxu0 %v1173
    %v1254 = vpop.f32.mrb[0].mxu0
    %v1255 = vadd.f32 0.0, %v1254
    %v1256 = vpop.f32.mrb[0].mxu0
    %1257 = vmatprep.mubr.f32.mxu0 0.0
    %1258 = vmatmul.mubr.f32.gmra.mrb[0].mxu0 %v1176
    %v1259 = vpop.f32.mrb[0].mxu0
    %v1260 = vadd.f32 0.0, %v1259
    %v1261 = vpop.f32.mrb[0].mxu0
    %1262 = vdwg.mxu0
    %1263 = vrot.lane.b32.xlu0 %v764, 96
    %v1264 = vpop.permute.xlu0 %1263
    %1265 = vrot.lane.b32.xlu0 %v767, 96
    %v1266 = vpop.permute.xlu0 %1265
    %1267 = vrot.lane.b32.xlu0 %v772, 96
    %v1268 = vpop.permute.xlu0 %1267
    %1269 = vrot.lane.b32.xlu0 %v775, 96
    %v1270 = vpop.permute.xlu0 %1269
    %1271 = vrot.lane.b32.xlu0 %v877, 96
    %v1272 = vpop.permute.xlu0 %1271
    %1273 = vrot.lane.b32.xlu0 %v880, 96
    %v1274 = vpop.permute.xlu0 %1273
    %1275 = vrot.lane.b32.xlu0 %v885, 96
    %v1276 = vpop.permute.xlu0 %1275
    %1277 = vrot.lane.b32.xlu0 %v888, 96
    %v1278 = vpop.permute.xlu0 %1277
    %v1279 = vsel %vm1004, %v1264, 0
    %v1281 = vsel %vm1004, %v1266, 0
    %v1283 = vsel %vm1004, %v1268, 0
    %v1285 = vsel %vm1004, %v1270, 0
    %v1287 = vsel %vm1004, %v1272, 0
    %v1289 = vsel %vm1004, %v1274, 0
    %v1291 = vsel %vm1004, %v1276, 0
    %v1293 = vsel %vm1004, %v1278, 0
    %1295 = vmatprep.subr.mxu0 0.0
    %1296 = vmatpush1.xpose.msra.mxu0 %v1287
    %1297 = vmatprep.subr.mxu0 0.0
    %1298 = vmatpush1.xpose.msra.mxu0 %v1289
    %1299 = vmatprep.subr.mxu0 0.0
    %1300 = vmatpush1.xpose.msra.mxu0 %v1291
    %1301 = vmatprep.subr.mxu0 0.0
    %1302 = vmatpush1.xpose.msra.mxu0 %v1293
    %1303 = vmatprep.subr.mxu0 0.0
    %1304 = vmatpush1.xpose.msra.mxu0 0.0
    %1305 = vmatprep.subr.mxu0 0.0
    %1306 = vmatpush1.xpose.msra.mxu0 0.0
    %1307 = vmatprep.subr.mxu0 0.0
    %1308 = vmatpush1.xpose.msra.mxu0 0.0
    %1309 = vmatprep.subr.mxu0 0.0
    %1310 = vmatpush1.xpose.msra.mxu0 0.0
    %1311 = vmatprep.subr.mxu0 0.0
    %1312 = vmatpush1.xpose.msra.mxu0 0.0
    %1313 = vmatprep.subr.mxu0 0.0
    %1314 = vmatpush1.xpose.msra.mxu0 0.0
    %1315 = vmatprep.subr.mxu0 0.0
    %1316 = vmatpush1.xpose.msra.mxu0 0.0
    %1317 = vmatprep.subr.mxu0 0.0
    %1318 = vmatpush1.xpose.msra.mxu0 0.0
    %1319 = vmatprep.subr.mxu0 0.0
    %1320 = vmatpush1.xpose.msra.mxu0 0.0
    %1321 = vmatprep.subr.mxu0 0.0
    %1322 = vmatpush1.xpose.msra.mxu0 0.0
    %1323 = vmatprep.subr.mxu0 0.0
    %1324 = vmatpush1.xpose.msra.mxu0 0.0
    %1325 = vmatprep.subr.mxu0 0.0
    %1326 = vmatpush1.xpose.msra.mxu0 0.0
    %1327 = vmatprep.subr.mxu0 0.0
    %1328 = vmatpush1.xpose.msra.mxu0 0.0
    %1329 = vmatprep.subr.mxu0 0.0
    %1330 = vmatpush1.xpose.msra.mxu0 0.0
    %1331 = vmatprep.subr.mxu0 0.0
    %1332 = vmatpush1.xpose.msra.mxu0 0.0
    %1333 = vmatprep.subr.mxu0 0.0
    %1334 = vmatpush1.xpose.msra.mxu0 0.0
    %1335 = vmatprep.subr.mxu0 0.0
    %1336 = vmatpush1.xpose.msra.mxu0 0.0
    %1337 = vmatprep.subr.mxu0 0.0
    %1338 = vmatpush1.xpose.msra.mxu0 0.0
    %1339 = vmatprep.subr.mxu0 0.0
    %1340 = vmatpush1.xpose.msra.mxu0 0.0
    %1341 = vmatprep.subr.mxu0 0.0
    %1342 = vmatpush1.xpose.msra.mxu0 0.0
    %1343 = vmatprep.subr.mxu0 0.0
    %1344 = vmatpush1.xpose.msra.mxu0 0.0
    %1345 = vmatprep.subr.mxu0 0.0
    %1346 = vmatpush1.xpose.msra.mxu0 0.0
    %1347 = vmatprep.subr.mxu0 0.0
    %1348 = vmatpush1.xpose.msra.mxu0 0.0
    %1349 = vmatprep.subr.mxu0 0.0
    %1350 = vmatpush1.xpose.msra.mxu0 0.0
    %1351 = vmatprep.subr.mxu0 0.0
    %1352 = vmatpush1.xpose.msra.mxu0 0.0
    %1353 = vmatprep.subr.mxu0 0.0
    %1354 = vmatpush1.xpose.msra.mxu0 0.0
    %1355 = vmatprep.subr.mxu0 0.0
    %1356 = vmatpush1.xpose.msra.mxu0 0.0
    %1357 = vmatprep.subr.mxu0 0.0
    %1358 = vmatpush1.xpose.msra.mxu0 0.0
    %1359 = vmatprep.mubr.f32.mxu0 0.0
    %1360 = vmatmul.mubr.f32.gmra.mrb[0].mxu0 %v1279
    %v1361 = vpop.f32.mrb[0].mxu0
    %v1362 = vadd.f32 0.0, %v1361
    %v1363 = vpop.f32.mrb[0].mxu0
    %1364 = vmatprep.mubr.f32.mxu0 0.0
    %1365 = vmatmul.mubr.f32.gmra.mrb[0].mxu0 %v1281
    %v1366 = vpop.f32.mrb[0].mxu0
    %v1367 = vadd.f32 0.0, %v1366
    %v1368 = vpop.f32.mrb[0].mxu0
    %1369 = vmatprep.mubr.f32.mxu0 0.0
    %1370 = vmatmul.mubr.f32.gmra.mrb[0].mxu0 %v1283
    %v1371 = vpop.f32.mrb[0].mxu0
    %v1372 = vadd.f32 0.0, %v1371
    %v1373 = vpop.f32.mrb[0].mxu0
    %1374 = vmatprep.mubr.f32.mxu0 0.0
    %1375 = vmatmul.mubr.f32.gmra.mrb[0].mxu0 %v1285
    %v1376 = vpop.f32.mrb[0].mxu0
    %v1377 = vadd.f32 0.0, %v1376
    %v1378 = vpop.f32.mrb[0].mxu0
    %1379 = vdwg.mxu0
    %v1380 = vmul.f32 %v1362, 0.17677669
    %v1381 = vmul.f32 %v1367, 0.17677669
    %v1382 = vmul.f32 %v1372, 0.17677669
    %v1383 = vmul.f32 %v1377, 0.17677669
    %v1384 = vadd.f32 %v1380, %v592
    %v1385 = vadd.f32 %v1381, %v593
    %v1386 = vadd.f32 %v1382, %v594
    %v1387 = vadd.f32 %v1383, %v595
    %v1388 = vsel %vm1004, %v1384, -inf
    %1389 = vmax.xlane.f32.xlu0 %v1388
    %v1390 = vpop.xlane.xlu0 %1389
    %v1391 = vsel %vm1004, %v1385, -inf
    %1392 = vmax.xlane.f32.xlu0 %v1391
    %v1393 = vpop.xlane.xlu0 %1392
    %v1394 = vsel %vm1004, %v1386, -inf
    %1395 = vmax.xlane.f32.xlu0 %v1394
    %v1396 = vpop.xlane.xlu0 %1395
    %v1397 = vsel %vm1004, %v1387, -inf
    %1398 = vmax.xlane.f32.xlu0 %v1397
    %v1399 = vpop.xlane.xlu0 %1398
    %v1400 = vsub.f32 %v1384, %v1390
    %v1401 = vsub.f32 %v1385, %v1393
    %v1402 = vsub.f32 %v1386, %v1396
    %v1403 = vsub.f32 %v1387, %v1399
    %v1404 = vmul.f32 %v1400, 1.442695
    %v1405 = vpow.pop %v1404
    %v1406 = vmul.f32 %v1401, 1.442695
    %v1407 = vpow.pop %v1406
    %v1408 = vmul.f32 %v1402, 1.442695
    %v1409 = vpow.pop %v1408
    %v1410 = vmul.f32 %v1403, 1.442695
    %v1411 = vpow.pop %v1410
    %v1412 = vsel %vm1004, %v1405, 0.0
    %1413 = vadd.xlane.f32.xlu0 %v1412
    %v1414 = vpop.xlane.xlu0 %1413
    %v1415 = vsel %vm1004, %v1407, 0.0
    %1416 = vadd.xlane.f32.xlu0 %v1415
    %v1417 = vpop.xlane.xlu0 %1416
    %v1418 = vsel %vm1004, %v1409, 0.0
    %1419 = vadd.xlane.f32.xlu0 %v1418
    %v1420 = vpop.xlane.xlu0 %1419
    %v1421 = vsel %vm1004, %v1411, 0.0
    %1422 = vadd.xlane.f32.xlu0 %v1421
    %v1423 = vpop.xlane.xlu0 %1422
    %v1424 = vrcp.pop %v1414
    %v1425 = vrcp.pop %v1417
    %v1426 = vrcp.pop %v1420
    %v1427 = vrcp.pop %v1423
    %v1428 = vmul.f32 %v1405, %v1424
    %v1429 = vmul.f32 %v1407, %v1425
    %v1430 = vmul.f32 %v1409, %v1426
    %v1431 = vmul.f32 %v1411, %v1427
    %1436 = vrot.lane.b32.xlu0 %v990, 96
    %v1437 = vpop.permute.xlu0 %1436
    %1438 = vrot.lane.b32.xlu0 %v993, 96
    %v1439 = vpop.permute.xlu0 %1438
    %1440 = vrot.lane.b32.xlu0 %v998, 96
    %v1441 = vpop.permute.xlu0 %1440
    %1442 = vrot.lane.b32.xlu0 %v1001, 96
    %v1443 = vpop.permute.xlu0 %1442
    %v1449 = vsel %vm1004, %v1428, 0
    %v1452 = vsel %vm1004, %v1429, 0
    %v1455 = vsel %vm1004, %v1430, 0
    %v1458 = vsel %vm1004, %v1431, 0
    %1460 = vmatprep.subr.mxu0 0.0
    %1461 = vmatpush1.msra.mxu0 %v1437
    %1462 = vmatprep.subr.mxu0 0.0
    %1463 = vmatpush1.msra.mxu0 %v1439
    %1464 = vmatprep.subr.mxu0 0.0
    %1465 = vmatpush1.msra.mxu0 %v1441
    %1466 = vmatprep.subr.mxu0 0.0
    %1467 = vmatpush1.msra.mxu0 %v1443
    %1468 = vmatprep.subr.mxu0 0.0
    %1469 = vmatpush1.msra.mxu0 0.0
    %1470 = vmatprep.subr.mxu0 0.0
    %1471 = vmatpush1.msra.mxu0 0.0
    %1472 = vmatprep.subr.mxu0 0.0
    %1473 = vmatpush1.msra.mxu0 0.0
    %1474 = vmatprep.subr.mxu0 0.0
    %1475 = vmatpush1.msra.mxu0 0.0
    %1476 = vmatprep.subr.mxu0 0.0
    %1477 = vmatpush1.msra.mxu0 0.0
    %1478 = vmatprep.subr.mxu0 0.0
    %1479 = vmatpush1.msra.mxu0 0.0
    %1480 = vmatprep.subr.mxu0 0.0
    %1481 = vmatpush1.msra.mxu0 0.0
    %1482 = vmatprep.subr.mxu0 0.0
    %1483 = vmatpush1.msra.mxu0 0.0
    %1484 = vmatprep.subr.mxu0 0.0
    %1485 = vmatpush1.msra.mxu0 0.0
    %1486 = vmatprep.subr.mxu0 0.0
    %1487 = vmatpush1.msra.mxu0 0.0
    %1488 = vmatprep.subr.mxu0 0.0
    %1489 = vmatpush1.msra.mxu0 0.0
    %1490 = vmatprep.subr.mxu0 0.0
    %1491 = vmatpush1.msra.mxu0 0.0
    %1492 = vmatprep.subr.mxu0 0.0
    %1493 = vmatpush1.msra.mxu0 0.0
    %1494 = vmatprep.subr.mxu0 0.0
    %1495 = vmatpush1.msra.mxu0 0.0
    %1496 = vmatprep.subr.mxu0 0.0
    %1497 = vmatpush1.msra.mxu0 0.0
    %1498 = vmatprep.subr.mxu0 0.0
    %1499 = vmatpush1.msra.mxu0 0.0
    %1500 = vmatprep.subr.mxu0 0.0
    %1501 = vmatpush1.msra.mxu0 0.0
    %1502 = vmatprep.subr.mxu0 0.0
    %1503 = vmatpush1.msra.mxu0 0.0
    %1504 = vmatprep.subr.mxu0 0.0
    %1505 = vmatpush1.msra.mxu0 0.0
    %1506 = vmatprep.subr.mxu0 0.0
    %1507 = vmatpush1.msra.mxu0 0.0
    %1508 = vmatprep.subr.mxu0 0.0
    %1509 = vmatpush1.msra.mxu0 0.0
    %1510 = vmatprep.subr.mxu0 0.0
    %1511 = vmatpush1.msra.mxu0 0.0
    %1512 = vmatprep.subr.mxu0 0.0
    %1513 = vmatpush1.msra.mxu0 0.0
    %1514 = vmatprep.subr.mxu0 0.0
    %1515 = vmatpush1.msra.mxu0 0.0
    %1516 = vmatprep.subr.mxu0 0.0
    %1517 = vmatpush1.msra.mxu0 0.0
    %1518 = vmatprep.subr.mxu0 0.0
    %1519 = vmatpush1.msra.mxu0 0.0
    %1520 = vmatprep.subr.mxu0 0.0
    %1521 = vmatpush1.msra.mxu0 0.0
    %1522 = vmatprep.subr.mxu0 0.0
    %1523 = vmatpush1.msra.mxu0 0.0
    %1524 = vmatprep.mubr.f32.mxu0 0.0
    %1525 = vmatmul.mubr.f32.gmra.mrb[0].mxu0 %v1449
    %v1526 = vpop.f32.mrb[0].mxu0
    %v1527 = vadd.f32 0.0, %v1526
    %v1528 = vpop.f32.mrb[0].mxu0
    %1529 = vmatprep.mubr.f32.mxu0 0.0
    %1530 = vmatmul.mubr.f32.gmra.mrb[0].mxu0 %v1452
    %v1531 = vpop.f32.mrb[0].mxu0
    %v1532 = vadd.f32 0.0, %v1531
    %v1533 = vpop.f32.mrb[0].mxu0
    %1534 = vmatprep.mubr.f32.mxu0 0.0
    %1535 = vmatmul.mubr.f32.gmra.mrb[0].mxu0 %v1455
    %v1536 = vpop.f32.mrb[0].mxu0
    %v1537 = vadd.f32 0.0, %v1536
    %v1538 = vpop.f32.mrb[0].mxu0
    %1539 = vmatprep.mubr.f32.mxu0 0.0
    %1540 = vmatmul.mubr.f32.gmra.mrb[0].mxu0 %v1458
    %v1541 = vpop.f32.mrb[0].mxu0
    %v1542 = vadd.f32 0.0, %v1541
    %v1543 = vpop.f32.mrb[0].mxu0
    %1544 = vdwg.mxu0
    %1545 = vrot.lane.b32.xlu0 %v764, 64
    %v1546 = vpop.permute.xlu0 %1545
    %1547 = vrot.lane.b32.xlu0 %v767, 64
    %v1548 = vpop.permute.xlu0 %1547
    %1549 = vrot.lane.b32.xlu0 %v772, 64
    %v1550 = vpop.permute.xlu0 %1549
    %1551 = vrot.lane.b32.xlu0 %v775, 64
    %v1552 = vpop.permute.xlu0 %1551
    %1553 = vrot.lane.b32.xlu0 %v877, 64
    %v1554 = vpop.permute.xlu0 %1553
    %1555 = vrot.lane.b32.xlu0 %v880, 64
    %v1556 = vpop.permute.xlu0 %1555
    %1557 = vrot.lane.b32.xlu0 %v885, 64
    %v1558 = vpop.permute.xlu0 %1557
    %1559 = vrot.lane.b32.xlu0 %v888, 64
    %v1560 = vpop.permute.xlu0 %1559
    %v1561 = vsel %vm1004, %v1546, 0
    %v1563 = vsel %vm1004, %v1548, 0
    %v1565 = vsel %vm1004, %v1550, 0
    %v1567 = vsel %vm1004, %v1552, 0
    %v1569 = vsel %vm1004, %v1554, 0
    %v1571 = vsel %vm1004, %v1556, 0
    %v1573 = vsel %vm1004, %v1558, 0
    %v1575 = vsel %vm1004, %v1560, 0
    %1577 = vmatprep.subr.mxu0 0.0
    %1578 = vmatpush1.xpose.msra.mxu0 %v1569
    %1579 = vmatprep.subr.mxu0 0.0
    %1580 = vmatpush1.xpose.msra.mxu0 %v1571
    %1581 = vmatprep.subr.mxu0 0.0
    %1582 = vmatpush1.xpose.msra.mxu0 %v1573
    %1583 = vmatprep.subr.mxu0 0.0
    %1584 = vmatpush1.xpose.msra.mxu0 %v1575
    %1585 = vmatprep.subr.mxu0 0.0
    %1586 = vmatpush1.xpose.msra.mxu0 0.0
    %1587 = vmatprep.subr.mxu0 0.0
    %1588 = vmatpush1.xpose.msra.mxu0 0.0
    %1589 = vmatprep.subr.mxu0 0.0
    %1590 = vmatpush1.xpose.msra.mxu0 0.0
    %1591 = vmatprep.subr.mxu0 0.0
    %1592 = vmatpush1.xpose.msra.mxu0 0.0
    %1593 = vmatprep.subr.mxu0 0.0
    %1594 = vmatpush1.xpose.msra.mxu0 0.0
    %1595 = vmatprep.subr.mxu0 0.0
    %1596 = vmatpush1.xpose.msra.mxu0 0.0
    %1597 = vmatprep.subr.mxu0 0.0
    %1598 = vmatpush1.xpose.msra.mxu0 0.0
    %1599 = vmatprep.subr.mxu0 0.0
    %1600 = vmatpush1.xpose.msra.mxu0 0.0
    %1601 = vmatprep.subr.mxu0 0.0
    %1602 = vmatpush1.xpose.msra.mxu0 0.0
    %1603 = vmatprep.subr.mxu0 0.0
    %1604 = vmatpush1.xpose.msra.mxu0 0.0
    %1605 = vmatprep.subr.mxu0 0.0
    %1606 = vmatpush1.xpose.msra.mxu0 0.0
    %1607 = vmatprep.subr.mxu0 0.0
    %1608 = vmatpush1.xpose.msra.mxu0 0.0
    %1609 = vmatprep.subr.mxu0 0.0
    %1610 = vmatpush1.xpose.msra.mxu0 0.0
    %1611 = vmatprep.subr.mxu0 0.0
    %1612 = vmatpush1.xpose.msra.mxu0 0.0
    %1613 = vmatprep.subr.mxu0 0.0
    %1614 = vmatpush1.xpose.msra.mxu0 0.0
    %1615 = vmatprep.subr.mxu0 0.0
    %1616 = vmatpush1.xpose.msra.mxu0 0.0
    %1617 = vmatprep.subr.mxu0 0.0
    %1618 = vmatpush1.xpose.msra.mxu0 0.0
    %1619 = vmatprep.subr.mxu0 0.0
    %1620 = vmatpush1.xpose.msra.mxu0 0.0
    %1621 = vmatprep.subr.mxu0 0.0
    %1622 = vmatpush1.xpose.msra.mxu0 0.0
    %1623 = vmatprep.subr.mxu0 0.0
    %1624 = vmatpush1.xpose.msra.mxu0 0.0
    %1625 = vmatprep.subr.mxu0 0.0
    %1626 = vmatpush1.xpose.msra.mxu0 0.0
    %1627 = vmatprep.subr.mxu0 0.0
    %1628 = vmatpush1.xpose.msra.mxu0 0.0
    %1629 = vmatprep.subr.mxu0 0.0
    %1630 = vmatpush1.xpose.msra.mxu0 0.0
    %1631 = vmatprep.subr.mxu0 0.0
    %1632 = vmatpush1.xpose.msra.mxu0 0.0
    %1633 = vmatprep.subr.mxu0 0.0
    %1634 = vmatpush1.xpose.msra.mxu0 0.0
    %1635 = vmatprep.subr.mxu0 0.0
    %1636 = vmatpush1.xpose.msra.mxu0 0.0
    %1637 = vmatprep.subr.mxu0 0.0
    %1638 = vmatpush1.xpose.msra.mxu0 0.0
    %1639 = vmatprep.subr.mxu0 0.0
    %1640 = vmatpush1.xpose.msra.mxu0 0.0
    %1641 = vmatprep.mubr.f32.mxu0 0.0
    %1642 = vmatmul.mubr.f32.gmra.mrb[0].mxu0 %v1561
    %v1643 = vpop.f32.mrb[0].mxu0
    %v1644 = vadd.f32 0.0, %v1643
    %v1645 = vpop.f32.mrb[0].mxu0
    %1646 = vmatprep.mubr.f32.mxu0 0.0
    %1647 = vmatmul.mubr.f32.gmra.mrb[0].mxu0 %v1563
    %v1648 = vpop.f32.mrb[0].mxu0
    %v1649 = vadd.f32 0.0, %v1648
    %v1650 = vpop.f32.mrb[0].mxu0
    %1651 = vmatprep.mubr.f32.mxu0 0.0
    %1652 = vmatmul.mubr.f32.gmra.mrb[0].mxu0 %v1565
    %v1653 = vpop.f32.mrb[0].mxu0
    %v1654 = vadd.f32 0.0, %v1653
    %v1655 = vpop.f32.mrb[0].mxu0
    %1656 = vmatprep.mubr.f32.mxu0 0.0
    %1657 = vmatmul.mubr.f32.gmra.mrb[0].mxu0 %v1567
    %v1658 = vpop.f32.mrb[0].mxu0
    %v1659 = vadd.f32 0.0, %v1658
    %v1660 = vpop.f32.mrb[0].mxu0
    %1661 = vdwg.mxu0
    %v1662 = vmul.f32 %v1644, 0.17677669
    %v1663 = vmul.f32 %v1649, 0.17677669
    %v1664 = vmul.f32 %v1654, 0.17677669
    %v1665 = vmul.f32 %v1659, 0.17677669
    %v1666 = vadd.f32 %v1662, %v592
    %v1667 = vadd.f32 %v1663, %v593
    %v1668 = vadd.f32 %v1664, %v594
    %v1669 = vadd.f32 %v1665, %v595
    %v1670 = vsel %vm1004, %v1666, -inf
    %1671 = vmax.xlane.f32.xlu0 %v1670
    %v1672 = vpop.xlane.xlu0 %1671
    %v1673 = vsel %vm1004, %v1667, -inf
    %1674 = vmax.xlane.f32.xlu0 %v1673
    %v1675 = vpop.xlane.xlu0 %1674
    %v1676 = vsel %vm1004, %v1668, -inf
    %1677 = vmax.xlane.f32.xlu0 %v1676
    %v1678 = vpop.xlane.xlu0 %1677
    %v1679 = vsel %vm1004, %v1669, -inf
    %1680 = vmax.xlane.f32.xlu0 %v1679
    %v1681 = vpop.xlane.xlu0 %1680
    %v1682 = vsub.f32 %v1666, %v1672
    %v1683 = vsub.f32 %v1667, %v1675
    %v1684 = vsub.f32 %v1668, %v1678
    %v1685 = vsub.f32 %v1669, %v1681
    %v1686 = vmul.f32 %v1682, 1.442695
    %v1687 = vpow.pop %v1686
    %v1688 = vmul.f32 %v1683, 1.442695
    %v1689 = vpow.pop %v1688
    %v1690 = vmul.f32 %v1684, 1.442695
    %v1691 = vpow.pop %v1690
    %v1692 = vmul.f32 %v1685, 1.442695
    %v1693 = vpow.pop %v1692
    %v1694 = vsel %vm1004, %v1687, 0.0
    %1695 = vadd.xlane.f32.xlu0 %v1694
    %v1696 = vpop.xlane.xlu0 %1695
    %v1697 = vsel %vm1004, %v1689, 0.0
    %1698 = vadd.xlane.f32.xlu0 %v1697
    %v1699 = vpop.xlane.xlu0 %1698
    %v1700 = vsel %vm1004, %v1691, 0.0
    %1701 = vadd.xlane.f32.xlu0 %v1700
    %v1702 = vpop.xlane.xlu0 %1701
    %v1703 = vsel %vm1004, %v1693, 0.0
    %1704 = vadd.xlane.f32.xlu0 %v1703
    %v1705 = vpop.xlane.xlu0 %1704
    %v1706 = vrcp.pop %v1696
    %v1707 = vrcp.pop %v1699
    %v1708 = vrcp.pop %v1702
    %v1709 = vrcp.pop %v1705
    %v1710 = vmul.f32 %v1687, %v1706
    %v1711 = vmul.f32 %v1689, %v1707
    %v1712 = vmul.f32 %v1691, %v1708
    %v1713 = vmul.f32 %v1693, %v1709
    %1714 = vrot.lane.b32.xlu0 %v990, 64
    %v1715 = vpop.permute.xlu0 %1714
    %1716 = vrot.lane.b32.xlu0 %v993, 64
    %v1717 = vpop.permute.xlu0 %1716
    %1718 = vrot.lane.b32.xlu0 %v998, 64
    %v1719 = vpop.permute.xlu0 %1718
    %1720 = vrot.lane.b32.xlu0 %v1001, 64
    %v1721 = vpop.permute.xlu0 %1720
    %v1727 = vsel %vm1004, %v1710, 0
    %v1730 = vsel %vm1004, %v1711, 0
    %v1733 = vsel %vm1004, %v1712, 0
    %v1736 = vsel %vm1004, %v1713, 0
    %1738 = vmatprep.subr.mxu0 0.0
    %1739 = vmatpush1.msra.mxu0 %v1715
    %1740 = vmatprep.subr.mxu0 0.0
    %1741 = vmatpush1.msra.mxu0 %v1717
    %1742 = vmatprep.subr.mxu0 0.0
    %1743 = vmatpush1.msra.mxu0 %v1719
    %1744 = vmatprep.subr.mxu0 0.0
    %1745 = vmatpush1.msra.mxu0 %v1721
    %1746 = vmatprep.subr.mxu0 0.0
    %1747 = vmatpush1.msra.mxu0 0.0
    %1748 = vmatprep.subr.mxu0 0.0
    %1749 = vmatpush1.msra.mxu0 0.0
    %1750 = vmatprep.subr.mxu0 0.0
    %1751 = vmatpush1.msra.mxu0 0.0
    %1752 = vmatprep.subr.mxu0 0.0
    %1753 = vmatpush1.msra.mxu0 0.0
    %1754 = vmatprep.subr.mxu0 0.0
    %1755 = vmatpush1.msra.mxu0 0.0
    %1756 = vmatprep.subr.mxu0 0.0
    %1757 = vmatpush1.msra.mxu0 0.0
    %1758 = vmatprep.subr.mxu0 0.0
    %1759 = vmatpush1.msra.mxu0 0.0
    %1760 = vmatprep.subr.mxu0 0.0
    %1761 = vmatpush1.msra.mxu0 0.0
    %1762 = vmatprep.subr.mxu0 0.0
    %1763 = vmatpush1.msra.mxu0 0.0
    %1764 = vmatprep.subr.mxu0 0.0
    %1765 = vmatpush1.msra.mxu0 0.0
    %1766 = vmatprep.subr.mxu0 0.0
    %1767 = vmatpush1.msra.mxu0 0.0
    %1768 = vmatprep.subr.mxu0 0.0
    %1769 = vmatpush1.msra.mxu0 0.0
    %1770 = vmatprep.subr.mxu0 0.0
    %1771 = vmatpush1.msra.mxu0 0.0
    %1772 = vmatprep.subr.mxu0 0.0
    %1773 = vmatpush1.msra.mxu0 0.0
    %1774 = vmatprep.subr.mxu0 0.0
    %1775 = vmatpush1.msra.mxu0 0.0
    %1776 = vmatprep.subr.mxu0 0.0
    %1777 = vmatpush1.msra.mxu0 0.0
    %1778 = vmatprep.subr.mxu0 0.0
    %1779 = vmatpush1.msra.mxu0 0.0
    %1780 = vmatprep.subr.mxu0 0.0
    %1781 = vmatpush1.msra.mxu0 0.0
    %1782 = vmatprep.subr.mxu0 0.0
    %1783 = vmatpush1.msra.mxu0 0.0
    %1784 = vmatprep.subr.mxu0 0.0
    %1785 = vmatpush1.msra.mxu0 0.0
    %1786 = vmatprep.subr.mxu0 0.0
    %1787 = vmatpush1.msra.mxu0 0.0
    %1788 = vmatprep.subr.mxu0 0.0
    %1789 = vmatpush1.msra.mxu0 0.0
    %1790 = vmatprep.subr.mxu0 0.0
    %1791 = vmatpush1.msra.mxu0 0.0
    %1792 = vmatprep.subr.mxu0 0.0
    %1793 = vmatpush1.msra.mxu0 0.0
    %1794 = vmatprep.subr.mxu0 0.0
    %1795 = vmatpush1.msra.mxu0 0.0
    %1796 = vmatprep.subr.mxu0 0.0
    %1797 = vmatpush1.msra.mxu0 0.0
    %1798 = vmatprep.subr.mxu0 0.0
    %1799 = vmatpush1.msra.mxu0 0.0
    %1800 = vmatprep.subr.mxu0 0.0
    %1801 = vmatpush1.msra.mxu0 0.0
    %1802 = vmatprep.mubr.f32.mxu0 0.0
    %1803 = vmatmul.mubr.f32.gmra.mrb[0].mxu0 %v1727
    %v1804 = vpop.f32.mrb[0].mxu0
    %v1805 = vadd.f32 0.0, %v1804
    %v1806 = vpop.f32.mrb[0].mxu0
    %1807 = vmatprep.mubr.f32.mxu0 0.0
    %1808 = vmatmul.mubr.f32.gmra.mrb[0].mxu0 %v1730
    %v1809 = vpop.f32.mrb[0].mxu0
    %v1810 = vadd.f32 0.0, %v1809
    %v1811 = vpop.f32.mrb[0].mxu0
    %1812 = vmatprep.mubr.f32.mxu0 0.0
    %1813 = vmatmul.mubr.f32.gmra.mrb[0].mxu0 %v1733
    %v1814 = vpop.f32.mrb[0].mxu0
    %v1815 = vadd.f32 0.0, %v1814
    %v1816 = vpop.f32.mrb[0].mxu0
    %1817 = vmatprep.mubr.f32.mxu0 0.0
    %1818 = vmatmul.mubr.f32.gmra.mrb[0].mxu0 %v1736
    %v1819 = vpop.f32.mrb[0].mxu0
    %v1820 = vadd.f32 0.0, %v1819
    %v1821 = vpop.f32.mrb[0].mxu0
    %1822 = vdwg.mxu0
    %1823 = vrot.lane.b32.xlu0 %v764, 32
    %v1824 = vpop.permute.xlu0 %1823
    %1825 = vrot.lane.b32.xlu0 %v767, 32
    %v1826 = vpop.permute.xlu0 %1825
    %1827 = vrot.lane.b32.xlu0 %v772, 32
    %v1828 = vpop.permute.xlu0 %1827
    %1829 = vrot.lane.b32.xlu0 %v775, 32
    %v1830 = vpop.permute.xlu0 %1829
    %1831 = vrot.lane.b32.xlu0 %v877, 32
    %v1832 = vpop.permute.xlu0 %1831
    %1833 = vrot.lane.b32.xlu0 %v880, 32
    %v1834 = vpop.permute.xlu0 %1833
    %1835 = vrot.lane.b32.xlu0 %v885, 32
    %v1836 = vpop.permute.xlu0 %1835
    %1837 = vrot.lane.b32.xlu0 %v888, 32
    %v1838 = vpop.permute.xlu0 %1837
    %v1839 = vsel %vm1004, %v1824, 0
    %v1841 = vsel %vm1004, %v1826, 0
    %v1843 = vsel %vm1004, %v1828, 0
    %v1845 = vsel %vm1004, %v1830, 0
    %v1847 = vsel %vm1004, %v1832, 0
    %v1849 = vsel %vm1004, %v1834, 0
    %v1851 = vsel %vm1004, %v1836, 0
    %v1853 = vsel %vm1004, %v1838, 0
    %1855 = vmatprep.subr.mxu0 0.0
    %1856 = vmatpush1.xpose.msra.mxu0 %v1847
    %1857 = vmatprep.subr.mxu0 0.0
    %1858 = vmatpush1.xpose.msra.mxu0 %v1849
    %1859 = vmatprep.subr.mxu0 0.0
    %1860 = vmatpush1.xpose.msra.mxu0 %v1851
    %1861 = vmatprep.subr.mxu0 0.0
    %1862 = vmatpush1.xpose.msra.mxu0 %v1853
    %1863 = vmatprep.subr.mxu0 0.0
    %1864 = vmatpush1.xpose.msra.mxu0 0.0
    %1865 = vmatprep.subr.mxu0 0.0
    %1866 = vmatpush1.xpose.msra.mxu0 0.0
    %1867 = vmatprep.subr.mxu0 0.0
    %1868 = vmatpush1.xpose.msra.mxu0 0.0
    %1869 = vmatprep.subr.mxu0 0.0
    %1870 = vmatpush1.xpose.msra.mxu0 0.0
    %1871 = vmatprep.subr.mxu0 0.0
    %1872 = vmatpush1.xpose.msra.mxu0 0.0
    %1873 = vmatprep.subr.mxu0 0.0
    %1874 = vmatpush1.xpose.msra.mxu0 0.0
    %1875 = vmatprep.subr.mxu0 0.0
    %1876 = vmatpush1.xpose.msra.mxu0 0.0
    %1877 = vmatprep.subr.mxu0 0.0
    %1878 = vmatpush1.xpose.msra.mxu0 0.0
    %1879 = vmatprep.subr.mxu0 0.0
    %1880 = vmatpush1.xpose.msra.mxu0 0.0
    %1881 = vmatprep.subr.mxu0 0.0
    %1882 = vmatpush1.xpose.msra.mxu0 0.0
    %1883 = vmatprep.subr.mxu0 0.0
    %1884 = vmatpush1.xpose.msra.mxu0 0.0
    %1885 = vmatprep.subr.mxu0 0.0
    %1886 = vmatpush1.xpose.msra.mxu0 0.0
    %1887 = vmatprep.subr.mxu0 0.0
    %1888 = vmatpush1.xpose.msra.mxu0 0.0
    %1889 = vmatprep.subr.mxu0 0.0
    %1890 = vmatpush1.xpose.msra.mxu0 0.0
    %1891 = vmatprep.subr.mxu0 0.0
    %1892 = vmatpush1.xpose.msra.mxu0 0.0
    %1893 = vmatprep.subr.mxu0 0.0
    %1894 = vmatpush1.xpose.msra.mxu0 0.0
    %1895 = vmatprep.subr.mxu0 0.0
    %1896 = vmatpush1.xpose.msra.mxu0 0.0
    %1897 = vmatprep.subr.mxu0 0.0
    %1898 = vmatpush1.xpose.msra.mxu0 0.0
    %1899 = vmatprep.subr.mxu0 0.0
    %1900 = vmatpush1.xpose.msra.mxu0 0.0
    %1901 = vmatprep.subr.mxu0 0.0
    %1902 = vmatpush1.xpose.msra.mxu0 0.0
    %1903 = vmatprep.subr.mxu0 0.0
    %1904 = vmatpush1.xpose.msra.mxu0 0.0
    %1905 = vmatprep.subr.mxu0 0.0
    %1906 = vmatpush1.xpose.msra.mxu0 0.0
    %1907 = vmatprep.subr.mxu0 0.0
    %1908 = vmatpush1.xpose.msra.mxu0 0.0
    %1909 = vmatprep.subr.mxu0 0.0
    %1910 = vmatpush1.xpose.msra.mxu0 0.0
    %1911 = vmatprep.subr.mxu0 0.0
    %1912 = vmatpush1.xpose.msra.mxu0 0.0
    %1913 = vmatprep.subr.mxu0 0.0
    %1914 = vmatpush1.xpose.msra.mxu0 0.0
    %1915 = vmatprep.subr.mxu0 0.0
    %1916 = vmatpush1.xpose.msra.mxu0 0.0
    %1917 = vmatprep.subr.mxu0 0.0
    %1918 = vmatpush1.xpose.msra.mxu0 0.0
    %1919 = vmatprep.mubr.f32.mxu0 0.0
    %1920 = vmatmul.mubr.f32.gmra.mrb[0].mxu0 %v1839
    %v1921 = vpop.f32.mrb[0].mxu0
    %v1922 = vadd.f32 0.0, %v1921
    %v1923 = vpop.f32.mrb[0].mxu0
    %1924 = vmatprep.mubr.f32.mxu0 0.0
    %1925 = vmatmul.mubr.f32.gmra.mrb[0].mxu0 %v1841
    %v1926 = vpop.f32.mrb[0].mxu0
    %v1927 = vadd.f32 0.0, %v1926
    %v1928 = vpop.f32.mrb[0].mxu0
    %1929 = vmatprep.mubr.f32.mxu0 0.0
    %1930 = vmatmul.mubr.f32.gmra.mrb[0].mxu0 %v1843
    %v1931 = vpop.f32.mrb[0].mxu0
    %v1932 = vadd.f32 0.0, %v1931
    %v1933 = vpop.f32.mrb[0].mxu0
    %1934 = vmatprep.mubr.f32.mxu0 0.0
    %1935 = vmatmul.mubr.f32.gmra.mrb[0].mxu0 %v1845
    %v1936 = vpop.f32.mrb[0].mxu0
    %v1937 = vadd.f32 0.0, %v1936
    %v1938 = vpop.f32.mrb[0].mxu0
    %1939 = vdwg.mxu0
    %v1940 = vmul.f32 %v1922, 0.17677669
    %v1941 = vmul.f32 %v1927, 0.17677669
    %v1942 = vmul.f32 %v1932, 0.17677669
    %v1943 = vmul.f32 %v1937, 0.17677669
    %v1944 = vadd.f32 %v1940, %v592
    %v1945 = vadd.f32 %v1941, %v593
    %v1946 = vadd.f32 %v1942, %v594
    %v1947 = vadd.f32 %v1943, %v595
    %v1948 = vsel %vm1004, %v1944, -inf
    %1949 = vmax.xlane.f32.xlu0 %v1948
    %v1950 = vpop.xlane.xlu0 %1949
    %v1951 = vsel %vm1004, %v1945, -inf
    %1952 = vmax.xlane.f32.xlu0 %v1951
    %v1953 = vpop.xlane.xlu0 %1952
    %v1954 = vsel %vm1004, %v1946, -inf
    %1955 = vmax.xlane.f32.xlu0 %v1954
    %v1956 = vpop.xlane.xlu0 %1955
    %v1957 = vsel %vm1004, %v1947, -inf
    %1958 = vmax.xlane.f32.xlu0 %v1957
    %v1959 = vpop.xlane.xlu0 %1958
    %v1960 = vsub.f32 %v1944, %v1950
    %v1961 = vsub.f32 %v1945, %v1953
    %v1962 = vsub.f32 %v1946, %v1956
    %v1963 = vsub.f32 %v1947, %v1959
    %v1964 = vmul.f32 %v1960, 1.442695
    %v1965 = vpow.pop %v1964
    %v1966 = vmul.f32 %v1961, 1.442695
    %v1967 = vpow.pop %v1966
    %v1968 = vmul.f32 %v1962, 1.442695
    %v1969 = vpow.pop %v1968
    %v1970 = vmul.f32 %v1963, 1.442695
    %v1971 = vpow.pop %v1970
    %v1972 = vsel %vm1004, %v1965, 0.0
    %1973 = vadd.xlane.f32.xlu0 %v1972
    %v1974 = vpop.xlane.xlu0 %1973
    %v1975 = vsel %vm1004, %v1967, 0.0
    %1976 = vadd.xlane.f32.xlu0 %v1975
    %v1977 = vpop.xlane.xlu0 %1976
    %v1978 = vsel %vm1004, %v1969, 0.0
    %1979 = vadd.xlane.f32.xlu0 %v1978
    %v1980 = vpop.xlane.xlu0 %1979
    %v1981 = vsel %vm1004, %v1971, 0.0
    %1982 = vadd.xlane.f32.xlu0 %v1981
    %v1983 = vpop.xlane.xlu0 %1982
    %v1984 = vrcp.pop %v1974
    %v1985 = vrcp.pop %v1977
    %v1986 = vrcp.pop %v1980
    %v1987 = vrcp.pop %v1983
    %v1988 = vmul.f32 %v1965, %v1984
    %v1989 = vmul.f32 %v1967, %v1985
    %v1990 = vmul.f32 %v1969, %v1986
    %v1991 = vmul.f32 %v1971, %v1987
    %1992 = vrot.lane.b32.xlu0 %v990, 32
    %v1993 = vpop.permute.xlu0 %1992
    %1994 = vrot.lane.b32.xlu0 %v993, 32
    %v1995 = vpop.permute.xlu0 %1994
    %1996 = vrot.lane.b32.xlu0 %v998, 32
    %v1997 = vpop.permute.xlu0 %1996
    %1998 = vrot.lane.b32.xlu0 %v1001, 32
    %v1999 = vpop.permute.xlu0 %1998
    %v2005 = vsel %vm1004, %v1988, 0
    %v2008 = vsel %vm1004, %v1989, 0
    %v2011 = vsel %vm1004, %v1990, 0
    %v2014 = vsel %vm1004, %v1991, 0
    %2016 = vmatprep.subr.mxu0 0.0
    %2017 = vmatpush1.msra.mxu0 %v1993
    %2018 = vmatprep.subr.mxu0 0.0
    %2019 = vmatpush1.msra.mxu0 %v1995
    %2020 = vmatprep.subr.mxu0 0.0
    %2021 = vmatpush1.msra.mxu0 %v1997
    %2022 = vmatprep.subr.mxu0 0.0
    %2023 = vmatpush1.msra.mxu0 %v1999
    %2024 = vmatprep.subr.mxu0 0.0
    %2025 = vmatpush1.msra.mxu0 0.0
    %2026 = vmatprep.subr.mxu0 0.0
    %2027 = vmatpush1.msra.mxu0 0.0
    %2028 = vmatprep.subr.mxu0 0.0
    %2029 = vmatpush1.msra.mxu0 0.0
    %2030 = vmatprep.subr.mxu0 0.0
    %2031 = vmatpush1.msra.mxu0 0.0
    %2032 = vmatprep.subr.mxu0 0.0
    %2033 = vmatpush1.msra.mxu0 0.0
    %2034 = vmatprep.subr.mxu0 0.0
    %2035 = vmatpush1.msra.mxu0 0.0
    %2036 = vmatprep.subr.mxu0 0.0
    %2037 = vmatpush1.msra.mxu0 0.0
    %2038 = vmatprep.subr.mxu0 0.0
    %2039 = vmatpush1.msra.mxu0 0.0
    %2040 = vmatprep.subr.mxu0 0.0
    %2041 = vmatpush1.msra.mxu0 0.0
    %2042 = vmatprep.subr.mxu0 0.0
    %2043 = vmatpush1.msra.mxu0 0.0
    %2044 = vmatprep.subr.mxu0 0.0
    %2045 = vmatpush1.msra.mxu0 0.0
    %2046 = vmatprep.subr.mxu0 0.0
    %2047 = vmatpush1.msra.mxu0 0.0
    %2048 = vmatprep.subr.mxu0 0.0
    %2049 = vmatpush1.msra.mxu0 0.0
    %2050 = vmatprep.subr.mxu0 0.0
    %2051 = vmatpush1.msra.mxu0 0.0
    %2052 = vmatprep.subr.mxu0 0.0
    %2053 = vmatpush1.msra.mxu0 0.0
    %2054 = vmatprep.subr.mxu0 0.0
    %2055 = vmatpush1.msra.mxu0 0.0
    %2056 = vmatprep.subr.mxu0 0.0
    %2057 = vmatpush1.msra.mxu0 0.0
    %2058 = vmatprep.subr.mxu0 0.0
    %2059 = vmatpush1.msra.mxu0 0.0
    %2060 = vmatprep.subr.mxu0 0.0
    %2061 = vmatpush1.msra.mxu0 0.0
    %2062 = vmatprep.subr.mxu0 0.0
    %2063 = vmatpush1.msra.mxu0 0.0
    %2064 = vmatprep.subr.mxu0 0.0
    %2065 = vmatpush1.msra.mxu0 0.0
    %2066 = vmatprep.subr.mxu0 0.0
    %2067 = vmatpush1.msra.mxu0 0.0
    %2068 = vmatprep.subr.mxu0 0.0
    %2069 = vmatpush1.msra.mxu0 0.0
    %2070 = vmatprep.subr.mxu0 0.0
    %2071 = vmatpush1.msra.mxu0 0.0
    %2072 = vmatprep.subr.mxu0 0.0
    %2073 = vmatpush1.msra.mxu0 0.0
    %2074 = vmatprep.subr.mxu0 0.0
    %2075 = vmatpush1.msra.mxu0 0.0
    %2076 = vmatprep.subr.mxu0 0.0
    %2077 = vmatpush1.msra.mxu0 0.0
    %2078 = vmatprep.subr.mxu0 0.0
    %2079 = vmatpush1.msra.mxu0 0.0
    %2080 = vmatprep.mubr.f32.mxu0 0.0
    %2081 = vmatmul.mubr.f32.gmra.mrb[0].mxu0 %v2005
    %v2082 = vpop.f32.mrb[0].mxu0
    %v2083 = vadd.f32 0.0, %v2082
    %v2084 = vpop.f32.mrb[0].mxu0
    %2085 = vmatprep.mubr.f32.mxu0 0.0
    %2086 = vmatmul.mubr.f32.gmra.mrb[0].mxu0 %v2008
    %v2087 = vpop.f32.mrb[0].mxu0
    %v2088 = vadd.f32 0.0, %v2087
    %v2089 = vpop.f32.mrb[0].mxu0
    %2090 = vmatprep.mubr.f32.mxu0 0.0
    %2091 = vmatmul.mubr.f32.gmra.mrb[0].mxu0 %v2011
    %v2092 = vpop.f32.mrb[0].mxu0
    %v2093 = vadd.f32 0.0, %v2092
    %v2094 = vpop.f32.mrb[0].mxu0
    %2095 = vmatprep.mubr.f32.mxu0 0.0
    %2096 = vmatmul.mubr.f32.gmra.mrb[0].mxu0 %v2014
    %v2097 = vpop.f32.mrb[0].mxu0
    %v2098 = vadd.f32 0.0, %v2097
    %v2099 = vpop.f32.mrb[0].mxu0
    %2100 = vdwg.mxu0
    %2105 = vrot.lane.b32.xlu0 %v1527, 32
    %v2106 = vpop.permute.xlu0 %2105
    %2107 = vrot.lane.b32.xlu0 %v1532, 32
    %v2108 = vpop.permute.xlu0 %2107
    %2109 = vrot.lane.b32.xlu0 %v1537, 32
    %v2110 = vpop.permute.xlu0 %2109
    %2111 = vrot.lane.b32.xlu0 %v1542, 32
    %v2112 = vpop.permute.xlu0 %2111
    %2121 = vrot.lane.b32.xlu0 %v1805, 64
    %v2122 = vpop.permute.xlu0 %2121
    %2123 = vrot.lane.b32.xlu0 %v1810, 64
    %v2124 = vpop.permute.xlu0 %2123
    %2125 = vrot.lane.b32.xlu0 %v1815, 64
    %v2126 = vpop.permute.xlu0 %2125
    %2127 = vrot.lane.b32.xlu0 %v1820, 64
    %v2128 = vpop.permute.xlu0 %2127
    %2137 = vrot.lane.b32.xlu0 %v2083, 96
    %v2138 = vpop.permute.xlu0 %2137
    %2139 = vrot.lane.b32.xlu0 %v2088, 96
    %v2140 = vpop.permute.xlu0 %2139
    %2141 = vrot.lane.b32.xlu0 %v2093, 96
    %v2142 = vpop.permute.xlu0 %2141
    %2143 = vrot.lane.b32.xlu0 %v2098, 96
    %v2144 = vpop.permute.xlu0 %2143
    %v2149 = vsel %vm1004, %v1245, %v2106
    %v2150 = vsel %vm1004, %v1250, %v2108
    %v2151 = vsel %vm1004, %v1255, %v2110
    %v2152 = vsel %vm1004, %v1260, %v2112
    %vm2153 = vcmask 523264
    %v2154 = vsel %vm2153, %v2149, %v2122
    %v2155 = vsel %vm2153, %v2150, %v2124
    %v2156 = vsel %vm2153, %v2151, %v2126
    %v2157 = vsel %vm2153, %v2152, %v2128
    %vm2158 = vcmask 785408
    %v2159 = vsel %vm2158, %v2154, %v2138
    %v2160 = vsel %vm2158, %v2155, %v2140
    %v2161 = vsel %vm2158, %v2156, %v2142
    %v2162 = vsel %vm2158, %v2157, %v2144
    %v2163 = vpack.c.bf16 %v2160, %v2159
    %v2164 = vpack.c.bf16 %v2162, %v2161
    %v2165 = vld [vmem:[#allocation7] sm:$0xf]
    %v2166 = vld [vmem:[#allocation7 + $0x4] sm:$0xf]
    %v2167 = vld [vmem:[#allocation7 + $0x8] sm:$0xf]
    %v2168 = vld [vmem:[#allocation7 + $0xc] sm:$0xf]
    %v2169 = vld [vmem:[#allocation7 + $0x10] sm:$0xf]
    %v2170 = vld [vmem:[#allocation7 + $0x14] sm:$0xf]
    %v2171 = vld [vmem:[#allocation7 + $0x18] sm:$0xf]
    %v2172 = vld [vmem:[#allocation7 + $0x1c] sm:$0xf]
    %v2173 = vld [vmem:[#allocation7 + $0x20] sm:$0xf]
    %v2174 = vld [vmem:[#allocation7 + $0x24] sm:$0xf]
    %v2175 = vld [vmem:[#allocation7 + $0x28] sm:$0xf]
    %v2176 = vld [vmem:[#allocation7 + $0x2c] sm:$0xf]
    %v2177 = vld [vmem:[#allocation7 + $0x30] sm:$0xf]
    %v2178 = vld [vmem:[#allocation7 + $0x34] sm:$0xf]
    %v2179 = vld [vmem:[#allocation7 + $0x38] sm:$0xf]
    %v2180 = vld [vmem:[#allocation7 + $0x3c] sm:$0xf]
    %v2181 = vld [vmem:[%s23] sm:$0x1]
    %v2183 = vlaneseq
    %v2184 = vshrl.u32 %v2183, 7
    %v2185 = vsub.s32 0, %v2184
    %v2186 = vrot.slane %v2181, %v2185
    %v2204 = vunpack.c.l.b16 %v2165
    %v2205 = vunpack.c.l.b16 %v2166
    %v2206 = vunpack.c.l.b16 %v2167
    %v2207 = vunpack.c.l.b16 %v2168
    %v2208 = vunpack.c.l.b16 %v2169
    %v2209 = vunpack.c.l.b16 %v2170
    %v2210 = vunpack.c.l.b16 %v2171
    %v2211 = vunpack.c.l.b16 %v2172
    %v2212 = vunpack.c.l.b16 %v2173
    %v2213 = vunpack.c.l.b16 %v2174
    %v2214 = vunpack.c.l.b16 %v2175
    %v2215 = vunpack.c.l.b16 %v2176
    %v2216 = vunpack.c.l.b16 %v2177
    %v2217 = vunpack.c.l.b16 %v2178
    %v2218 = vunpack.c.l.b16 %v2179
    %v2219 = vunpack.c.l.b16 %v2180
    %v2220 = vpack.c.b16 %v2205, %v2204
    %v2221 = vpack.c.b16 %v2207, %v2206
    %v2222 = vpack.c.b16 %v2209, %v2208
    %v2223 = vpack.c.b16 %v2211, %v2210
    %v2224 = vpack.c.b16 %v2213, %v2212
    %v2225 = vpack.c.b16 %v2215, %v2214
    %v2226 = vpack.c.b16 %v2217, %v2216
    %v2227 = vpack.c.b16 %v2219, %v2218
    %2236 = vmatprep.subr.bf16.mxu0 0
    %2237 = vmatpush1.bf16.msra.mxu0 %v2220
    %2238 = vmatprep.subr.bf16.mxu0 0
    %2239 = vmatpush1.bf16.msra.mxu0 %v2221
    %2240 = vmatprep.subr.bf16.mxu0 0
    %2241 = vmatpush1.bf16.msra.mxu0 %v2222
    %2242 = vmatprep.subr.bf16.mxu0 0
    %2243 = vmatpush1.bf16.msra.mxu0 %v2223
    %2244 = vmatprep.subr.bf16.mxu0 0
    %2245 = vmatpush1.bf16.msra.mxu0 %v2224
    %2246 = vmatprep.subr.bf16.mxu0 0
    %2247 = vmatpush1.bf16.msra.mxu0 %v2225
    %2248 = vmatprep.subr.bf16.mxu0 0
    %2249 = vmatpush1.bf16.msra.mxu0 %v2226
    %2250 = vmatprep.subr.bf16.mxu0 0
    %2251 = vmatpush1.bf16.msra.mxu0 %v2227
    %2252 = vmatprep.subr.bf16.mxu0 0
    %2253 = vmatpush1.bf16.msra.mxu0 0
    %2254 = vmatprep.subr.bf16.mxu0 0
    %2255 = vmatpush1.bf16.msra.mxu0 0
    %2256 = vmatprep.subr.bf16.mxu0 0
    %2257 = vmatpush1.bf16.msra.mxu0 0
    %2258 = vmatprep.subr.bf16.mxu0 0
    %2259 = vmatpush1.bf16.msra.mxu0 0
    %2260 = vmatprep.subr.bf16.mxu0 0
    %2261 = vmatpush1.bf16.msra.mxu0 0
    %2262 = vmatprep.subr.bf16.mxu0 0
    %2263 = vmatpush1.bf16.msra.mxu0 0
    %2264 = vmatprep.subr.bf16.mxu0 0
    %2265 = vmatpush1.bf16.msra.mxu0 0
    %2266 = vmatprep.subr.bf16.mxu0 0
    %2267 = vmatpush1.bf16.msra.mxu0 0
    %2268 = vmatprep.mubr.bf16.mxu0 0
    %2269 = vmatmul.mubr.bf16.gmra.mrb[0].mxu0 %v2163
    %v2270 = vpop.f32.mrb[0].mxu0
    %v2271 = vadd.f32 %v2186, %v2270
    %v2272 = vpop.f32.mrb[0].mxu0
    %v2273 = vpop.f32.mrb[0].mxu0
    %v2274 = vadd.f32 %v2186, %v2273
    %v2275 = vpop.f32.mrb[0].mxu0
    %2276 = vmatprep.mubr.bf16.mxu0 0
    %2277 = vmatmul.mubr.bf16.gmra.mrb[0].mxu0 %v2164
    %v2278 = vpop.f32.mrb[0].mxu0
    %v2279 = vadd.f32 %v2186, %v2278
    %v2280 = vpop.f32.mrb[0].mxu0
    %v2281 = vpop.f32.mrb[0].mxu0
    %v2282 = vadd.f32 %v2186, %v2281
    %v2283 = vpop.f32.mrb[0].mxu0
    %2284 = vdwg.mxu0
    %v2285 = vadd.f32 %v574, %v2271
    %v2286 = vadd.f32 %v579, %v2274
    %v2287 = vadd.f32 %v584, %v2279
    %v2288 = vadd.f32 %v589, %v2282
    %v2289 = vld [vmem:[%s25] sm:$0x1]
    %v2290 = vld [vmem:[%s27] sm:$0x1]
    %2291 = vadd.xlane.f32.xlu0 %v2285
    %v2292 = vpop.xlane.xlu0 %2291
    %2293 = vadd.xlane.f32.xlu0 %v2286
    %v2294 = vpop.xlane.xlu0 %2293
    %2295 = vadd.xlane.f32.xlu0 %v2287
    %v2296 = vpop.xlane.xlu0 %2295
    %2297 = vadd.xlane.f32.xlu0 %v2288
    %v2298 = vpop.xlane.xlu0 %2297
    %v2299 = vmul.f32 %v2292, %v606
    %v2300 = vmul.f32 %v2294, %v606
    %v2301 = vmul.f32 %v2296, %v606
    %v2302 = vmul.f32 %v2298, %v606
    %v2303 = vsub.f32 %v2285, %v2299
    %v2304 = vsub.f32 %v2286, %v2300
    %v2305 = vsub.f32 %v2287, %v2301
    %v2306 = vsub.f32 %v2288, %v2302
    %v2307 = vmul.f32 %v2303, %v2303
    %v2308 = vmul.f32 %v2304, %v2304
    %v2309 = vmul.f32 %v2305, %v2305
    %v2310 = vmul.f32 %v2306, %v2306
    %2311 = vadd.xlane.f32.xlu0 %v2307
    %v2312 = vpop.xlane.xlu0 %2311
    %2313 = vadd.xlane.f32.xlu0 %v2308
    %v2314 = vpop.xlane.xlu0 %2313
    %2315 = vadd.xlane.f32.xlu0 %v2309
    %v2316 = vpop.xlane.xlu0 %2315
    %2317 = vadd.xlane.f32.xlu0 %v2310
    %v2318 = vpop.xlane.xlu0 %2317
    %v2319 = vmul.f32 %v2312, %v606
    %v2320 = vmul.f32 %v2314, %v606
    %v2321 = vmul.f32 %v2316, %v606
    %v2322 = vmul.f32 %v2318, %v606
    %v2323 = vadd.f32 %v2319, 1e-05
    %v2324 = vadd.f32 %v2320, 1e-05
    %v2325 = vadd.f32 %v2321, 1e-05
    %v2326 = vadd.f32 %v2322, 1e-05
    %v2327 = vrsqrt.pop %v2323
    %v2328 = vrsqrt.pop %v2324
    %v2329 = vrsqrt.pop %v2325
    %v2330 = vrsqrt.pop %v2326
    %v2331 = vmul.f32 %v2303, %v2327
    %v2332 = vmul.f32 %v2304, %v2328
    %v2333 = vmul.f32 %v2305, %v2329
    %v2334 = vmul.f32 %v2306, %v2330
    %v2336 = vlaneseq
    %v2337 = vshrl.u32 %v2336, 7
    %v2338 = vsub.s32 0, %v2337
    %v2339 = vrot.slane %v2289, %v2338
    %v2341 = vmul.f32 %v2331, %v2339
    %v2342 = vmul.f32 %v2332, %v2339
    %v2343 = vmul.f32 %v2333, %v2339
    %v2344 = vmul.f32 %v2334, %v2339
    %v2346 = vlaneseq
    %v2347 = vshrl.u32 %v2346, 7
    %v2348 = vsub.s32 0, %v2347
    %v2349 = vrot.slane %v2290, %v2348
    %v2351 = vadd.f32 %v2341, %v2349
    %v2352 = vadd.f32 %v2342, %v2349
    %v2353 = vadd.f32 %v2343, %v2349
    %v2354 = vadd.f32 %v2344, %v2349
    %v2355 = vpack.c.bf16 %v2352, %v2351
    %v2356 = vpack.c.bf16 %v2354, %v2353
    %v2357 = vld [vmem:[#allocation8] sm:$0xff]
    %v2358 = vld [vmem:[#allocation8 + $0x8] sm:$0xff]
    %v2359 = vld [vmem:[#allocation8 + $0x10] sm:$0xff]
    %v2360 = vld [vmem:[#allocation8 + $0x18] sm:$0xff]
    %v2361 = vld [vmem:[#allocation8 + $0x20] sm:$0xff]
    %v2362 = vld [vmem:[#allocation8 + $0x28] sm:$0xff]
    %v2363 = vld [vmem:[#allocation8 + $0x30] sm:$0xff]
    %v2364 = vld [vmem:[#allocation8 + $0x38] sm:$0xff]
    %v2365 = vld [vmem:[#allocation8 + $0x40] sm:$0xff]
    %v2366 = vld [vmem:[#allocation8 + $0x48] sm:$0xff]
    %v2367 = vld [vmem:[#allocation8 + $0x50] sm:$0xff]
    %v2368 = vld [vmem:[#allocation8 + $0x58] sm:$0xff]
    %v2369 = vld [vmem:[#allocation8 + $0x60] sm:$0xff]
    %v2370 = vld [vmem:[#allocation8 + $0x68] sm:$0xff]
    %v2371 = vld [vmem:[#allocation8 + $0x70] sm:$0xff]
    %v2372 = vld [vmem:[#allocation8 + $0x78] sm:$0xff]
    %v2373 = vld [vmem:[#allocation8 + $0x80] sm:$0xff]
    %v2374 = vld [vmem:[#allocation8 + $0x88] sm:$0xff]
    %v2375 = vld [vmem:[#allocation8 + $0x90] sm:$0xff]
    %v2376 = vld [vmem:[#allocation8 + $0x98] sm:$0xff]
    %v2377 = vld [vmem:[#allocation8 + $0xa0] sm:$0xff]
    %v2378 = vld [vmem:[#allocation8 + $0xa8] sm:$0xff]
    %v2379 = vld [vmem:[#allocation8 + $0xb0] sm:$0xff]
    %v2380 = vld [vmem:[#allocation8 + $0xb8] sm:$0xff]
    %v2381 = vld [vmem:[#allocation8 + $0xc0] sm:$0xff]
    %v2382 = vld [vmem:[#allocation8 + $0xc8] sm:$0xff]
    %v2383 = vld [vmem:[#allocation8 + $0xd0] sm:$0xff]
    %v2384 = vld [vmem:[#allocation8 + $0xd8] sm:$0xff]
    %v2385 = vld [vmem:[#allocation8 + $0xe0] sm:$0xff]
    %v2386 = vld [vmem:[#allocation8 + $0xe8] sm:$0xff]
    %v2387 = vld [vmem:[#allocation8 + $0xf0] sm:$0xff]
    %v2388 = vld [vmem:[#allocation8 + $0xf8] sm:$0xff]
    %v2389 = vld [vmem:[%s31] sm:$0xf]
    %v2391 = vlaneseq
    %v2392 = vshrl.u32 %v2391, 7
    %v2393 = vsub.s32 0, %v2392
    %v2394 = vrot.slane %v2389, %v2393
    %v2395 = vlaneseq
    %v2396 = vshrl.u32 %v2395, 7
    %v2397 = vsub.s32 1, %v2396
    %v2398 = vrot.slane %v2389, %v2397
    %v2399 = vlaneseq
    %v2400 = vshrl.u32 %v2399, 7
    %v2401 = vsub.s32 2, %v2400
    %v2402 = vrot.slane %v2389, %v2401
    %v2403 = vlaneseq
    %v2404 = vshrl.u32 %v2403, 7
    %v2405 = vsub.s32 3, %v2404
    %v2406 = vrot.slane %v2389, %v2405
    %v2443 = vunpack.c.l.b16 %v2357
    %v2444 = vunpack.c.h.b16 %v2357
    %v2445 = vunpack.c.l.b16 %v2358
    %v2446 = vunpack.c.h.b16 %v2358
    %v2447 = vunpack.c.l.b16 %v2359
    %v2448 = vunpack.c.h.b16 %v2359
    %v2449 = vunpack.c.l.b16 %v2360
    %v2450 = vunpack.c.h.b16 %v2360
    %v2451 = vunpack.c.l.b16 %v2361
    %v2452 = vunpack.c.h.b16 %v2361
    %v2453 = vunpack.c.l.b16 %v2362
    %v2454 = vunpack.c.h.b16 %v2362
    %v2455 = vunpack.c.l.b16 %v2363
    %v2456 = vunpack.c.h.b16 %v2363
    %v2457 = vunpack.c.l.b16 %v2364
    %v2458 = vunpack.c.h.b16 %v2364
    %v2459 = vunpack.c.l.b16 %v2365
    %v2460 = vunpack.c.h.b16 %v2365
    %v2461 = vunpack.c.l.b16 %v2366
    %v2462 = vunpack.c.h.b16 %v2366
    %v2463 = vunpack.c.l.b16 %v2367
    %v2464 = vunpack.c.h.b16 %v2367
    %v2465 = vunpack.c.l.b16 %v2368
    %v2466 = vunpack.c.h.b16 %v2368
    %v2467 = vunpack.c.l.b16 %v2369
    %v2468 = vunpack.c.h.b16 %v2369
    %v2469 = vunpack.c.l.b16 %v2370
    %v2470 = vunpack.c.h.b16 %v2370
    %v2471 = vunpack.c.l.b16 %v2371
    %v2472 = vunpack.c.h.b16 %v2371
    %v2473 = vunpack.c.l.b16 %v2372
    %v2474 = vunpack.c.h.b16 %v2372
    %v2475 = vunpack.c.l.b16 %v2373
    %v2476 = vunpack.c.h.b16 %v2373
    %v2477 = vunpack.c.l.b16 %v2374
    %v2478 = vunpack.c.h.b16 %v2374
    %v2479 = vunpack.c.l.b16 %v2375
    %v2480 = vunpack.c.h.b16 %v2375
    %v2481 = vunpack.c.l.b16 %v2376
    %v2482 = vunpack.c.h.b16 %v2376
    %v2483 = vunpack.c.l.b16 %v2377
    %v2484 = vunpack.c.h.b16 %v2377
    %v2485 = vunpack.c.l.b16 %v2378
    %v2486 = vunpack.c.h.b16 %v2378
    %v2487 = vunpack.c.l.b16 %v2379
    %v2488 = vunpack.c.h.b16 %v2379
    %v2489 = vunpack.c.l.b16 %v2380
    %v2490 = vunpack.c.h.b16 %v2380
    %v2491 = vunpack.c.l.b16 %v2381
    %v2492 = vunpack.c.h.b16 %v2381
    %v2493 = vunpack.c.l.b16 %v2382
    %v2494 = vunpack.c.h.b16 %v2382
    %v2495 = vunpack.c.l.b16 %v2383
    %v2496 = vunpack.c.h.b16 %v2383
    %v2497 = vunpack.c.l.b16 %v2384
    %v2498 = vunpack.c.h.b16 %v2384
    %v2499 = vunpack.c.l.b16 %v2385
    %v2500 = vunpack.c.h.b16 %v2385
    %v2501 = vunpack.c.l.b16 %v2386
    %v2502 = vunpack.c.h.b16 %v2386
    %v2503 = vunpack.c.l.b16 %v2387
    %v2504 = vunpack.c.h.b16 %v2387
    %v2505 = vunpack.c.l.b16 %v2388
    %v2506 = vunpack.c.h.b16 %v2388
    %v2507 = vpack.c.b16 %v2447, %v2443
    %v2508 = vpack.c.b16 %v2448, %v2444
    %v2509 = vpack.c.b16 %v2449, %v2445
    %v2510 = vpack.c.b16 %v2450, %v2446
    %v2511 = vpack.c.b16 %v2455, %v2451
    %v2512 = vpack.c.b16 %v2456, %v2452
    %v2513 = vpack.c.b16 %v2457, %v2453
    %v2514 = vpack.c.b16 %v2458, %v2454
    %v2515 = vpack.c.b16 %v2463, %v2459
    %v2516 = vpack.c.b16 %v2464, %v2460
    %v2517 = vpack.c.b16 %v2465, %v2461
    %v2518 = vpack.c.b16 %v2466, %v2462
    %v2519 = vpack.c.b16 %v2471, %v2467
    %v2520 = vpack.c.b16 %v2472, %v2468
    %v2521 = vpack.c.b16 %v2473, %v2469
    %v2522 = vpack.c.b16 %v2474, %v2470
    %v2523 = vpack.c.b16 %v2479, %v2475
    %v2524 = vpack.c.b16 %v2480, %v2476
    %v2525 = vpack.c.b16 %v2481, %v2477
    %v2526 = vpack.c.b16 %v2482, %v2478
    %v2527 = vpack.c.b16 %v2487, %v2483
    %v2528 = vpack.c.b16 %v2488, %v2484
    %v2529 = vpack.c.b16 %v2489, %v2485
    %v2530 = vpack.c.b16 %v2490, %v2486
    %v2531 = vpack.c.b16 %v2495, %v2491
    %v2532 = vpack.c.b16 %v2496, %v2492
    %v2533 = vpack.c.b16 %v2497, %v2493
    %v2534 = vpack.c.b16 %v2498, %v2494
    %v2535 = vpack.c.b16 %v2503, %v2499
    %v2536 = vpack.c.b16 %v2504, %v2500
    %v2537 = vpack.c.b16 %v2505, %v2501
    %v2538 = vpack.c.b16 %v2506, %v2502
    %2571 = vmatprep.subr.bf16.mxu0 %v2508
    %2572 = vmatpush1.bf16.msra.mxu0 %v2507
    %2573 = vmatprep.subr.bf16.mxu0 %v2512
    %2574 = vmatpush1.bf16.msra.mxu0 %v2511
    %2575 = vmatprep.subr.bf16.mxu0 %v2516
    %2576 = vmatpush1.bf16.msra.mxu0 %v2515
    %2577 = vmatprep.subr.bf16.mxu0 %v2520
    %2578 = vmatpush1.bf16.msra.mxu0 %v2519
    %2579 = vmatprep.subr.bf16.mxu0 %v2524
    %2580 = vmatpush1.bf16.msra.mxu0 %v2523
    %2581 = vmatprep.subr.bf16.mxu0 %v2528
    %2582 = vmatpush1.bf16.msra.mxu0 %v2527
    %2583 = vmatprep.subr.bf16.mxu0 %v2532
    %2584 = vmatpush1.bf16.msra.mxu0 %v2531
    %2585 = vmatprep.subr.bf16.mxu0 %v2536
    %2586 = vmatpush1.bf16.msra.mxu0 %v2535
    %2587 = vmatprep.subr.bf16.mxu0 0
    %2588 = vmatpush1.bf16.msra.mxu0 0
    %2589 = vmatprep.subr.bf16.mxu0 0
    %2590 = vmatpush1.bf16.msra.mxu0 0
    %2591 = vmatprep.subr.bf16.mxu0 0
    %2592 = vmatpush1.bf16.msra.mxu0 0
    %2593 = vmatprep.subr.bf16.mxu0 0
    %2594 = vmatpush1.bf16.msra.mxu0 0
    %2595 = vmatprep.subr.bf16.mxu0 0
    %2596 = vmatpush1.bf16.msra.mxu0 0
    %2597 = vmatprep.subr.bf16.mxu0 0
    %2598 = vmatpush1.bf16.msra.mxu0 0
    %2599 = vmatprep.subr.bf16.mxu0 0
    %2600 = vmatpush1.bf16.msra.mxu0 0
    %2601 = vmatprep.subr.bf16.mxu0 0
    %2602 = vmatpush1.bf16.msra.mxu0 0
    %2603 = vmatprep.mubr.bf16.mxu0 0
    %2604 = vmatmul.mubr.bf16.gmra.mrb[0].mxu0 %v2355
    %v2605 = vpop.f32.mrb[0].mxu0
    %v2606 = vadd.f32 %v2394, %v2605
    %v2607 = vpop.f32.mrb[0].mxu0
    %v2608 = vadd.f32 %v2398, %v2607
    %v2609 = vpop.f32.mrb[0].mxu0
    %v2610 = vadd.f32 %v2394, %v2609
    %v2611 = vpop.f32.mrb[0].mxu0
    %v2612 = vadd.f32 %v2398, %v2611
    %2613 = vmatprep.mubr.bf16.mxu0 0
    %2614 = vmatmul.mubr.bf16.gmra.mrb[0].mxu0 %v2356
    %v2615 = vpop.f32.mrb[0].mxu0
    %v2616 = vadd.f32 %v2394, %v2615
    %v2617 = vpop.f32.mrb[0].mxu0
    %v2618 = vadd.f32 %v2398, %v2617
    %v2619 = vpop.f32.mrb[0].mxu0
    %v2620 = vadd.f32 %v2394, %v2619
    %v2621 = vpop.f32.mrb[0].mxu0
    %v2622 = vadd.f32 %v2398, %v2621
    %2623 = vdwg.mxu0
    %2624 = vmatprep.subr.bf16.mxu0 %v2510
    %2625 = vmatpush1.bf16.msra.mxu0 %v2509
    %2626 = vmatprep.subr.bf16.mxu0 %v2514
    %2627 = vmatpush1.bf16.msra.mxu0 %v2513
    %2628 = vmatprep.subr.bf16.mxu0 %v2518
    %2629 = vmatpush1.bf16.msra.mxu0 %v2517
    %2630 = vmatprep.subr.bf16.mxu0 %v2522
    %2631 = vmatpush1.bf16.msra.mxu0 %v2521
    %2632 = vmatprep.subr.bf16.mxu0 %v2526
    %2633 = vmatpush1.bf16.msra.mxu0 %v2525
    %2634 = vmatprep.subr.bf16.mxu0 %v2530
    %2635 = vmatpush1.bf16.msra.mxu0 %v2529
    %2636 = vmatprep.subr.bf16.mxu0 %v2534
    %2637 = vmatpush1.bf16.msra.mxu0 %v2533
    %2638 = vmatprep.subr.bf16.mxu0 %v2538
    %2639 = vmatpush1.bf16.msra.mxu0 %v2537
    %2640 = vmatprep.subr.bf16.mxu0 0
    %2641 = vmatpush1.bf16.msra.mxu0 0
    %2642 = vmatprep.subr.bf16.mxu0 0
    %2643 = vmatpush1.bf16.msra.mxu0 0
    %2644 = vmatprep.subr.bf16.mxu0 0
    %2645 = vmatpush1.bf16.msra.mxu0 0
    %2646 = vmatprep.subr.bf16.mxu0 0
    %2647 = vmatpush1.bf16.msra.mxu0 0
    %2648 = vmatprep.subr.bf16.mxu0 0
    %2649 = vmatpush1.bf16.msra.mxu0 0
    %2650 = vmatprep.subr.bf16.mxu0 0
    %2651 = vmatpush1.bf16.msra.mxu0 0
    %2652 = vmatprep.subr.bf16.mxu0 0
    %2653 = vmatpush1.bf16.msra.mxu0 0
    %2654 = vmatprep.subr.bf16.mxu0 0
    %2655 = vmatpush1.bf16.msra.mxu0 0
    %2656 = vmatprep.mubr.bf16.mxu0 0
    %2657 = vmatmul.mubr.bf16.gmra.mrb[0].mxu0 %v2355
    %v2658 = vpop.f32.mrb[0].mxu0
    %v2659 = vadd.f32 %v2402, %v2658
    %v2660 = vpop.f32.mrb[0].mxu0
    %v2661 = vadd.f32 %v2406, %v2660
    %v2662 = vpop.f32.mrb[0].mxu0
    %v2663 = vadd.f32 %v2402, %v2662
    %v2664 = vpop.f32.mrb[0].mxu0
    %v2665 = vadd.f32 %v2406, %v2664
    %2666 = vmatprep.mubr.bf16.mxu0 0
    %2667 = vmatmul.mubr.bf16.gmra.mrb[0].mxu0 %v2356
    %v2668 = vpop.f32.mrb[0].mxu0
    %v2669 = vadd.f32 %v2402, %v2668
    %v2670 = vpop.f32.mrb[0].mxu0
    %v2671 = vadd.f32 %v2406, %v2670
    %v2672 = vpop.f32.mrb[0].mxu0
    %v2673 = vadd.f32 %v2402, %v2672
    %v2674 = vpop.f32.mrb[0].mxu0
    %v2675 = vadd.f32 %v2406, %v2674
    %2676 = vdwg.mxu0
    %v2677 = vmax.f32 %v2606, 0.0
    %v2678 = vmax.f32 %v2608, 0.0
    %v2679 = vmax.f32 %v2659, 0.0
    %v2680 = vmax.f32 %v2661, 0.0
    %v2681 = vmax.f32 %v2610, 0.0
    %v2682 = vmax.f32 %v2612, 0.0
    %v2683 = vmax.f32 %v2663, 0.0
    %v2684 = vmax.f32 %v2665, 0.0
    %v2685 = vmax.f32 %v2616, 0.0
    %v2686 = vmax.f32 %v2618, 0.0
    %v2687 = vmax.f32 %v2669, 0.0
    %v2688 = vmax.f32 %v2671, 0.0
    %v2689 = vmax.f32 %v2620, 0.0
    %v2690 = vmax.f32 %v2622, 0.0
    %v2691 = vmax.f32 %v2673, 0.0
    %v2692 = vmax.f32 %v2675, 0.0
    %v2693 = vpack.c.bf16 %v2681, %v2677
    %v2694 = vpack.c.bf16 %v2682, %v2678
    %v2695 = vpack.c.bf16 %v2683, %v2679
    %v2696 = vpack.c.bf16 %v2684, %v2680
    %v2697 = vpack.c.bf16 %v2689, %v2685
    %v2698 = vpack.c.bf16 %v2690, %v2686
    %v2699 = vpack.c.bf16 %v2691, %v2687
    %v2700 = vpack.c.bf16 %v2692, %v2688
    %v2701 = vld [vmem:[#allocation10] sm:$0xf]
    %v2702 = vld [vmem:[#allocation10 + $0x4] sm:$0xf]
    %v2703 = vld [vmem:[#allocation10 + $0x8] sm:$0xf]
    %v2704 = vld [vmem:[#allocation10 + $0xc] sm:$0xf]
    %v2705 = vld [vmem:[#allocation10 + $0x10] sm:$0xf]
    %v2706 = vld [vmem:[#allocation10 + $0x14] sm:$0xf]
    %v2707 = vld [vmem:[#allocation10 + $0x18] sm:$0xf]
    %v2708 = vld [vmem:[#allocation10 + $0x1c] sm:$0xf]
    %v2709 = vld [vmem:[#allocation10 + $0x20] sm:$0xf]
    %v2710 = vld [vmem:[#allocation10 + $0x24] sm:$0xf]
    %v2711 = vld [vmem:[#allocation10 + $0x28] sm:$0xf]
    %v2712 = vld [vmem:[#allocation10 + $0x2c] sm:$0xf]
    %v2713 = vld [vmem:[#allocation10 + $0x30] sm:$0xf]
    %v2714 = vld [vmem:[#allocation10 + $0x34] sm:$0xf]
    %v2715 = vld [vmem:[#allocation10 + $0x38] sm:$0xf]
    %v2716 = vld [vmem:[#allocation10 + $0x3c] sm:$0xf]
    %v2717 = vld [vmem:[#allocation10 + $0x40] sm:$0xf]
    %v2718 = vld [vmem:[#allocation10 + $0x44] sm:$0xf]
    %v2719 = vld [vmem:[#allocation10 + $0x48] sm:$0xf]
    %v2720 = vld [vmem:[#allocation10 + $0x4c] sm:$0xf]
    %v2721 = vld [vmem:[#allocation10 + $0x50] sm:$0xf]
    %v2722 = vld [vmem:[#allocation10 + $0x54] sm:$0xf]
    %v2723 = vld [vmem:[#allocation10 + $0x58] sm:$0xf]
    %v2724 = vld [vmem:[#allocation10 + $0x5c] sm:$0xf]
    %v2725 = vld [vmem:[#allocation10 + $0x60] sm:$0xf]
    %v2726 = vld [vmem:[#allocation10 + $0x64] sm:$0xf]
    %v2727 = vld [vmem:[#allocation10 + $0x68] sm:$0xf]
    %v2728 = vld [vmem:[#allocation10 + $0x6c] sm:$0xf]
    %v2729 = vld [vmem:[#allocation10 + $0x70] sm:$0xf]
    %v2730 = vld [vmem:[#allocation10 + $0x74] sm:$0xf]
    %v2731 = vld [vmem:[#allocation10 + $0x78] sm:$0xf]
    %v2732 = vld [vmem:[#allocation10 + $0x7c] sm:$0xf]
    %v2733 = vld [vmem:[#allocation10 + $0x80] sm:$0xf]
    %v2734 = vld [vmem:[#allocation10 + $0x84] sm:$0xf]
    %v2735 = vld [vmem:[#allocation10 + $0x88] sm:$0xf]
    %v2736 = vld [vmem:[#allocation10 + $0x8c] sm:$0xf]
    %v2737 = vld [vmem:[#allocation10 + $0x90] sm:$0xf]
    %v2738 = vld [vmem:[#allocation10 + $0x94] sm:$0xf]
    %v2739 = vld [vmem:[#allocation10 + $0x98] sm:$0xf]
    %v2740 = vld [vmem:[#allocation10 + $0x9c] sm:$0xf]
    %v2741 = vld [vmem:[#allocation10 + $0xa0] sm:$0xf]
    %v2742 = vld [vmem:[#allocation10 + $0xa4] sm:$0xf]
    %v2743 = vld [vmem:[#allocation10 + $0xa8] sm:$0xf]
    %v2744 = vld [vmem:[#allocation10 + $0xac] sm:$0xf]
    %v2745 = vld [vmem:[#allocation10 + $0xb0] sm:$0xf]
    %v2746 = vld [vmem:[#allocation10 + $0xb4] sm:$0xf]
    %v2747 = vld [vmem:[#allocation10 + $0xb8] sm:$0xf]
    %v2748 = vld [vmem:[#allocation10 + $0xbc] sm:$0xf]
    %v2749 = vld [vmem:[#allocation10 + $0xc0] sm:$0xf]
    %v2750 = vld [vmem:[#allocation10 + $0xc4] sm:$0xf]
    %v2751 = vld [vmem:[#allocation10 + $0xc8] sm:$0xf]
    %v2752 = vld [vmem:[#allocation10 + $0xcc] sm:$0xf]
    %v2753 = vld [vmem:[#allocation10 + $0xd0] sm:$0xf]
    %v2754 = vld [vmem:[#allocation10 + $0xd4] sm:$0xf]
    %v2755 = vld [vmem:[#allocation10 + $0xd8] sm:$0xf]
    %v2756 = vld [vmem:[#allocation10 + $0xdc] sm:$0xf]
    %v2757 = vld [vmem:[#allocation10 + $0xe0] sm:$0xf]
    %v2758 = vld [vmem:[#allocation10 + $0xe4] sm:$0xf]
    %v2759 = vld [vmem:[#allocation10 + $0xe8] sm:$0xf]
    %v2760 = vld [vmem:[#allocation10 + $0xec] sm:$0xf]
    %v2761 = vld [vmem:[#allocation10 + $0xf0] sm:$0xf]
    %v2762 = vld [vmem:[#allocation10 + $0xf4] sm:$0xf]
    %v2763 = vld [vmem:[#allocation10 + $0xf8] sm:$0xf]
    %v2764 = vld [vmem:[#allocation10 + $0xfc] sm:$0xf]
    %v2765 = vld [vmem:[%s35] sm:$0x1]
    %v2767 = vlaneseq
    %v2768 = vshrl.u32 %v2767, 7
    %v2769 = vsub.s32 0, %v2768
    %v2770 = vrot.slane %v2765, %v2769
    %v2836 = vunpack.c.l.b16 %v2701
    %v2837 = vunpack.c.l.b16 %v2702
    %v2838 = vunpack.c.l.b16 %v2703
    %v2839 = vunpack.c.l.b16 %v2704
    %v2840 = vunpack.c.l.b16 %v2705
    %v2841 = vunpack.c.l.b16 %v2706
    %v2842 = vunpack.c.l.b16 %v2707
    %v2843 = vunpack.c.l.b16 %v2708
    %v2844 = vunpack.c.l.b16 %v2709
    %v2845 = vunpack.c.l.b16 %v2710
    %v2846 = vunpack.c.l.b16 %v2711
    %v2847 = vunpack.c.l.b16 %v2712
    %v2848 = vunpack.c.l.b16 %v2713
    %v2849 = vunpack.c.l.b16 %v2714
    %v2850 = vunpack.c.l.b16 %v2715
    %v2851 = vunpack.c.l.b16 %v2716
    %v2852 = vunpack.c.l.b16 %v2717
    %v2853 = vunpack.c.l.b16 %v2718
    %v2854 = vunpack.c.l.b16 %v2719
    %v2855 = vunpack.c.l.b16 %v2720
    %v2856 = vunpack.c.l.b16 %v2721
    %v2857 = vunpack.c.l.b16 %v2722
    %v2858 = vunpack.c.l.b16 %v2723
    %v2859 = vunpack.c.l.b16 %v2724
    %v2860 = vunpack.c.l.b16 %v2725
    %v2861 = vunpack.c.l.b16 %v2726
    %v2862 = vunpack.c.l.b16 %v2727
    %v2863 = vunpack.c.l.b16 %v2728
    %v2864 = vunpack.c.l.b16 %v2729
    %v2865 = vunpack.c.l.b16 %v2730
    %v2866 = vunpack.c.l.b16 %v2731
    %v2867 = vunpack.c.l.b16 %v2732
    %v2868 = vunpack.c.l.b16 %v2733
    %v2869 = vunpack.c.l.b16 %v2734
    %v2870 = vunpack.c.l.b16 %v2735
    %v2871 = vunpack.c.l.b16 %v2736
    %v2872 = vunpack.c.l.b16 %v2737
    %v2873 = vunpack.c.l.b16 %v2738
    %v2874 = vunpack.c.l.b16 %v2739
    %v2875 = vunpack.c.l.b16 %v2740
    %v2876 = vunpack.c.l.b16 %v2741
    %v2877 = vunpack.c.l.b16 %v2742
    %v2878 = vunpack.c.l.b16 %v2743
    %v2879 = vunpack.c.l.b16 %v2744
    %v2880 = vunpack.c.l.b16 %v2745
    %v2881 = vunpack.c.l.b16 %v2746
    %v2882 = vunpack.c.l.b16 %v2747
    %v2883 = vunpack.c.l.b16 %v2748
    %v2884 = vunpack.c.l.b16 %v2749
    %v2885 = vunpack.c.l.b16 %v2750
    %v2886 = vunpack.c.l.b16 %v2751
    %v2887 = vunpack.c.l.b16 %v2752
    %v2888 = vunpack.c.l.b16 %v2753
    %v2889 = vunpack.c.l.b16 %v2754
    %v2890 = vunpack.c.l.b16 %v2755
    %v2891 = vunpack.c.l.b16 %v2756
    %v2892 = vunpack.c.l.b16 %v2757
    %v2893 = vunpack.c.l.b16 %v2758
    %v2894 = vunpack.c.l.b16 %v2759
    %v2895 = vunpack.c.l.b16 %v2760
    %v2896 = vunpack.c.l.b16 %v2761
    %v2897 = vunpack.c.l.b16 %v2762
    %v2898 = vunpack.c.l.b16 %v2763
    %v2899 = vunpack.c.l.b16 %v2764
    %v2900 = vpack.c.b16 %v2837, %v2836
    %v2901 = vpack.c.b16 %v2839, %v2838
    %v2902 = vpack.c.b16 %v2841, %v2840
    %v2903 = vpack.c.b16 %v2843, %v2842
    %v2904 = vpack.c.b16 %v2845, %v2844
    %v2905 = vpack.c.b16 %v2847, %v2846
    %v2906 = vpack.c.b16 %v2849, %v2848
    %v2907 = vpack.c.b16 %v2851, %v2850
    %v2908 = vpack.c.b16 %v2853, %v2852
    %v2909 = vpack.c.b16 %v2855, %v2854
    %v2910 = vpack.c.b16 %v2857, %v2856
    %v2911 = vpack.c.b16 %v2859, %v2858
    %v2912 = vpack.c.b16 %v2861, %v2860
    %v2913 = vpack.c.b16 %v2863, %v2862
    %v2914 = vpack.c.b16 %v2865, %v2864
    %v2915 = vpack.c.b16 %v2867, %v2866
    %v2916 = vpack.c.b16 %v2869, %v2868
    %v2917 = vpack.c.b16 %v2871, %v2870
    %v2918 = vpack.c.b16 %v2873, %v2872
    %v2919 = vpack.c.b16 %v2875, %v2874
    %v2920 = vpack.c.b16 %v2877, %v2876
    %v2921 = vpack.c.b16 %v2879, %v2878
    %v2922 = vpack.c.b16 %v2881, %v2880
    %v2923 = vpack.c.b16 %v2883, %v2882
    %v2924 = vpack.c.b16 %v2885, %v2884
    %v2925 = vpack.c.b16 %v2887, %v2886
    %v2926 = vpack.c.b16 %v2889, %v2888
    %v2927 = vpack.c.b16 %v2891, %v2890
    %v2928 = vpack.c.b16 %v2893, %v2892
    %v2929 = vpack.c.b16 %v2895, %v2894
    %v2930 = vpack.c.b16 %v2897, %v2896
    %v2931 = vpack.c.b16 %v2899, %v2898
    %2964 = vmatprep.subr.bf16.mxu0 0
    %2965 = vmatpush1.bf16.msra.mxu0 %v2900
    %2966 = vmatprep.subr.bf16.mxu0 0
    %2967 = vmatpush1.bf16.msra.mxu0 %v2901
    %2968 = vmatprep.subr.bf16.mxu0 0
    %2969 = vmatpush1.bf16.msra.mxu0 %v2902
    %2970 = vmatprep.subr.bf16.mxu0 0
    %2971 = vmatpush1.bf16.msra.mxu0 %v2903
    %2972 = vmatprep.subr.bf16.mxu0 0
    %2973 = vmatpush1.bf16.msra.mxu0 %v2904
    %2974 = vmatprep.subr.bf16.mxu0 0
    %2975 = vmatpush1.bf16.msra.mxu0 %v2905
    %2976 = vmatprep.subr.bf16.mxu0 0
    %2977 = vmatpush1.bf16.msra.mxu0 %v2906
    %2978 = vmatprep.subr.bf16.mxu0 0
    %2979 = vmatpush1.bf16.msra.mxu0 %v2907
    %2980 = vmatprep.subr.bf16.mxu0 0
    %2981 = vmatpush1.bf16.msra.mxu0 %v2908
    %2982 = vmatprep.subr.bf16.mxu0 0
    %2983 = vmatpush1.bf16.msra.mxu0 %v2909
    %2984 = vmatprep.subr.bf16.mxu0 0
    %2985 = vmatpush1.bf16.msra.mxu0 %v2910
    %2986 = vmatprep.subr.bf16.mxu0 0
    %2987 = vmatpush1.bf16.msra.mxu0 %v2911
    %2988 = vmatprep.subr.bf16.mxu0 0
    %2989 = vmatpush1.bf16.msra.mxu0 %v2912
    %2990 = vmatprep.subr.bf16.mxu0 0
    %2991 = vmatpush1.bf16.msra.mxu0 %v2913
    %2992 = vmatprep.subr.bf16.mxu0 0
    %2993 = vmatpush1.bf16.msra.mxu0 %v2914
    %2994 = vmatprep.subr.bf16.mxu0 0
    %2995 = vmatpush1.bf16.msra.mxu0 %v2915
    %2996 = vmatprep.mubr.bf16.mxu0 %v2694
    %2997 = vmatmul.mubr.bf16.gmra.mrb[0].mxu0 %v2693
    %v2998 = vpop.f32.mrb[0].mxu0
    %v2999 = vadd.f32 %v2770, %v2998
    %v3000 = vpop.f32.mrb[0].mxu0
    %v3001 = vpop.f32.mrb[0].mxu0
    %v3002 = vadd.f32 %v2770, %v3001
    %v3003 = vpop.f32.mrb[0].mxu0
    %3004 = vmatprep.mubr.bf16.mxu0 %v2698
    %3005 = vmatmul.mubr.bf16.gmra.mrb[0].mxu0 %v2697
    %v3006 = vpop.f32.mrb[0].mxu0
    %v3007 = vadd.f32 %v2770, %v3006
    %v3008 = vpop.f32.mrb[0].mxu0
    %v3009 = vpop.f32.mrb[0].mxu0
    %v3010 = vadd.f32 %v2770, %v3009
    %v3011 = vpop.f32.mrb[0].mxu0
    %3012 = vdwg.mxu0
    %3013 = vmatprep.subr.bf16.mxu0 0
    %3014 = vmatpush1.bf16.msra.mxu0 %v2916
    %3015 = vmatprep.subr.bf16.mxu0 0
    %3016 = vmatpush1.bf16.msra.mxu0 %v2917
    %3017 = vmatprep.subr.bf16.mxu0 0
    %3018 = vmatpush1.bf16.msra.mxu0 %v2918
    %3019 = vmatprep.subr.bf16.mxu0 0
    %3020 = vmatpush1.bf16.msra.mxu0 %v2919
    %3021 = vmatprep.subr.bf16.mxu0 0
    %3022 = vmatpush1.bf16.msra.mxu0 %v2920
    %3023 = vmatprep.subr.bf16.mxu0 0
    %3024 = vmatpush1.bf16.msra.mxu0 %v2921
    %3025 = vmatprep.subr.bf16.mxu0 0
    %3026 = vmatpush1.bf16.msra.mxu0 %v2922
    %3027 = vmatprep.subr.bf16.mxu0 0
    %3028 = vmatpush1.bf16.msra.mxu0 %v2923
    %3029 = vmatprep.subr.bf16.mxu0 0
    %3030 = vmatpush1.bf16.msra.mxu0 %v2924
    %3031 = vmatprep.subr.bf16.mxu0 0
    %3032 = vmatpush1.bf16.msra.mxu0 %v2925
    %3033 = vmatprep.subr.bf16.mxu0 0
    %3034 = vmatpush1.bf16.msra.mxu0 %v2926
    %3035 = vmatprep.subr.bf16.mxu0 0
    %3036 = vmatpush1.bf16.msra.mxu0 %v2927
    %3037 = vmatprep.subr.bf16.mxu0 0
    %3038 = vmatpush1.bf16.msra.mxu0 %v2928
    %3039 = vmatprep.subr.bf16.mxu0 0
    %3040 = vmatpush1.bf16.msra.mxu0 %v2929
    %3041 = vmatprep.subr.bf16.mxu0 0
    %3042 = vmatpush1.bf16.msra.mxu0 %v2930
    %3043 = vmatprep.subr.bf16.mxu0 0
    %3044 = vmatpush1.bf16.msra.mxu0 %v2931
    %3045 = vmatprep.mubr.bf16.mxu0 %v2696
    %3046 = vmatmul.mubr.bf16.gmra.mrb[0].mxu0 %v2695
    %v3047 = vpop.f32.mrb[0].mxu0
    %v3048 = vadd.f32 %v2999, %v3047
    %v3049 = vpop.f32.mrb[0].mxu0
    %v3050 = vpop.f32.mrb[0].mxu0
    %v3051 = vadd.f32 %v3002, %v3050
    %v3052 = vpop.f32.mrb[0].mxu0
    %3053 = vmatprep.mubr.bf16.mxu0 %v2700
    %3054 = vmatmul.mubr.bf16.gmra.mrb[0].mxu0 %v2699
    %v3055 = vpop.f32.mrb[0].mxu0
    %v3056 = vadd.f32 %v3007, %v3055
    %v3057 = vpop.f32.mrb[0].mxu0
    %v3058 = vpop.f32.mrb[0].mxu0
    %v3059 = vadd.f32 %v3010, %v3058
    %v3060 = vpop.f32.mrb[0].mxu0
    %3061 = vdwg.mxu0
    %v3062 = vadd.f32 %v2285, %v3048
    %v3063 = vadd.f32 %v2286, %v3051
    %v3064 = vadd.f32 %v2287, %v3056
    %v3065 = vadd.f32 %v2288, %v3059
    %v3066 = vld [vmem:[%s37] sm:$0x1]
    %v3067 = vld [vmem:[%s39] sm:$0x1]
    %3068 = vadd.xlane.f32.xlu0 %v3062
    %v3069 = vpop.xlane.xlu0 %3068
    %3070 = vadd.xlane.f32.xlu0 %v3063
    %v3071 = vpop.xlane.xlu0 %3070
    %3072 = vadd.xlane.f32.xlu0 %v3064
    %v3073 = vpop.xlane.xlu0 %3072
    %3074 = vadd.xlane.f32.xlu0 %v3065
    %v3075 = vpop.xlane.xlu0 %3074
    %v3076 = vmul.f32 %v3069, %v606
    %v3077 = vmul.f32 %v3071, %v606
    %v3078 = vmul.f32 %v3073, %v606
    %v3079 = vmul.f32 %v3075, %v606
    %v3080 = vsub.f32 %v3062, %v3076
    %v3081 = vsub.f32 %v3063, %v3077
    %v3082 = vsub.f32 %v3064, %v3078
    %v3083 = vsub.f32 %v3065, %v3079
    %v3084 = vmul.f32 %v3080, %v3080
    %v3085 = vmul.f32 %v3081, %v3081
    %v3086 = vmul.f32 %v3082, %v3082
    %v3087 = vmul.f32 %v3083, %v3083
    %3088 = vadd.xlane.f32.xlu0 %v3084
    %v3089 = vpop.xlane.xlu0 %3088
    %3090 = vadd.xlane.f32.xlu0 %v3085
    %v3091 = vpop.xlane.xlu0 %3090
    %3092 = vadd.xlane.f32.xlu0 %v3086
    %v3093 = vpop.xlane.xlu0 %3092
    %3094 = vadd.xlane.f32.xlu0 %v3087
    %v3095 = vpop.xlane.xlu0 %3094
    %v3096 = vmul.f32 %v3089, %v606
    %v3097 = vmul.f32 %v3091, %v606
    %v3098 = vmul.f32 %v3093, %v606
    %v3099 = vmul.f32 %v3095, %v606
    %v3100 = vadd.f32 %v3096, 1e-05
    %v3101 = vadd.f32 %v3097, 1e-05
    %v3102 = vadd.f32 %v3098, 1e-05
    %v3103 = vadd.f32 %v3099, 1e-05
    %v3104 = vrsqrt.pop %v3100
    %v3105 = vrsqrt.pop %v3101
    %v3106 = vrsqrt.pop %v3102
    %v3107 = vrsqrt.pop %v3103
    %v3108 = vmul.f32 %v3080, %v3104
    %v3109 = vmul.f32 %v3081, %v3105
    %v3110 = vmul.f32 %v3082, %v3106
    %v3111 = vmul.f32 %v3083, %v3107
    %v3113 = vlaneseq
    %v3114 = vshrl.u32 %v3113, 7
    %v3115 = vsub.s32 0, %v3114
    %v3116 = vrot.slane %v3066, %v3115
    %v3118 = vmul.f32 %v3108, %v3116
    %v3119 = vmul.f32 %v3109, %v3116
    %v3120 = vmul.f32 %v3110, %v3116
    %v3121 = vmul.f32 %v3111, %v3116
    %v3123 = vlaneseq
    %v3124 = vshrl.u32 %v3123, 7
    %v3125 = vsub.s32 0, %v3124
    %v3126 = vrot.slane %v3067, %v3125
    %v3128 = vadd.f32 %v3118, %v3126
    %v3129 = vadd.f32 %v3119, %v3126
    %v3130 = vadd.f32 %v3120, %v3126
    %v3131 = vadd.f32 %v3121, %v3126
    %v3132 = vpack.c.bf16 %v3129, %v3128
    %v3133 = vpack.c.bf16 %v3131, %v3130
    %v3134 = vld [vmem:[#allocation11] sm:$0xf]
    %v3135 = vld [vmem:[#allocation11 + $0x4] sm:$0xf]
    %v3136 = vld [vmem:[#allocation11 + $0x8] sm:$0xf]
    %v3137 = vld [vmem:[#allocation11 + $0xc] sm:$0xf]
    %v3138 = vld [vmem:[#allocation11 + $0x10] sm:$0xf]
    %v3139 = vld [vmem:[#allocation11 + $0x14] sm:$0xf]
    %v3140 = vld [vmem:[#allocation11 + $0x18] sm:$0xf]
    %v3141 = vld [vmem:[#allocation11 + $0x1c] sm:$0xf]
    %v3142 = vld [vmem:[#allocation11 + $0x20] sm:$0xf]
    %v3143 = vld [vmem:[#allocation11 + $0x24] sm:$0xf]
    %v3144 = vld [vmem:[#allocation11 + $0x28] sm:$0xf]
    %v3145 = vld [vmem:[#allocation11 + $0x2c] sm:$0xf]
    %v3146 = vld [vmem:[#allocation11 + $0x30] sm:$0xf]
    %v3147 = vld [vmem:[#allocation11 + $0x34] sm:$0xf]
    %v3148 = vld [vmem:[#allocation11 + $0x38] sm:$0xf]
    %v3149 = vld [vmem:[#allocation11 + $0x3c] sm:$0xf]
    %v3166 = vunpack.c.l.b16 %v3134
    %v3167 = vunpack.c.l.b16 %v3135
    %v3168 = vunpack.c.l.b16 %v3136
    %v3169 = vunpack.c.l.b16 %v3137
    %v3170 = vunpack.c.l.b16 %v3138
    %v3171 = vunpack.c.l.b16 %v3139
    %v3172 = vunpack.c.l.b16 %v3140
    %v3173 = vunpack.c.l.b16 %v3141
    %v3174 = vunpack.c.l.b16 %v3142
    %v3175 = vunpack.c.l.b16 %v3143
    %v3176 = vunpack.c.l.b16 %v3144
    %v3177 = vunpack.c.l.b16 %v3145
    %v3178 = vunpack.c.l.b16 %v3146
    %v3179 = vunpack.c.l.b16 %v3147
    %v3180 = vunpack.c.l.b16 %v3148
    %v3181 = vunpack.c.l.b16 %v3149
    %v3182 = vpack.c.b16 %v3167, %v3166
    %v3183 = vpack.c.b16 %v3169, %v3168
    %v3184 = vpack.c.b16 %v3171, %v3170
    %v3185 = vpack.c.b16 %v3173, %v3172
    %v3186 = vpack.c.b16 %v3175, %v3174
    %v3187 = vpack.c.b16 %v3177, %v3176
    %v3188 = vpack.c.b16 %v3179, %v3178
    %v3189 = vpack.c.b16 %v3181, %v3180
    %3198 = vmatprep.subr.bf16.mxu0 0
    %3199 = vmatpush1.bf16.msra.mxu0 %v3182
    %3200 = vmatprep.subr.bf16.mxu0 0
    %3201 = vmatpush1.bf16.msra.mxu0 %v3183
    %3202 = vmatprep.subr.bf16.mxu0 0
    %3203 = vmatpush1.bf16.msra.mxu0 %v3184
    %3204 = vmatprep.subr.bf16.mxu0 0
    %3205 = vmatpush1.bf16.msra.mxu0 %v3185
    %3206 = vmatprep.subr.bf16.mxu0 0
    %3207 = vmatpush1.bf16.msra.mxu0 %v3186
    %3208 = vmatprep.subr.bf16.mxu0 0
    %3209 = vmatpush1.bf16.msra.mxu0 %v3187
    %3210 = vmatprep.subr.bf16.mxu0 0
    %3211 = vmatpush1.bf16.msra.mxu0 %v3188
    %3212 = vmatprep.subr.bf16.mxu0 0
    %3213 = vmatpush1.bf16.msra.mxu0 %v3189
    %3214 = vmatprep.subr.bf16.mxu0 0
    %3215 = vmatpush1.bf16.msra.mxu0 0
    %3216 = vmatprep.subr.bf16.mxu0 0
    %3217 = vmatpush1.bf16.msra.mxu0 0
    %3218 = vmatprep.subr.bf16.mxu0 0
    %3219 = vmatpush1.bf16.msra.mxu0 0
    %3220 = vmatprep.subr.bf16.mxu0 0
    %3221 = vmatpush1.bf16.msra.mxu0 0
    %3222 = vmatprep.subr.bf16.mxu0 0
    %3223 = vmatpush1.bf16.msra.mxu0 0
    %3224 = vmatprep.subr.bf16.mxu0 0
    %3225 = vmatpush1.bf16.msra.mxu0 0
    %3226 = vmatprep.subr.bf16.mxu0 0
    %3227 = vmatpush1.bf16.msra.mxu0 0
    %3228 = vmatprep.subr.bf16.mxu0 0
    %3229 = vmatpush1.bf16.msra.mxu0 0
    %3230 = vmatprep.mubr.bf16.mxu0 0
    %3231 = vmatmul.mubr.bf16.gmra.mrb[0].mxu0 %v3132
    %v3232 = vpop.f32.mrb[0].mxu0
    %v3233 = vadd.f32 0.0, %v3232
    %v3234 = vpop.f32.mrb[0].mxu0
    %v3235 = vpop.f32.mrb[0].mxu0
    %v3236 = vadd.f32 0.0, %v3235
    %v3237 = vpop.f32.mrb[0].mxu0
    %3238 = vmatprep.mubr.bf16.mxu0 0
    %3239 = vmatmul.mubr.bf16.gmra.mrb[0].mxu0 %v3133
    %v3240 = vpop.f32.mrb[0].mxu0
    %v3241 = vadd.f32 0.0, %v3240
    %v3242 = vpop.f32.mrb[0].mxu0
    %v3243 = vpop.f32.mrb[0].mxu0
    %v3244 = vadd.f32 0.0, %v3243
    %v3245 = vpop.f32.mrb[0].mxu0
    %3246 = vdwg.mxu0
    %v3247 = vld [vmem:[#allocation13] sm:$0xf]
    %v3248 = vld [vmem:[#allocation13 + $0x4] sm:$0xf]
    %v3249 = vld [vmem:[#allocation13 + $0x8] sm:$0xf]
    %v3250 = vld [vmem:[#allocation13 + $0xc] sm:$0xf]
    %v3251 = vld [vmem:[#allocation13 + $0x10] sm:$0xf]
    %v3252 = vld [vmem:[#allocation13 + $0x14] sm:$0xf]
    %v3253 = vld [vmem:[#allocation13 + $0x18] sm:$0xf]
    %v3254 = vld [vmem:[#allocation13 + $0x1c] sm:$0xf]
    %v3255 = vld [vmem:[#allocation13 + $0x20] sm:$0xf]
    %v3256 = vld [vmem:[#allocation13 + $0x24] sm:$0xf]
    %v3257 = vld [vmem:[#allocation13 + $0x28] sm:$0xf]
    %v3258 = vld [vmem:[#allocation13 + $0x2c] sm:$0xf]
    %v3259 = vld [vmem:[#allocation13 + $0x30] sm:$0xf]
    %v3260 = vld [vmem:[#allocation13 + $0x34] sm:$0xf]
    %v3261 = vld [vmem:[#allocation13 + $0x38] sm:$0xf]
    %v3262 = vld [vmem:[#allocation13 + $0x3c] sm:$0xf]
    %v3279 = vunpack.c.l.b16 %v3247
    %v3280 = vunpack.c.l.b16 %v3248
    %v3281 = vunpack.c.l.b16 %v3249
    %v3282 = vunpack.c.l.b16 %v3250
    %v3283 = vunpack.c.l.b16 %v3251
    %v3284 = vunpack.c.l.b16 %v3252
    %v3285 = vunpack.c.l.b16 %v3253
    %v3286 = vunpack.c.l.b16 %v3254
    %v3287 = vunpack.c.l.b16 %v3255
    %v3288 = vunpack.c.l.b16 %v3256
    %v3289 = vunpack.c.l.b16 %v3257
    %v3290 = vunpack.c.l.b16 %v3258
    %v3291 = vunpack.c.l.b16 %v3259
    %v3292 = vunpack.c.l.b16 %v3260
    %v3293 = vunpack.c.l.b16 %v3261
    %v3294 = vunpack.c.l.b16 %v3262
    %v3295 = vpack.c.b16 %v3280, %v3279
    %v3296 = vpack.c.b16 %v3282, %v3281
    %v3297 = vpack.c.b16 %v3284, %v3283
    %v3298 = vpack.c.b16 %v3286, %v3285
    %v3299 = vpack.c.b16 %v3288, %v3287
    %v3300 = vpack.c.b16 %v3290, %v3289
    %v3301 = vpack.c.b16 %v3292, %v3291
    %v3302 = vpack.c.b16 %v3294, %v3293
    %3311 = vmatprep.subr.bf16.mxu0 0
    %3312 = vmatpush1.bf16.msra.mxu0 %v3295
    %3313 = vmatprep.subr.bf16.mxu0 0
    %3314 = vmatpush1.bf16.msra.mxu0 %v3296
    %3315 = vmatprep.subr.bf16.mxu0 0
    %3316 = vmatpush1.bf16.msra.mxu0 %v3297
    %3317 = vmatprep.subr.bf16.mxu0 0
    %3318 = vmatpush1.bf16.msra.mxu0 %v3298
    %3319 = vmatprep.subr.bf16.mxu0 0
    %3320 = vmatpush1.bf16.msra.mxu0 %v3299
    %3321 = vmatprep.subr.bf16.mxu0 0
    %3322 = vmatpush1.bf16.msra.mxu0 %v3300
    %3323 = vmatprep.subr.bf16.mxu0 0
    %3324 = vmatpush1.bf16.msra.mxu0 %v3301
    %3325 = vmatprep.subr.bf16.mxu0 0
    %3326 = vmatpush1.bf16.msra.mxu0 %v3302
    %3327 = vmatprep.subr.bf16.mxu0 0
    %3328 = vmatpush1.bf16.msra.mxu0 0
    %3329 = vmatprep.subr.bf16.mxu0 0
    %3330 = vmatpush1.bf16.msra.mxu0 0
    %3331 = vmatprep.subr.bf16.mxu0 0
    %3332 = vmatpush1.bf16.msra.mxu0 0
    %3333 = vmatprep.subr.bf16.mxu0 0
    %3334 = vmatpush1.bf16.msra.mxu0 0
    %3335 = vmatprep.subr.bf16.mxu0 0
    %3336 = vmatpush1.bf16.msra.mxu0 0
    %3337 = vmatprep.subr.bf16.mxu0 0
    %3338 = vmatpush1.bf16.msra.mxu0 0
    %3339 = vmatprep.subr.bf16.mxu0 0
    %3340 = vmatpush1.bf16.msra.mxu0 0
    %3341 = vmatprep.subr.bf16.mxu0 0
    %3342 = vmatpush1.bf16.msra.mxu0 0
    %3343 = vmatprep.mubr.bf16.mxu0 0
    %3344 = vmatmul.mubr.bf16.gmra.mrb[0].mxu0 %v3132
    %v3345 = vpop.f32.mrb[0].mxu0
    %v3346 = vadd.f32 0.0, %v3345
    %v3347 = vpop.f32.mrb[0].mxu0
    %v3348 = vpop.f32.mrb[0].mxu0
    %v3349 = vadd.f32 0.0, %v3348
    %v3350 = vpop.f32.mrb[0].mxu0
    %3351 = vmatprep.mubr.bf16.mxu0 0
    %3352 = vmatmul.mubr.bf16.gmra.mrb[0].mxu0 %v3133
    %v3353 = vpop.f32.mrb[0].mxu0
    %v3354 = vadd.f32 0.0, %v3353
    %v3355 = vpop.f32.mrb[0].mxu0
    %v3356 = vpop.f32.mrb[0].mxu0
    %v3357 = vadd.f32 0.0, %v3356
    %v3358 = vpop.f32.mrb[0].mxu0
    %3359 = vdwg.mxu0
    %v3360 = vld [vmem:[#allocation14] sm:$0xf]
    %v3361 = vld [vmem:[#allocation14 + $0x4] sm:$0xf]
    %v3362 = vld [vmem:[#allocation14 + $0x8] sm:$0xf]
    %v3363 = vld [vmem:[#allocation14 + $0xc] sm:$0xf]
    %v3364 = vld [vmem:[#allocation14 + $0x10] sm:$0xf]
    %v3365 = vld [vmem:[#allocation14 + $0x14] sm:$0xf]
    %v3366 = vld [vmem:[#allocation14 + $0x18] sm:$0xf]
    %v3367 = vld [vmem:[#allocation14 + $0x1c] sm:$0xf]
    %v3368 = vld [vmem:[#allocation14 + $0x20] sm:$0xf]
    %v3369 = vld [vmem:[#allocation14 + $0x24] sm:$0xf]
    %v3370 = vld [vmem:[#allocation14 + $0x28] sm:$0xf]
    %v3371 = vld [vmem:[#allocation14 + $0x2c] sm:$0xf]
    %v3372 = vld [vmem:[#allocation14 + $0x30] sm:$0xf]
    %v3373 = vld [vmem:[#allocation14 + $0x34] sm:$0xf]
    %v3374 = vld [vmem:[#allocation14 + $0x38] sm:$0xf]
    %v3375 = vld [vmem:[#allocation14 + $0x3c] sm:$0xf]
    %v3392 = vunpack.c.l.b16 %v3360
    %v3393 = vunpack.c.l.b16 %v3361
    %v3394 = vunpack.c.l.b16 %v3362
    %v3395 = vunpack.c.l.b16 %v3363
    %v3396 = vunpack.c.l.b16 %v3364
    %v3397 = vunpack.c.l.b16 %v3365
    %v3398 = vunpack.c.l.b16 %v3366
    %v3399 = vunpack.c.l.b16 %v3367
    %v3400 = vunpack.c.l.b16 %v3368
    %v3401 = vunpack.c.l.b16 %v3369
    %v3402 = vunpack.c.l.b16 %v3370
    %v3403 = vunpack.c.l.b16 %v3371
    %v3404 = vunpack.c.l.b16 %v3372
    %v3405 = vunpack.c.l.b16 %v3373
    %v3406 = vunpack.c.l.b16 %v3374
    %v3407 = vunpack.c.l.b16 %v3375
    %v3408 = vpack.c.b16 %v3393, %v3392
    %v3409 = vpack.c.b16 %v3395, %v3394
    %v3410 = vpack.c.b16 %v3397, %v3396
    %v3411 = vpack.c.b16 %v3399, %v3398
    %v3412 = vpack.c.b16 %v3401, %v3400
    %v3413 = vpack.c.b16 %v3403, %v3402
    %v3414 = vpack.c.b16 %v3405, %v3404
    %v3415 = vpack.c.b16 %v3407, %v3406
    %3424 = vmatprep.subr.bf16.mxu0 0
    %3425 = vmatpush1.bf16.msra.mxu0 %v3408
    %3426 = vmatprep.subr.bf16.mxu0 0
    %3427 = vmatpush1.bf16.msra.mxu0 %v3409
    %3428 = vmatprep.subr.bf16.mxu0 0
    %3429 = vmatpush1.bf16.msra.mxu0 %v3410
    %3430 = vmatprep.subr.bf16.mxu0 0
    %3431 = vmatpush1.bf16.msra.mxu0 %v3411
    %3432 = vmatprep.subr.bf16.mxu0 0
    %3433 = vmatpush1.bf16.msra.mxu0 %v3412
    %3434 = vmatprep.subr.bf16.mxu0 0
    %3435 = vmatpush1.bf16.msra.mxu0 %v3413
    %3436 = vmatprep.subr.bf16.mxu0 0
    %3437 = vmatpush1.bf16.msra.mxu0 %v3414
    %3438 = vmatprep.subr.bf16.mxu0 0
    %3439 = vmatpush1.bf16.msra.mxu0 %v3415
    %3440 = vmatprep.subr.bf16.mxu0 0
    %3441 = vmatpush1.bf16.msra.mxu0 0
    %3442 = vmatprep.subr.bf16.mxu0 0
    %3443 = vmatpush1.bf16.msra.mxu0 0
    %3444 = vmatprep.subr.bf16.mxu0 0
    %3445 = vmatpush1.bf16.msra.mxu0 0
    %3446 = vmatprep.subr.bf16.mxu0 0
    %3447 = vmatpush1.bf16.msra.mxu0 0
    %3448 = vmatprep.subr.bf16.mxu0 0
    %3449 = vmatpush1.bf16.msra.mxu0 0
    %3450 = vmatprep.subr.bf16.mxu0 0
    %3451 = vmatpush1.bf16.msra.mxu0 0
    %3452 = vmatprep.subr.bf16.mxu0 0
    %3453 = vmatpush1.bf16.msra.mxu0 0
    %3454 = vmatprep.subr.bf16.mxu0 0
    %3455 = vmatpush1.bf16.msra.mxu0 0
    %3456 = vmatprep.mubr.bf16.mxu0 0
    %3457 = vmatmul.mubr.bf16.gmra.mrb[0].mxu0 %v3132
    %v3458 = vpop.f32.mrb[0].mxu0
    %v3459 = vadd.f32 0.0, %v3458
    %v3460 = vpop.f32.mrb[0].mxu0
    %v3461 = vpop.f32.mrb[0].mxu0
    %v3462 = vadd.f32 0.0, %v3461
    %v3463 = vpop.f32.mrb[0].mxu0
    %3464 = vmatprep.mubr.bf16.mxu0 0
    %3465 = vmatmul.mubr.bf16.gmra.mrb[0].mxu0 %v3133
    %v3466 = vpop.f32.mrb[0].mxu0
    %v3467 = vadd.f32 0.0, %v3466
    %v3468 = vpop.f32.mrb[0].mxu0
    %v3469 = vpop.f32.mrb[0].mxu0
    %v3470 = vadd.f32 0.0, %v3469
    %v3471 = vpop.f32.mrb[0].mxu0
    %3472 = vdwg.mxu0
    %v3474 = vsel %vm1004, %v3233, 0
    %v3477 = vsel %vm1004, %v3236, 0
    %v3480 = vsel %vm1004, %v3241, 0
    %v3483 = vsel %vm1004, %v3244, 0
    %v3486 = vsel %vm1004, %v3346, 0
    %v3489 = vsel %vm1004, %v3349, 0
    %v3492 = vsel %vm1004, %v3354, 0
    %v3495 = vsel %vm1004, %v3357, 0
    %3497 = vmatprep.subr.mxu0 0.0
    %3498 = vmatpush1.xpose.msra.mxu0 %v3486
    %3499 = vmatprep.subr.mxu0 0.0
    %3500 = vmatpush1.xpose.msra.mxu0 %v3489
    %3501 = vmatprep.subr.mxu0 0.0
    %3502 = vmatpush1.xpose.msra.mxu0 %v3492
    %3503 = vmatprep.subr.mxu0 0.0
    %3504 = vmatpush1.xpose.msra.mxu0 %v3495
    %3505 = vmatprep.subr.mxu0 0.0
    %3506 = vmatpush1.xpose.msra.mxu0 0.0
    %3507 = vmatprep.subr.mxu0 0.0
    %3508 = vmatpush1.xpose.msra.mxu0 0.0
    %3509 = vmatprep.subr.mxu0 0.0
    %3510 = vmatpush1.xpose.msra.mxu0 0.0
    %3511 = vmatprep.subr.mxu0 0.0
    %3512 = vmatpush1.xpose.msra.mxu0 0.0
    %3513 = vmatprep.subr.mxu0 0.0
    %3514 = vmatpush1.xpose.msra.mxu0 0.0
    %3515 = vmatprep.subr.mxu0 0.0
    %3516 = vmatpush1.xpose.msra.mxu0 0.0
    %3517 = vmatprep.subr.mxu0 0.0
    %3518 = vmatpush1.xpose.msra.mxu0 0.0
    %3519 = vmatprep.subr.mxu0 0.0
    %3520 = vmatpush1.xpose.msra.mxu0 0.0
    %3521 = vmatprep.subr.mxu0 0.0
    %3522 = vmatpush1.xpose.msra.mxu0 0.0
    %3523 = vmatprep.subr.mxu0 0.0
    %3524 = vmatpush1.xpose.msra.mxu0 0.0
    %3525 = vmatprep.subr.mxu0 0.0
    %3526 = vmatpush1.xpose.msra.mxu0 0.0
    %3527 = vmatprep.subr.mxu0 0.0
    %3528 = vmatpush1.xpose.msra.mxu0 0.0
    %3529 = vmatprep.subr.mxu0 0.0
    %3530 = vmatpush1.xpose.msra.mxu0 0.0
    %3531 = vmatprep.subr.mxu0 0.0
    %3532 = vmatpush1.xpose.msra.mxu0 0.0
    %3533 = vmatprep.subr.mxu0 0.0
    %3534 = vmatpush1.xpose.msra.mxu0 0.0
    %3535 = vmatprep.subr.mxu0 0.0
    %3536 = vmatpush1.xpose.msra.mxu0 0.0
    %3537 = vmatprep.subr.mxu0 0.0
    %3538 = vmatpush1.xpose.msra.mxu0 0.0
    %3539 = vmatprep.subr.mxu0 0.0
    %3540 = vmatpush1.xpose.msra.mxu0 0.0
    %3541 = vmatprep.subr.mxu0 0.0
    %3542 = vmatpush1.xpose.msra.mxu0 0.0
    %3543 = vmatprep.subr.mxu0 0.0
    %3544 = vmatpush1.xpose.msra.mxu0 0.0
    %3545 = vmatprep.subr.mxu0 0.0
    %3546 = vmatpush1.xpose.msra.mxu0 0.0
    %3547 = vmatprep.subr.mxu0 0.0
    %3548 = vmatpush1.xpose.msra.mxu0 0.0
    %3549 = vmatprep.subr.mxu0 0.0
    %3550 = vmatpush1.xpose.msra.mxu0 0.0
    %3551 = vmatprep.subr.mxu0 0.0
    %3552 = vmatpush1.xpose.msra.mxu0 0.0
    %3553 = vmatprep.subr.mxu0 0.0
    %3554 = vmatpush1.xpose.msra.mxu0 0.0
    %3555 = vmatprep.subr.mxu0 0.0
    %3556 = vmatpush1.xpose.msra.mxu0 0.0
    %3557 = vmatprep.subr.mxu0 0.0
    %3558 = vmatpush1.xpose.msra.mxu0 0.0
    %3559 = vmatprep.subr.mxu0 0.0
    %3560 = vmatpush1.xpose.msra.mxu0 0.0
    %3561 = vmatprep.mubr.f32.mxu0 0.0
    %3562 = vmatmul.mubr.f32.gmra.mrb[0].mxu0 %v3474
    %v3563 = vpop.f32.mrb[0].mxu0
    %v3564 = vadd.f32 0.0, %v3563
    %v3565 = vpop.f32.mrb[0].mxu0
    %3566 = vmatprep.mubr.f32.mxu0 0.0
    %3567 = vmatmul.mubr.f32.gmra.mrb[0].mxu0 %v3477
    %v3568 = vpop.f32.mrb[0].mxu0
    %v3569 = vadd.f32 0.0, %v3568
    %v3570 = vpop.f32.mrb[0].mxu0
    %3571 = vmatprep.mubr.f32.mxu0 0.0
    %3572 = vmatmul.mubr.f32.gmra.mrb[0].mxu0 %v3480
    %v3573 = vpop.f32.mrb[0].mxu0
    %v3574 = vadd.f32 0.0, %v3573
    %v3575 = vpop.f32.mrb[0].mxu0
    %3576 = vmatprep.mubr.f32.mxu0 0.0
    %3577 = vmatmul.mubr.f32.gmra.mrb[0].mxu0 %v3483
    %v3578 = vpop.f32.mrb[0].mxu0
    %v3579 = vadd.f32 0.0, %v3578
    %v3580 = vpop.f32.mrb[0].mxu0
    %3581 = vdwg.mxu0
    %v3582 = vmul.f32 %v3564, 0.17677669
    %v3583 = vmul.f32 %v3569, 0.17677669
    %v3584 = vmul.f32 %v3574, 0.17677669
    %v3585 = vmul.f32 %v3579, 0.17677669
    %v3586 = vadd.f32 %v3582, %v592
    %v3587 = vadd.f32 %v3583, %v593
    %v3588 = vadd.f32 %v3584, %v594
    %v3589 = vadd.f32 %v3585, %v595
    %v3590 = vsel %vm1004, %v3586, -inf
    %3591 = vmax.xlane.f32.xlu0 %v3590
    %v3592 = vpop.xlane.xlu0 %3591
    %v3593 = vsel %vm1004, %v3587, -inf
    %3594 = vmax.xlane.f32.xlu0 %v3593
    %v3595 = vpop.xlane.xlu0 %3594
    %v3596 = vsel %vm1004, %v3588, -inf
    %3597 = vmax.xlane.f32.xlu0 %v3596
    %v3598 = vpop.xlane.xlu0 %3597
    %v3599 = vsel %vm1004, %v3589, -inf
    %3600 = vmax.xlane.f32.xlu0 %v3599
    %v3601 = vpop.xlane.xlu0 %3600
    %v3602 = vsub.f32 %v3586, %v3592
    %v3603 = vsub.f32 %v3587, %v3595
    %v3604 = vsub.f32 %v3588, %v3598
    %v3605 = vsub.f32 %v3589, %v3601
    %v3606 = vmul.f32 %v3602, 1.442695
    %v3607 = vpow.pop %v3606
    %v3608 = vmul.f32 %v3603, 1.442695
    %v3609 = vpow.pop %v3608
    %v3610 = vmul.f32 %v3604, 1.442695
    %v3611 = vpow.pop %v3610
    %v3612 = vmul.f32 %v3605, 1.442695
    %v3613 = vpow.pop %v3612
    %v3614 = vsel %vm1004, %v3607, 0.0
    %3615 = vadd.xlane.f32.xlu0 %v3614
    %v3616 = vpop.xlane.xlu0 %3615
    %v3617 = vsel %vm1004, %v3609, 0.0
    %3618 = vadd.xlane.f32.xlu0 %v3617
    %v3619 = vpop.xlane.xlu0 %3618
    %v3620 = vsel %vm1004, %v3611, 0.0
    %3621 = vadd.xlane.f32.xlu0 %v3620
    %v3622 = vpop.xlane.xlu0 %3621
    %v3623 = vsel %vm1004, %v3613, 0.0
    %3624 = vadd.xlane.f32.xlu0 %v3623
    %v3625 = vpop.xlane.xlu0 %3624
    %v3626 = vrcp.pop %v3616
    %v3627 = vrcp.pop %v3619
    %v3628 = vrcp.pop %v3622
    %v3629 = vrcp.pop %v3625
    %v3630 = vmul.f32 %v3607, %v3626
    %v3631 = vmul.f32 %v3609, %v3627
    %v3632 = vmul.f32 %v3611, %v3628
    %v3633 = vmul.f32 %v3613, %v3629
    %v3635 = vsel %vm1004, %v3630, 0
    %v3638 = vsel %vm1004, %v3631, 0
    %v3641 = vsel %vm1004, %v3632, 0
    %v3644 = vsel %vm1004, %v3633, 0
    %3646 = vmatprep.subr.mxu0 0.0
    %3647 = vmatpush1.msra.mxu0 %v3459
    %3648 = vmatprep.subr.mxu0 0.0
    %3649 = vmatpush1.msra.mxu0 %v3462
    %3650 = vmatprep.subr.mxu0 0.0
    %3651 = vmatpush1.msra.mxu0 %v3467
    %3652 = vmatprep.subr.mxu0 0.0
    %3653 = vmatpush1.msra.mxu0 %v3470
    %3654 = vmatprep.subr.mxu0 0.0
    %3655 = vmatpush1.msra.mxu0 0.0
    %3656 = vmatprep.subr.mxu0 0.0
    %3657 = vmatpush1.msra.mxu0 0.0
    %3658 = vmatprep.subr.mxu0 0.0
    %3659 = vmatpush1.msra.mxu0 0.0
    %3660 = vmatprep.subr.mxu0 0.0
    %3661 = vmatpush1.msra.mxu0 0.0
    %3662 = vmatprep.subr.mxu0 0.0
    %3663 = vmatpush1.msra.mxu0 0.0
    %3664 = vmatprep.subr.mxu0 0.0
    %3665 = vmatpush1.msra.mxu0 0.0
    %3666 = vmatprep.subr.mxu0 0.0
    %3667 = vmatpush1.msra.mxu0 0.0
    %3668 = vmatprep.subr.mxu0 0.0
    %3669 = vmatpush1.msra.mxu0 0.0
    %3670 = vmatprep.subr.mxu0 0.0
    %3671 = vmatpush1.msra.mxu0 0.0
    %3672 = vmatprep.subr.mxu0 0.0
    %3673 = vmatpush1.msra.mxu0 0.0
    %3674 = vmatprep.subr.mxu0 0.0
    %3675 = vmatpush1.msra.mxu0 0.0
    %3676 = vmatprep.subr.mxu0 0.0
    %3677 = vmatpush1.msra.mxu0 0.0
    %3678 = vmatprep.subr.mxu0 0.0
    %3679 = vmatpush1.msra.mxu0 0.0
    %3680 = vmatprep.subr.mxu0 0.0
    %3681 = vmatpush1.msra.mxu0 0.0
    %3682 = vmatprep.subr.mxu0 0.0
    %3683 = vmatpush1.msra.mxu0 0.0
    %3684 = vmatprep.subr.mxu0 0.0
    %3685 = vmatpush1.msra.mxu0 0.0
    %3686 = vmatprep.subr.mxu0 0.0
    %3687 = vmatpush1.msra.mxu0 0.0
    %3688 = vmatprep.subr.mxu0 0.0
    %3689 = vmatpush1.msra.mxu0 0.0
    %3690 = vmatprep.subr.mxu0 0.0
    %3691 = vmatpush1.msra.mxu0 0.0
    %3692 = vmatprep.subr.mxu0 0.0
    %3693 = vmatpush1.msra.mxu0 0.0
    %3694 = vmatprep.subr.mxu0 0.0
    %3695 = vmatpush1.msra.mxu0 0.0
    %3696 = vmatprep.subr.mxu0 0.0
    %3697 = vmatpush1.msra.mxu0 0.0
    %3698 = vmatprep.subr.mxu0 0.0
    %3699 = vmatpush1.msra.mxu0 0.0
    %3700 = vmatprep.subr.mxu0 0.0
    %3701 = vmatpush1.msra.mxu0 0.0
    %3702 = vmatprep.subr.mxu0 0.0
    %3703 = vmatpush1.msra.mxu0 0.0
    %3704 = vmatprep.subr.mxu0 0.0
    %3705 = vmatpush1.msra.mxu0 0.0
    %3706 = vmatprep.subr.mxu0 0.0
    %3707 = vmatpush1.msra.mxu0 0.0
    %3708 = vmatprep.subr.mxu0 0.0
    %3709 = vmatpush1.msra.mxu0 0.0
    %3710 = vmatprep.mubr.f32.mxu0 0.0
    %3711 = vmatmul.mubr.f32.gmra.mrb[0].mxu0 %v3635
    %v3712 = vpop.f32.mrb[0].mxu0
    %v3713 = vadd.f32 0.0, %v3712
    %v3714 = vpop.f32.mrb[0].mxu0
    %3715 = vmatprep.mubr.f32.mxu0 0.0
    %3716 = vmatmul.mubr.f32.gmra.mrb[0].mxu0 %v3638
    %v3717 = vpop.f32.mrb[0].mxu0
    %v3718 = vadd.f32 0.0, %v3717
    %v3719 = vpop.f32.mrb[0].mxu0
    %3720 = vmatprep.mubr.f32.mxu0 0.0
    %3721 = vmatmul.mubr.f32.gmra.mrb[0].mxu0 %v3641
    %v3722 = vpop.f32.mrb[0].mxu0
    %v3723 = vadd.f32 0.0, %v3722
    %v3724 = vpop.f32.mrb[0].mxu0
    %3725 = vmatprep.mubr.f32.mxu0 0.0
    %3726 = vmatmul.mubr.f32.gmra.mrb[0].mxu0 %v3644
    %v3727 = vpop.f32.mrb[0].mxu0
    %v3728 = vadd.f32 0.0, %v3727
    %v3729 = vpop.f32.mrb[0].mxu0
    %3730 = vdwg.mxu0
    %3731 = vrot.lane.b32.xlu0 %v3233, 96
    %v3732 = vpop.permute.xlu0 %3731
    %3733 = vrot.lane.b32.xlu0 %v3236, 96
    %v3734 = vpop.permute.xlu0 %3733
    %3735 = vrot.lane.b32.xlu0 %v3241, 96
    %v3736 = vpop.permute.xlu0 %3735
    %3737 = vrot.lane.b32.xlu0 %v3244, 96
    %v3738 = vpop.permute.xlu0 %3737
    %3739 = vrot.lane.b32.xlu0 %v3346, 96
    %v3740 = vpop.permute.xlu0 %3739
    %3741 = vrot.lane.b32.xlu0 %v3349, 96
    %v3742 = vpop.permute.xlu0 %3741
    %3743 = vrot.lane.b32.xlu0 %v3354, 96
    %v3744 = vpop.permute.xlu0 %3743
    %3745 = vrot.lane.b32.xlu0 %v3357, 96
    %v3746 = vpop.permute.xlu0 %3745
    %v3747 = vsel %vm1004, %v3732, 0
    %v3749 = vsel %vm1004, %v3734, 0
    %v3751 = vsel %vm1004, %v3736, 0
    %v3753 = vsel %vm1004, %v3738, 0
    %v3755 = vsel %vm1004, %v3740, 0
    %v3757 = vsel %vm1004, %v3742, 0
    %v3759 = vsel %vm1004, %v3744, 0
    %v3761 = vsel %vm1004, %v3746, 0
    %3763 = vmatprep.subr.mxu0 0.0
    %3764 = vmatpush1.xpose.msra.mxu0 %v3755
    %3765 = vmatprep.subr.mxu0 0.0
    %3766 = vmatpush1.xpose.msra.mxu0 %v3757
    %3767 = vmatprep.subr.mxu0 0.0
    %3768 = vmatpush1.xpose.msra.mxu0 %v3759
    %3769 = vmatprep.subr.mxu0 0.0
    %3770 = vmatpush1.xpose.msra.mxu0 %v3761
    %3771 = vmatprep.subr.mxu0 0.0
    %3772 = vmatpush1.xpose.msra.mxu0 0.0
    %3773 = vmatprep.subr.mxu0 0.0
    %3774 = vmatpush1.xpose.msra.mxu0 0.0
    %3775 = vmatprep.subr.mxu0 0.0
    %3776 = vmatpush1.xpose.msra.mxu0 0.0
    %3777 = vmatprep.subr.mxu0 0.0
    %3778 = vmatpush1.xpose.msra.mxu0 0.0
    %3779 = vmatprep.subr.mxu0 0.0
    %3780 = vmatpush1.xpose.msra.mxu0 0.0
    %3781 = vmatprep.subr.mxu0 0.0
    %3782 = vmatpush1.xpose.msra.mxu0 0.0
    %3783 = vmatprep.subr.mxu0 0.0
    %3784 = vmatpush1.xpose.msra.mxu0 0.0
    %3785 = vmatprep.subr.mxu0 0.0
    %3786 = vmatpush1.xpose.msra.mxu0 0.0
    %3787 = vmatprep.subr.mxu0 0.0
    %3788 = vmatpush1.xpose.msra.mxu0 0.0
    %3789 = vmatprep.subr.mxu0 0.0
    %3790 = vmatpush1.xpose.msra.mxu0 0.0
    %3791 = vmatprep.subr.mxu0 0.0
    %3792 = vmatpush1.xpose.msra.mxu0 0.0
    %3793 = vmatprep.subr.mxu0 0.0
    %3794 = vmatpush1.xpose.msra.mxu0 0.0
    %3795 = vmatprep.subr.mxu0 0.0
    %3796 = vmatpush1.xpose.msra.mxu0 0.0
    %3797 = vmatprep.subr.mxu0 0.0
    %3798 = vmatpush1.xpose.msra.mxu0 0.0
    %3799 = vmatprep.subr.mxu0 0.0
    %3800 = vmatpush1.xpose.msra.mxu0 0.0
    %3801 = vmatprep.subr.mxu0 0.0
    %3802 = vmatpush1.xpose.msra.mxu0 0.0
    %3803 = vmatprep.subr.mxu0 0.0
    %3804 = vmatpush1.xpose.msra.mxu0 0.0
    %3805 = vmatprep.subr.mxu0 0.0
    %3806 = vmatpush1.xpose.msra.mxu0 0.0
    %3807 = vmatprep.subr.mxu0 0.0
    %3808 = vmatpush1.xpose.msra.mxu0 0.0
    %3809 = vmatprep.subr.mxu0 0.0
    %3810 = vmatpush1.xpose.msra.mxu0 0.0
    %3811 = vmatprep.subr.mxu0 0.0
    %3812 = vmatpush1.xpose.msra.mxu0 0.0
    %3813 = vmatprep.subr.mxu0 0.0
    %3814 = vmatpush1.xpose.msra.mxu0 0.0
    %3815 = vmatprep.subr.mxu0 0.0
    %3816 = vmatpush1.xpose.msra.mxu0 0.0
    %3817 = vmatprep.subr.mxu0 0.0
    %3818 = vmatpush1.xpose.msra.mxu0 0.0
    %3819 = vmatprep.subr.mxu0 0.0
    %3820 = vmatpush1.xpose.msra.mxu0 0.0
    %3821 = vmatprep.subr.mxu0 0.0
    %3822 = vmatpush1.xpose.msra.mxu0 0.0
    %3823 = vmatprep.subr.mxu0 0.0
    %3824 = vmatpush1.xpose.msra.mxu0 0.0
    %3825 = vmatprep.subr.mxu0 0.0
    %3826 = vmatpush1.xpose.msra.mxu0 0.0
    %3827 = vmatprep.mubr.f32.mxu0 0.0
    %3828 = vmatmul.mubr.f32.gmra.mrb[0].mxu0 %v3747
    %v3829 = vpop.f32.mrb[0].mxu0
    %v3830 = vadd.f32 0.0, %v3829
    %v3831 = vpop.f32.mrb[0].mxu0
    %3832 = vmatprep.mubr.f32.mxu0 0.0
    %3833 = vmatmul.mubr.f32.gmra.mrb[0].mxu0 %v3749
    %v3834 = vpop.f32.mrb[0].mxu0
    %v3835 = vadd.f32 0.0, %v3834
    %v3836 = vpop.f32.mrb[0].mxu0
    %3837 = vmatprep.mubr.f32.mxu0 0.0
    %3838 = vmatmul.mubr.f32.gmra.mrb[0].mxu0 %v3751
    %v3839 = vpop.f32.mrb[0].mxu0
    %v3840 = vadd.f32 0.0, %v3839
    %v3841 = vpop.f32.mrb[0].mxu0
    %3842 = vmatprep.mubr.f32.mxu0 0.0
    %3843 = vmatmul.mubr.f32.gmra.mrb[0].mxu0 %v3753
    %v3844 = vpop.f32.mrb[0].mxu0
    %v3845 = vadd.f32 0.0, %v3844
    %v3846 = vpop.f32.mrb[0].mxu0
    %3847 = vdwg.mxu0
    %v3848 = vmul.f32 %v3830, 0.17677669
    %v3849 = vmul.f32 %v3835, 0.17677669
    %v3850 = vmul.f32 %v3840, 0.17677669
    %v3851 = vmul.f32 %v3845, 0.17677669
    %v3852 = vadd.f32 %v3848, %v592
    %v3853 = vadd.f32 %v3849, %v593
    %v3854 = vadd.f32 %v3850, %v594
    %v3855 = vadd.f32 %v3851, %v595
    %v3856 = vsel %vm1004, %v3852, -inf
    %3857 = vmax.xlane.f32.xlu0 %v3856
    %v3858 = vpop.xlane.xlu0 %3857
    %v3859 = vsel %vm1004, %v3853, -inf
    %3860 = vmax.xlane.f32.xlu0 %v3859
    %v3861 = vpop.xlane.xlu0 %3860
    %v3862 = vsel %vm1004, %v3854, -inf
    %3863 = vmax.xlane.f32.xlu0 %v3862
    %v3864 = vpop.xlane.xlu0 %3863
    %v3865 = vsel %vm1004, %v3855, -inf
    %3866 = vmax.xlane.f32.xlu0 %v3865
    %v3867 = vpop.xlane.xlu0 %3866
    %v3868 = vsub.f32 %v3852, %v3858
    %v3869 = vsub.f32 %v3853, %v3861
    %v3870 = vsub.f32 %v3854, %v3864
    %v3871 = vsub.f32 %v3855, %v3867
    %v3872 = vmul.f32 %v3868, 1.442695
    %v3873 = vpow.pop %v3872
    %v3874 = vmul.f32 %v3869, 1.442695
    %v3875 = vpow.pop %v3874
    %v3876 = vmul.f32 %v3870, 1.442695
    %v3877 = vpow.pop %v3876
    %v3878 = vmul.f32 %v3871, 1.442695
    %v3879 = vpow.pop %v3878
    %v3880 = vsel %vm1004, %v3873, 0.0
    %3881 = vadd.xlane.f32.xlu0 %v3880
    %v3882 = vpop.xlane.xlu0 %3881
    %v3883 = vsel %vm1004, %v3875, 0.0
    %3884 = vadd.xlane.f32.xlu0 %v3883
    %v3885 = vpop.xlane.xlu0 %3884
    %v3886 = vsel %vm1004, %v3877, 0.0
    %3887 = vadd.xlane.f32.xlu0 %v3886
    %v3888 = vpop.xlane.xlu0 %3887
    %v3889 = vsel %vm1004, %v3879, 0.0
    %3890 = vadd.xlane.f32.xlu0 %v3889
    %v3891 = vpop.xlane.xlu0 %3890
    %v3892 = vrcp.pop %v3882
    %v3893 = vrcp.pop %v3885
    %v3894 = vrcp.pop %v3888
    %v3895 = vrcp.pop %v3891
    %v3896 = vmul.f32 %v3873, %v3892
    %v3897 = vmul.f32 %v3875, %v3893
    %v3898 = vmul.f32 %v3877, %v3894
    %v3899 = vmul.f32 %v3879, %v3895
    %3904 = vrot.lane.b32.xlu0 %v3459, 96
    %v3905 = vpop.permute.xlu0 %3904
    %3906 = vrot.lane.b32.xlu0 %v3462, 96
    %v3907 = vpop.permute.xlu0 %3906
    %3908 = vrot.lane.b32.xlu0 %v3467, 96
    %v3909 = vpop.permute.xlu0 %3908
    %3910 = vrot.lane.b32.xlu0 %v3470, 96
    %v3911 = vpop.permute.xlu0 %3910
    %v3917 = vsel %vm1004, %v3896, 0
    %v3920 = vsel %vm1004, %v3897, 0
    %v3923 = vsel %vm1004, %v3898, 0
    %v3926 = vsel %vm1004, %v3899, 0
    %3928 = vmatprep.subr.mxu0 0.0
    %3929 = vmatpush1.msra.mxu0 %v3905
    %3930 = vmatprep.subr.mxu0 0.0
    %3931 = vmatpush1.msra.mxu0 %v3907
    %3932 = vmatprep.subr.mxu0 0.0
    %3933 = vmatpush1.msra.mxu0 %v3909
    %3934 = vmatprep.subr.mxu0 0.0
    %3935 = vmatpush1.msra.mxu0 %v3911
    %3936 = vmatprep.subr.mxu0 0.0
    %3937 = vmatpush1.msra.mxu0 0.0
    %3938 = vmatprep.subr.mxu0 0.0
    %3939 = vmatpush1.msra.mxu0 0.0
    %3940 = vmatprep.subr.mxu0 0.0
    %3941 = vmatpush1.msra.mxu0 0.0
    %3942 = vmatprep.subr.mxu0 0.0
    %3943 = vmatpush1.msra.mxu0 0.0
    %3944 = vmatprep.subr.mxu0 0.0
    %3945 = vmatpush1.msra.mxu0 0.0
    %3946 = vmatprep.subr.mxu0 0.0
    %3947 = vmatpush1.msra.mxu0 0.0
    %3948 = vmatprep.subr.mxu0 0.0
    %3949 = vmatpush1.msra.mxu0 0.0
    %3950 = vmatprep.subr.mxu0 0.0
    %3951 = vmatpush1.msra.mxu0 0.0
    %3952 = vmatprep.subr.mxu0 0.0
    %3953 = vmatpush1.msra.mxu0 0.0
    %3954 = vmatprep.subr.mxu0 0.0
    %3955 = vmatpush1.msra.mxu0 0.0
    %3956 = vmatprep.subr.mxu0 0.0
    %3957 = vmatpush1.msra.mxu0 0.0
    %3958 = vmatprep.subr.mxu0 0.0
    %3959 = vmatpush1.msra.mxu0 0.0
    %3960 = vmatprep.subr.mxu0 0.0
    %3961 = vmatpush1.msra.mxu0 0.0
    %3962 = vmatprep.subr.mxu0 0.0
    %3963 = vmatpush1.msra.mxu0 0.0
    %3964 = vmatprep.subr.mxu0 0.0
    %3965 = vmatpush1.msra.mxu0 0.0
    %3966 = vmatprep.subr.mxu0 0.0
    %3967 = vmatpush1.msra.mxu0 0.0
    %3968 = vmatprep.subr.mxu0 0.0
    %3969 = vmatpush1.msra.mxu0 0.0
    %3970 = vmatprep.subr.mxu0 0.0
    %3971 = vmatpush1.msra.mxu0 0.0
    %3972 = vmatprep.subr.mxu0 0.0
    %3973 = vmatpush1.msra.mxu0 0.0
    %3974 = vmatprep.subr.mxu0 0.0
    %3975 = vmatpush1.msra.mxu0 0.0
    %3976 = vmatprep.subr.mxu0 0.0
    %3977 = vmatpush1.msra.mxu0 0.0
    %3978 = vmatprep.subr.mxu0 0.0
    %3979 = vmatpush1.msra.mxu0 0.0
    %3980 = vmatprep.subr.mxu0 0.0
    %3981 = vmatpush1.msra.mxu0 0.0
    %3982 = vmatprep.subr.mxu0 0.0
    %3983 = vmatpush1.msra.mxu0 0.0
    %3984 = vmatprep.subr.mxu0 0.0
    %3985 = vmatpush1.msra.mxu0 0.0
    %3986 = vmatprep.subr.mxu0 0.0
    %3987 = vmatpush1.msra.mxu0 0.0
    %3988 = vmatprep.subr.mxu0 0.0
    %3989 = vmatpush1.msra.mxu0 0.0
    %3990 = vmatprep.subr.mxu0 0.0
    %3991 = vmatpush1.msra.mxu0 0.0
    %3992 = vmatprep.mubr.f32.mxu0 0.0
    %3993 = vmatmul.mubr.f32.gmra.mrb[0].mxu0 %v3917
    %v3994 = vpop.f32.mrb[0].mxu0
    %v3995 = vadd.f32 0.0, %v3994
    %v3996 = vpop.f32.mrb[0].mxu0
    %3997 = vmatprep.mubr.f32.mxu0 0.0
    %3998 = vmatmul.mubr.f32.gmra.mrb[0].mxu0 %v3920
    %v3999 = vpop.f32.mrb[0].mxu0
    %v4000 = vadd.f32 0.0, %v3999
    %v4001 = vpop.f32.mrb[0].mxu0
    %4002 = vmatprep.mubr.f32.mxu0 0.0
    %4003 = vmatmul.mubr.f32.gmra.mrb[0].mxu0 %v3923
    %v4004 = vpop.f32.mrb[0].mxu0
    %v4005 = vadd.f32 0.0, %v4004
    %v4006 = vpop.f32.mrb[0].mxu0
    %4007 = vmatprep.mubr.f32.mxu0 0.0
    %4008 = vmatmul.mubr.f32.gmra.mrb[0].mxu0 %v3926
    %v4009 = vpop.f32.mrb[0].mxu0
    %v4010 = vadd.f32 0.0, %v4009
    %v4011 = vpop.f32.mrb[0].mxu0
    %4012 = vdwg.mxu0
    %4013 = vrot.lane.b32.xlu0 %v3233, 64
    %v4014 = vpop.permute.xlu0 %4013
    %4015 = vrot.lane.b32.xlu0 %v3236, 64
    %v4016 = vpop.permute.xlu0 %4015
    %4017 = vrot.lane.b32.xlu0 %v3241, 64
    %v4018 = vpop.permute.xlu0 %4017
    %4019 = vrot.lane.b32.xlu0 %v3244, 64
    %v4020 = vpop.permute.xlu0 %4019
    %4021 = vrot.lane.b32.xlu0 %v3346, 64
    %v4022 = vpop.permute.xlu0 %4021
    %4023 = vrot.lane.b32.xlu0 %v3349, 64
    %v4024 = vpop.permute.xlu0 %4023
    %4025 = vrot.lane.b32.xlu0 %v3354, 64
    %v4026 = vpop.permute.xlu0 %4025
    %4027 = vrot.lane.b32.xlu0 %v3357, 64
    %v4028 = vpop.permute.xlu0 %4027
    %v4029 = vsel %vm1004, %v4014, 0
    %v4031 = vsel %vm1004, %v4016, 0
    %v4033 = vsel %vm1004, %v4018, 0
    %v4035 = vsel %vm1004, %v4020, 0
    %v4037 = vsel %vm1004, %v4022, 0
    %v4039 = vsel %vm1004, %v4024, 0
    %v4041 = vsel %vm1004, %v4026, 0
    %v4043 = vsel %vm1004, %v4028, 0
    %4045 = vmatprep.subr.mxu0 0.0
    %4046 = vmatpush1.xpose.msra.mxu0 %v4037
    %4047 = vmatprep.subr.mxu0 0.0
    %4048 = vmatpush1.xpose.msra.mxu0 %v4039
    %4049 = vmatprep.subr.mxu0 0.0
    %4050 = vmatpush1.xpose.msra.mxu0 %v4041
    %4051 = vmatprep.subr.mxu0 0.0
    %4052 = vmatpush1.xpose.msra.mxu0 %v4043
    %4053 = vmatprep.subr.mxu0 0.0
    %4054 = vmatpush1.xpose.msra.mxu0 0.0
    %4055 = vmatprep.subr.mxu0 0.0
    %4056 = vmatpush1.xpose.msra.mxu0 0.0
    %4057 = vmatprep.subr.mxu0 0.0
    %4058 = vmatpush1.xpose.msra.mxu0 0.0
    %4059 = vmatprep.subr.mxu0 0.0
    %4060 = vmatpush1.xpose.msra.mxu0 0.0
    %4061 = vmatprep.subr.mxu0 0.0
    %4062 = vmatpush1.xpose.msra.mxu0 0.0
    %4063 = vmatprep.subr.mxu0 0.0
    %4064 = vmatpush1.xpose.msra.mxu0 0.0
    %4065 = vmatprep.subr.mxu0 0.0
    %4066 = vmatpush1.xpose.msra.mxu0 0.0
    %4067 = vmatprep.subr.mxu0 0.0
    %4068 = vmatpush1.xpose.msra.mxu0 0.0
    %4069 = vmatprep.subr.mxu0 0.0
    %4070 = vmatpush1.xpose.msra.mxu0 0.0
    %4071 = vmatprep.subr.mxu0 0.0
    %4072 = vmatpush1.xpose.msra.mxu0 0.0
    %4073 = vmatprep.subr.mxu0 0.0
    %4074 = vmatpush1.xpose.msra.mxu0 0.0
    %4075 = vmatprep.subr.mxu0 0.0
    %4076 = vmatpush1.xpose.msra.mxu0 0.0
    %4077 = vmatprep.subr.mxu0 0.0
    %4078 = vmatpush1.xpose.msra.mxu0 0.0
    %4079 = vmatprep.subr.mxu0 0.0
    %4080 = vmatpush1.xpose.msra.mxu0 0.0
    %4081 = vmatprep.subr.mxu0 0.0
    %4082 = vmatpush1.xpose.msra.mxu0 0.0
    %4083 = vmatprep.subr.mxu0 0.0
    %4084 = vmatpush1.xpose.msra.mxu0 0.0
    %4085 = vmatprep.subr.mxu0 0.0
    %4086 = vmatpush1.xpose.msra.mxu0 0.0
    %4087 = vmatprep.subr.mxu0 0.0
    %4088 = vmatpush1.xpose.msra.mxu0 0.0
    %4089 = vmatprep.subr.mxu0 0.0
    %4090 = vmatpush1.xpose.msra.mxu0 0.0
    %4091 = vmatprep.subr.mxu0 0.0
    %4092 = vmatpush1.xpose.msra.mxu0 0.0
    %4093 = vmatprep.subr.mxu0 0.0
    %4094 = vmatpush1.xpose.msra.mxu0 0.0
    %4095 = vmatprep.subr.mxu0 0.0
    %4096 = vmatpush1.xpose.msra.mxu0 0.0
    %4097 = vmatprep.subr.mxu0 0.0
    %4098 = vmatpush1.xpose.msra.mxu0 0.0
    %4099 = vmatprep.subr.mxu0 0.0
    %4100 = vmatpush1.xpose.msra.mxu0 0.0
    %4101 = vmatprep.subr.mxu0 0.0
    %4102 = vmatpush1.xpose.msra.mxu0 0.0
    %4103 = vmatprep.subr.mxu0 0.0
    %4104 = vmatpush1.xpose.msra.mxu0 0.0
    %4105 = vmatprep.subr.mxu0 0.0
    %4106 = vmatpush1.xpose.msra.mxu0 0.0
    %4107 = vmatprep.subr.mxu0 0.0
    %4108 = vmatpush1.xpose.msra.mxu0 0.0
    %4109 = vmatprep.mubr.f32.mxu0 0.0
    %4110 = vmatmul.mubr.f32.gmra.mrb[0].mxu0 %v4029
    %v4111 = vpop.f32.mrb[0].mxu0
    %v4112 = vadd.f32 0.0, %v4111
    %v4113 = vpop.f32.mrb[0].mxu0
    %4114 = vmatprep.mubr.f32.mxu0 0.0
    %4115 = vmatmul.mubr.f32.gmra.mrb[0].mxu0 %v4031
    %v4116 = vpop.f32.mrb[0].mxu0
    %v4117 = vadd.f32 0.0, %v4116
    %v4118 = vpop.f32.mrb[0].mxu0
    %4119 = vmatprep.mubr.f32.mxu0 0.0
    %4120 = vmatmul.mubr.f32.gmra.mrb[0].mxu0 %v4033
    %v4121 = vpop.f32.mrb[0].mxu0
    %v4122 = vadd.f32 0.0, %v4121
    %v4123 = vpop.f32.mrb[0].mxu0
    %4124 = vmatprep.mubr.f32.mxu0 0.0
    %4125 = vmatmul.mubr.f32.gmra.mrb[0].mxu0 %v4035
    %v4126 = vpop.f32.mrb[0].mxu0
    %v4127 = vadd.f32 0.0, %v4126
    %v4128 = vpop.f32.mrb[0].mxu0
    %4129 = vdwg.mxu0
    %v4130 = vmul.f32 %v4112, 0.17677669
    %v4131 = vmul.f32 %v4117, 0.17677669
    %v4132 = vmul.f32 %v4122, 0.17677669
    %v4133 = vmul.f32 %v4127, 0.17677669
    %v4134 = vadd.f32 %v4130, %v592
    %v4135 = vadd.f32 %v4131, %v593
    %v4136 = vadd.f32 %v4132, %v594
    %v4137 = vadd.f32 %v4133, %v595
    %v4138 = vsel %vm1004, %v4134, -inf
    %4139 = vmax.xlane.f32.xlu0 %v4138
    %v4140 = vpop.xlane.xlu0 %4139
    %v4141 = vsel %vm1004, %v4135, -inf
    %4142 = vmax.xlane.f32.xlu0 %v4141
    %v4143 = vpop.xlane.xlu0 %4142
    %v4144 = vsel %vm1004, %v4136, -inf
    %4145 = vmax.xlane.f32.xlu0 %v4144
    %v4146 = vpop.xlane.xlu0 %4145
    %v4147 = vsel %vm1004, %v4137, -inf
    %4148 = vmax.xlane.f32.xlu0 %v4147
    %v4149 = vpop.xlane.xlu0 %4148
    %v4150 = vsub.f32 %v4134, %v4140
    %v4151 = vsub.f32 %v4135, %v4143
    %v4152 = vsub.f32 %v4136, %v4146
    %v4153 = vsub.f32 %v4137, %v4149
    %v4154 = vmul.f32 %v4150, 1.442695
    %v4155 = vpow.pop %v4154
    %v4156 = vmul.f32 %v4151, 1.442695
    %v4157 = vpow.pop %v4156
    %v4158 = vmul.f32 %v4152, 1.442695
    %v4159 = vpow.pop %v4158
    %v4160 = vmul.f32 %v4153, 1.442695
    %v4161 = vpow.pop %v4160
    %v4162 = vsel %vm1004, %v4155, 0.0
    %4163 = vadd.xlane.f32.xlu0 %v4162
    %v4164 = vpop.xlane.xlu0 %4163
    %v4165 = vsel %vm1004, %v4157, 0.0
    %4166 = vadd.xlane.f32.xlu0 %v4165
    %v4167 = vpop.xlane.xlu0 %4166
    %v4168 = vsel %vm1004, %v4159, 0.0
    %4169 = vadd.xlane.f32.xlu0 %v4168
    %v4170 = vpop.xlane.xlu0 %4169
    %v4171 = vsel %vm1004, %v4161, 0.0
    %4172 = vadd.xlane.f32.xlu0 %v4171
    %v4173 = vpop.xlane.xlu0 %4172
    %v4174 = vrcp.pop %v4164
    %v4175 = vrcp.pop %v4167
    %v4176 = vrcp.pop %v4170
    %v4177 = vrcp.pop %v4173
    %v4178 = vmul.f32 %v4155, %v4174
    %v4179 = vmul.f32 %v4157, %v4175
    %v4180 = vmul.f32 %v4159, %v4176
    %v4181 = vmul.f32 %v4161, %v4177
    %4182 = vrot.lane.b32.xlu0 %v3459, 64
    %v4183 = vpop.permute.xlu0 %4182
    %4184 = vrot.lane.b32.xlu0 %v3462, 64
    %v4185 = vpop.permute.xlu0 %4184
    %4186 = vrot.lane.b32.xlu0 %v3467, 64
    %v4187 = vpop.permute.xlu0 %4186
    %4188 = vrot.lane.b32.xlu0 %v3470, 64
    %v4189 = vpop.permute.xlu0 %4188
    %v4195 = vsel %vm1004, %v4178, 0
    %v4198 = vsel %vm1004, %v4179, 0
    %v4201 = vsel %vm1004, %v4180, 0
    %v4204 = vsel %vm1004, %v4181, 0
    %4206 = vmatprep.subr.mxu0 0.0
    %4207 = vmatpush1.msra.mxu0 %v4183
    %4208 = vmatprep.subr.mxu0 0.0
    %4209 = vmatpush1.msra.mxu0 %v4185
    %4210 = vmatprep.subr.mxu0 0.0
    %4211 = vmatpush1.msra.mxu0 %v4187
    %4212 = vmatprep.subr.mxu0 0.0
    %4213 = vmatpush1.msra.mxu0 %v4189
    %4214 = vmatprep.subr.mxu0 0.0
    %4215 = vmatpush1.msra.mxu0 0.0
    %4216 = vmatprep.subr.mxu0 0.0
    %4217 = vmatpush1.msra.mxu0 0.0
    %4218 = vmatprep.subr.mxu0 0.0
    %4219 = vmatpush1.msra.mxu0 0.0
    %4220 = vmatprep.subr.mxu0 0.0
    %4221 = vmatpush1.msra.mxu0 0.0
    %4222 = vmatprep.subr.mxu0 0.0
    %4223 = vmatpush1.msra.mxu0 0.0
    %4224 = vmatprep.subr.mxu0 0.0
    %4225 = vmatpush1.msra.mxu0 0.0
    %4226 = vmatprep.subr.mxu0 0.0
    %4227 = vmatpush1.msra.mxu0 0.0
    %4228 = vmatprep.subr.mxu0 0.0
    %4229 = vmatpush1.msra.mxu0 0.0
    %4230 = vmatprep.subr.mxu0 0.0
    %4231 = vmatpush1.msra.mxu0 0.0
    %4232 = vmatprep.subr.mxu0 0.0
    %4233 = vmatpush1.msra.mxu0 0.0
    %4234 = vmatprep.subr.mxu0 0.0
    %4235 = vmatpush1.msra.mxu0 0.0
    %4236 = vmatprep.subr.mxu0 0.0
    %4237 = vmatpush1.msra.mxu0 0.0
    %4238 = vmatprep.subr.mxu0 0.0
    %4239 = vmatpush1.msra.mxu0 0.0
    %4240 = vmatprep.subr.mxu0 0.0
    %4241 = vmatpush1.msra.mxu0 0.0
    %4242 = vmatprep.subr.mxu0 0.0
    %4243 = vmatpush1.msra.mxu0 0.0
    %4244 = vmatprep.subr.mxu0 0.0
    %4245 = vmatpush1.msra.mxu0 0.0
    %4246 = vmatprep.subr.mxu0 0.0
    %4247 = vmatpush1.msra.mxu0 0.0
    %4248 = vmatprep.subr.mxu0 0.0
    %4249 = vmatpush1.msra.mxu0 0.0
    %4250 = vmatprep.subr.mxu0 0.0
    %4251 = vmatpush1.msra.mxu0 0.0
    %4252 = vmatprep.subr.mxu0 0.0
    %4253 = vmatpush1.msra.mxu0 0.0
    %4254 = vmatprep.subr.mxu0 0.0
    %4255 = vmatpush1.msra.mxu0 0.0
    %4256 = vmatprep.subr.mxu0 0.0
    %4257 = vmatpush1.msra.mxu0 0.0
    %4258 = vmatprep.subr.mxu0 0.0
    %4259 = vmatpush1.msra.mxu0 0.0
    %4260 = vmatprep.subr.mxu0 0.0
    %4261 = vmatpush1.msra.mxu0 0.0
    %4262 = vmatprep.subr.mxu0 0.0
    %4263 = vmatpush1.msra.mxu0 0.0
    %4264 = vmatprep.subr.mxu0 0.0
    %4265 = vmatpush1.msra.mxu0 0.0
    %4266 = vmatprep.subr.mxu0 0.0
    %4267 = vmatpush1.msra.mxu0 0.0
    %4268 = vmatprep.subr.mxu0 0.0
    %4269 = vmatpush1.msra.mxu0 0.0
    %4270 = vmatprep.mubr.f32.mxu0 0.0
    %4271 = vmatmul.mubr.f32.gmra.mrb[0].mxu0 %v4195
    %v4272 = vpop.f32.mrb[0].mxu0
    %v4273 = vadd.f32 0.0, %v4272
    %v4274 = vpop.f32.mrb[0].mxu0
    %4275 = vmatprep.mubr.f32.mxu0 0.0
    %4276 = vmatmul.mubr.f32.gmra.mrb[0].mxu0 %v4198
    %v4277 = vpop.f32.mrb[0].mxu0
    %v4278 = vadd.f32 0.0, %v4277
    %v4279 = vpop.f32.mrb[0].mxu0
    %4280 = vmatprep.mubr.f32.mxu0 0.0
    %4281 = vmatmul.mubr.f32.gmra.mrb[0].mxu0 %v4201
    %v4282 = vpop.f32.mrb[0].mxu0
    %v4283 = vadd.f32 0.0, %v4282
    %v4284 = vpop.f32.mrb[0].mxu0
    %4285 = vmatprep.mubr.f32.mxu0 0.0
    %4286 = vmatmul.mubr.f32.gmra.mrb[0].mxu0 %v4204
    %v4287 = vpop.f32.mrb[0].mxu0
    %v4288 = vadd.f32 0.0, %v4287
    %v4289 = vpop.f32.mrb[0].mxu0
    %4290 = vdwg.mxu0
    %4291 = vrot.lane.b32.xlu0 %v3233, 32
    %v4292 = vpop.permute.xlu0 %4291
    %4293 = vrot.lane.b32.xlu0 %v3236, 32
    %v4294 = vpop.permute.xlu0 %4293
    %4295 = vrot.lane.b32.xlu0 %v3241, 32
    %v4296 = vpop.permute.xlu0 %4295
    %4297 = vrot.lane.b32.xlu0 %v3244, 32
    %v4298 = vpop.permute.xlu0 %4297
    %4299 = vrot.lane.b32.xlu0 %v3346, 32
    %v4300 = vpop.permute.xlu0 %4299
    %4301 = vrot.lane.b32.xlu0 %v3349, 32
    %v4302 = vpop.permute.xlu0 %4301
    %4303 = vrot.lane.b32.xlu0 %v3354, 32
    %v4304 = vpop.permute.xlu0 %4303
    %4305 = vrot.lane.b32.xlu0 %v3357, 32
    %v4306 = vpop.permute.xlu0 %4305
    %v4307 = vsel %vm1004, %v4292, 0
    %v4309 = vsel %vm1004, %v4294, 0
    %v4311 = vsel %vm1004, %v4296, 0
    %v4313 = vsel %vm1004, %v4298, 0
    %v4315 = vsel %vm1004, %v4300, 0
    %v4317 = vsel %vm1004, %v4302, 0
    %v4319 = vsel %vm1004, %v4304, 0
    %v4321 = vsel %vm1004, %v4306, 0
    %4323 = vmatprep.subr.mxu0 0.0
    %4324 = vmatpush1.xpose.msra.mxu0 %v4315
    %4325 = vmatprep.subr.mxu0 0.0
    %4326 = vmatpush1.xpose.msra.mxu0 %v4317
    %4327 = vmatprep.subr.mxu0 0.0
    %4328 = vmatpush1.xpose.msra.mxu0 %v4319
    %4329 = vmatprep.subr.mxu0 0.0
    %4330 = vmatpush1.xpose.msra.mxu0 %v4321
    %4331 = vmatprep.subr.mxu0 0.0
    %4332 = vmatpush1.xpose.msra.mxu0 0.0
    %4333 = vmatprep.subr.mxu0 0.0
    %4334 = vmatpush1.xpose.msra.mxu0 0.0
    %4335 = vmatprep.subr.mxu0 0.0
    %4336 = vmatpush1.xpose.msra.mxu0 0.0
    %4337 = vmatprep.subr.mxu0 0.0
    %4338 = vmatpush1.xpose.msra.mxu0 0.0
    %4339 = vmatprep.subr.mxu0 0.0
    %4340 = vmatpush1.xpose.msra.mxu0 0.0
    %4341 = vmatprep.subr.mxu0 0.0
    %4342 = vmatpush1.xpose.msra.mxu0 0.0
    %4343 = vmatprep.subr.mxu0 0.0
    %4344 = vmatpush1.xpose.msra.mxu0 0.0
    %4345 = vmatprep.subr.mxu0 0.0
    %4346 = vmatpush1.xpose.msra.mxu0 0.0
    %4347 = vmatprep.subr.mxu0 0.0
    %4348 = vmatpush1.xpose.msra.mxu0 0.0
    %4349 = vmatprep.subr.mxu0 0.0
    %4350 = vmatpush1.xpose.msra.mxu0 0.0
    %4351 = vmatprep.subr.mxu0 0.0
    %4352 = vmatpush1.xpose.msra.mxu0 0.0
    %4353 = vmatprep.subr.mxu0 0.0
    %4354 = vmatpush1.xpose.msra.mxu0 0.0
    %4355 = vmatprep.subr.mxu0 0.0
    %4356 = vmatpush1.xpose.msra.mxu0 0.0
    %4357 = vmatprep.subr.mxu0 0.0
    %4358 = vmatpush1.xpose.msra.mxu0 0.0
    %4359 = vmatprep.subr.mxu0 0.0
    %4360 = vmatpush1.xpose.msra.mxu0 0.0
    %4361 = vmatprep.subr.mxu0 0.0
    %4362 = vmatpush1.xpose.msra.mxu0 0.0
    %4363 = vmatprep.subr.mxu0 0.0
    %4364 = vmatpush1.xpose.msra.mxu0 0.0
    %4365 = vmatprep.subr.mxu0 0.0
    %4366 = vmatpush1.xpose.msra.mxu0 0.0
    %4367 = vmatprep.subr.mxu0 0.0
    %4368 = vmatpush1.xpose.msra.mxu0 0.0
    %4369 = vmatprep.subr.mxu0 0.0
    %4370 = vmatpush1.xpose.msra.mxu0 0.0
    %4371 = vmatprep.subr.mxu0 0.0
    %4372 = vmatpush1.xpose.msra.mxu0 0.0
    %4373 = vmatprep.subr.mxu0 0.0
    %4374 = vmatpush1.xpose.msra.mxu0 0.0
    %4375 = vmatprep.subr.mxu0 0.0
    %4376 = vmatpush1.xpose.msra.mxu0 0.0
    %4377 = vmatprep.subr.mxu0 0.0
    %4378 = vmatpush1.xpose.msra.mxu0 0.0
    %4379 = vmatprep.subr.mxu0 0.0
    %4380 = vmatpush1.xpose.msra.mxu0 0.0
    %4381 = vmatprep.subr.mxu0 0.0
    %4382 = vmatpush1.xpose.msra.mxu0 0.0
    %4383 = vmatprep.subr.mxu0 0.0
    %4384 = vmatpush1.xpose.msra.mxu0 0.0
    %4385 = vmatprep.subr.mxu0 0.0
    %4386 = vmatpush1.xpose.msra.mxu0 0.0
    %4387 = vmatprep.mubr.f32.mxu0 0.0
    %4388 = vmatmul.mubr.f32.gmra.mrb[0].mxu0 %v4307
    %v4389 = vpop.f32.mrb[0].mxu0
    %v4390 = vadd.f32 0.0, %v4389
    %v4391 = vpop.f32.mrb[0].mxu0
    %4392 = vmatprep.mubr.f32.mxu0 0.0
    %4393 = vmatmul.mubr.f32.gmra.mrb[0].mxu0 %v4309
    %v4394 = vpop.f32.mrb[0].mxu0
    %v4395 = vadd.f32 0.0, %v4394
    %v4396 = vpop.f32.mrb[0].mxu0
    %4397 = vmatprep.mubr.f32.mxu0 0.0
    %4398 = vmatmul.mubr.f32.gmra.mrb[0].mxu0 %v4311
    %v4399 = vpop.f32.mrb[0].mxu0
    %v4400 = vadd.f32 0.0, %v4399
    %v4401 = vpop.f32.mrb[0].mxu0
    %4402 = vmatprep.mubr.f32.mxu0 0.0
    %4403 = vmatmul.mubr.f32.gmra.mrb[0].mxu0 %v4313
    %v4404 = vpop.f32.mrb[0].mxu0
    %v4405 = vadd.f32 0.0, %v4404
    %v4406 = vpop.f32.mrb[0].mxu0
    %4407 = vdwg.mxu0
    %v4408 = vmul.f32 %v4390, 0.17677669
    %v4409 = vmul.f32 %v4395, 0.17677669
    %v4410 = vmul.f32 %v4400, 0.17677669
    %v4411 = vmul.f32 %v4405, 0.17677669
    %v4412 = vadd.f32 %v4408, %v592
    %v4413 = vadd.f32 %v4409, %v593
    %v4414 = vadd.f32 %v4410, %v594
    %v4415 = vadd.f32 %v4411, %v595
    %v4416 = vsel %vm1004, %v4412, -inf
    %4417 = vmax.xlane.f32.xlu0 %v4416
    %v4418 = vpop.xlane.xlu0 %4417
    %v4419 = vsel %vm1004, %v4413, -inf
    %4420 = vmax.xlane.f32.xlu0 %v4419
    %v4421 = vpop.xlane.xlu0 %4420
    %v4422 = vsel %vm1004, %v4414, -inf
    %4423 = vmax.xlane.f32.xlu0 %v4422
    %v4424 = vpop.xlane.xlu0 %4423
    %v4425 = vsel %vm1004, %v4415, -inf
    %4426 = vmax.xlane.f32.xlu0 %v4425
    %v4427 = vpop.xlane.xlu0 %4426
    %v4428 = vsub.f32 %v4412, %v4418
    %v4429 = vsub.f32 %v4413, %v4421
    %v4430 = vsub.f32 %v4414, %v4424
    %v4431 = vsub.f32 %v4415, %v4427
    %v4432 = vmul.f32 %v4428, 1.442695
    %v4433 = vpow.pop %v4432
    %v4434 = vmul.f32 %v4429, 1.442695
    %v4435 = vpow.pop %v4434
    %v4436 = vmul.f32 %v4430, 1.442695
    %v4437 = vpow.pop %v4436
    %v4438 = vmul.f32 %v4431, 1.442695
    %v4439 = vpow.pop %v4438
    %v4440 = vsel %vm1004, %v4433, 0.0
    %4441 = vadd.xlane.f32.xlu0 %v4440
    %v4442 = vpop.xlane.xlu0 %4441
    %v4443 = vsel %vm1004, %v4435, 0.0
    %4444 = vadd.xlane.f32.xlu0 %v4443
    %v4445 = vpop.xlane.xlu0 %4444
    %v4446 = vsel %vm1004, %v4437, 0.0
    %4447 = vadd.xlane.f32.xlu0 %v4446
    %v4448 = vpop.xlane.xlu0 %4447
    %v4449 = vsel %vm1004, %v4439, 0.0
    %4450 = vadd.xlane.f32.xlu0 %v4449
    %v4451 = vpop.xlane.xlu0 %4450
    %v4452 = vrcp.pop %v4442
    %v4453 = vrcp.pop %v4445
    %v4454 = vrcp.pop %v4448
    %v4455 = vrcp.pop %v4451
    %v4456 = vmul.f32 %v4433, %v4452
    %v4457 = vmul.f32 %v4435, %v4453
    %v4458 = vmul.f32 %v4437, %v4454
    %v4459 = vmul.f32 %v4439, %v4455
    %4460 = vrot.lane.b32.xlu0 %v3459, 32
    %v4461 = vpop.permute.xlu0 %4460
    %4462 = vrot.lane.b32.xlu0 %v3462, 32
    %v4463 = vpop.permute.xlu0 %4462
    %4464 = vrot.lane.b32.xlu0 %v3467, 32
    %v4465 = vpop.permute.xlu0 %4464
    %4466 = vrot.lane.b32.xlu0 %v3470, 32
    %v4467 = vpop.permute.xlu0 %4466
    %v4473 = vsel %vm1004, %v4456, 0
    %v4476 = vsel %vm1004, %v4457, 0
    %v4479 = vsel %vm1004, %v4458, 0
    %v4482 = vsel %vm1004, %v4459, 0
    %4484 = vmatprep.subr.mxu0 0.0
    %4485 = vmatpush1.msra.mxu0 %v4461
    %4486 = vmatprep.subr.mxu0 0.0
    %4487 = vmatpush1.msra.mxu0 %v4463
    %4488 = vmatprep.subr.mxu0 0.0
    %4489 = vmatpush1.msra.mxu0 %v4465
    %4490 = vmatprep.subr.mxu0 0.0
    %4491 = vmatpush1.msra.mxu0 %v4467
    %4492 = vmatprep.subr.mxu0 0.0
    %4493 = vmatpush1.msra.mxu0 0.0
    %4494 = vmatprep.subr.mxu0 0.0
    %4495 = vmatpush1.msra.mxu0 0.0
    %4496 = vmatprep.subr.mxu0 0.0
    %4497 = vmatpush1.msra.mxu0 0.0
    %4498 = vmatprep.subr.mxu0 0.0
    %4499 = vmatpush1.msra.mxu0 0.0
    %4500 = vmatprep.subr.mxu0 0.0
    %4501 = vmatpush1.msra.mxu0 0.0
    %4502 = vmatprep.subr.mxu0 0.0
    %4503 = vmatpush1.msra.mxu0 0.0
    %4504 = vmatprep.subr.mxu0 0.0
    %4505 = vmatpush1.msra.mxu0 0.0
    %4506 = vmatprep.subr.mxu0 0.0
    %4507 = vmatpush1.msra.mxu0 0.0
    %4508 = vmatprep.subr.mxu0 0.0
    %4509 = vmatpush1.msra.mxu0 0.0
    %4510 = vmatprep.subr.mxu0 0.0
    %4511 = vmatpush1.msra.mxu0 0.0
    %4512 = vmatprep.subr.mxu0 0.0
    %4513 = vmatpush1.msra.mxu0 0.0
    %4514 = vmatprep.subr.mxu0 0.0
    %4515 = vmatpush1.msra.mxu0 0.0
    %4516 = vmatprep.subr.mxu0 0.0
    %4517 = vmatpush1.msra.mxu0 0.0
    %4518 = vmatprep.subr.mxu0 0.0
    %4519 = vmatpush1.msra.mxu0 0.0
    %4520 = vmatprep.subr.mxu0 0.0
    %4521 = vmatpush1.msra.mxu0 0.0
    %4522 = vmatprep.subr.mxu0 0.0
    %4523 = vmatpush1.msra.mxu0 0.0
    %4524 = vmatprep.subr.mxu0 0.0
    %4525 = vmatpush1.msra.mxu0 0.0
    %4526 = vmatprep.subr.mxu0 0.0
    %4527 = vmatpush1.msra.mxu0 0.0
    %4528 = vmatprep.subr.mxu0 0.0
    %4529 = vmatpush1.msra.mxu0 0.0
    %4530 = vmatprep.subr.mxu0 0.0
    %4531 = vmatpush1.msra.mxu0 0.0
    %4532 = vmatprep.subr.mxu0 0.0
    %4533 = vmatpush1.msra.mxu0 0.0
    %4534 = vmatprep.subr.mxu0 0.0
    %4535 = vmatpush1.msra.mxu0 0.0
    %4536 = vmatprep.subr.mxu0 0.0
    %4537 = vmatpush1.msra.mxu0 0.0
    %4538 = vmatprep.subr.mxu0 0.0
    %4539 = vmatpush1.msra.mxu0 0.0
    %4540 = vmatprep.subr.mxu0 0.0
    %4541 = vmatpush1.msra.mxu0 0.0
    %4542 = vmatprep.subr.mxu0 0.0
    %4543 = vmatpush1.msra.mxu0 0.0
    %4544 = vmatprep.subr.mxu0 0.0
    %4545 = vmatpush1.msra.mxu0 0.0
    %4546 = vmatprep.subr.mxu0 0.0
    %4547 = vmatpush1.msra.mxu0 0.0
    %4548 = vmatprep.mubr.f32.mxu0 0.0
    %4549 = vmatmul.mubr.f32.gmra.mrb[0].mxu0 %v4473
    %v4550 = vpop.f32.mrb[0].mxu0
    %v4551 = vadd.f32 0.0, %v4550
    %v4552 = vpop.f32.mrb[0].mxu0
    %4553 = vmatprep.mubr.f32.mxu0 0.0
    %4554 = vmatmul.mubr.f32.gmra.mrb[0].mxu0 %v4476
    %v4555 = vpop.f32.mrb[0].mxu0
    %v4556 = vadd.f32 0.0, %v4555
    %v4557 = vpop.f32.mrb[0].mxu0
    %4558 = vmatprep.mubr.f32.mxu0 0.0
    %4559 = vmatmul.mubr.f32.gmra.mrb[0].mxu0 %v4479
    %v4560 = vpop.f32.mrb[0].mxu0
    %v4561 = vadd.f32 0.0, %v4560
    %v4562 = vpop.f32.mrb[0].mxu0
    %4563 = vmatprep.mubr.f32.mxu0 0.0
    %4564 = vmatmul.mubr.f32.gmra.mrb[0].mxu0 %v4482
    %v4565 = vpop.f32.mrb[0].mxu0
    %v4566 = vadd.f32 0.0, %v4565
    %v4567 = vpop.f32.mrb[0].mxu0
    %4568 = vdwg.mxu0
    %4573 = vrot.lane.b32.xlu0 %v3995, 32
    %v4574 = vpop.permute.xlu0 %4573
    %4575 = vrot.lane.b32.xlu0 %v4000, 32
    %v4576 = vpop.permute.xlu0 %4575
    %4577 = vrot.lane.b32.xlu0 %v4005, 32
    %v4578 = vpop.permute.xlu0 %4577
    %4579 = vrot.lane.b32.xlu0 %v4010, 32
    %v4580 = vpop.permute.xlu0 %4579
    %4589 = vrot.lane.b32.xlu0 %v4273, 64
    %v4590 = vpop.permute.xlu0 %4589
    %4591 = vrot.lane.b32.xlu0 %v4278, 64
    %v4592 = vpop.permute.xlu0 %4591
    %4593 = vrot.lane.b32.xlu0 %v4283, 64
    %v4594 = vpop.permute.xlu0 %4593
    %4595 = vrot.lane.b32.xlu0 %v4288, 64
    %v4596 = vpop.permute.xlu0 %4595
    %4605 = vrot.lane.b32.xlu0 %v4551, 96
    %v4606 = vpop.permute.xlu0 %4605
    %4607 = vrot.lane.b32.xlu0 %v4556, 96
    %v4608 = vpop.permute.xlu0 %4607
    %4609 = vrot.lane.b32.xlu0 %v4561, 96
    %v4610 = vpop.permute.xlu0 %4609
    %4611 = vrot.lane.b32.xlu0 %v4566, 96
    %v4612 = vpop.permute.xlu0 %4611
    %v4617 = vsel %vm1004, %v3713, %v4574
    %v4618 = vsel %vm1004, %v3718, %v4576
    %v4619 = vsel %vm1004, %v3723, %v4578
    %v4620 = vsel %vm1004, %v3728, %v4580
    %v4621 = vsel %vm2153, %v4617, %v4590
    %v4622 = vsel %vm2153, %v4618, %v4592
    %v4623 = vsel %vm2153, %v4619, %v4594
    %v4624 = vsel %vm2153, %v4620, %v4596
    %v4625 = vsel %vm2158, %v4621, %v4606
    %v4626 = vsel %vm2158, %v4622, %v4608
    %v4627 = vsel %vm2158, %v4623, %v4610
    %v4628 = vsel %vm2158, %v4624, %v4612
    %v4629 = vpack.c.bf16 %v4626, %v4625
    %v4630 = vpack.c.bf16 %v4628, %v4627
    %v4631 = vld [vmem:[#allocation16] sm:$0xf]
    %v4632 = vld [vmem:[#allocation16 + $0x4] sm:$0xf]
    %v4633 = vld [vmem:[#allocation16 + $0x8] sm:$0xf]
    %v4634 = vld [vmem:[#allocation16 + $0xc] sm:$0xf]
    %v4635 = vld [vmem:[#allocation16 + $0x10] sm:$0xf]
    %v4636 = vld [vmem:[#allocation16 + $0x14] sm:$0xf]
    %v4637 = vld [vmem:[#allocation16 + $0x18] sm:$0xf]
    %v4638 = vld [vmem:[#allocation16 + $0x1c] sm:$0xf]
    %v4639 = vld [vmem:[#allocation16 + $0x20] sm:$0xf]
    %v4640 = vld [vmem:[#allocation16 + $0x24] sm:$0xf]
    %v4641 = vld [vmem:[#allocation16 + $0x28] sm:$0xf]
    %v4642 = vld [vmem:[#allocation16 + $0x2c] sm:$0xf]
    %v4643 = vld [vmem:[#allocation16 + $0x30] sm:$0xf]
    %v4644 = vld [vmem:[#allocation16 + $0x34] sm:$0xf]
    %v4645 = vld [vmem:[#allocation16 + $0x38] sm:$0xf]
    %v4646 = vld [vmem:[#allocation16 + $0x3c] sm:$0xf]
    %v4647 = vld [vmem:[%s49] sm:$0x1]
    %v4649 = vlaneseq
    %v4650 = vshrl.u32 %v4649, 7
    %v4651 = vsub.s32 0, %v4650
    %v4652 = vrot.slane %v4647, %v4651
    %v4670 = vunpack.c.l.b16 %v4631
    %v4671 = vunpack.c.l.b16 %v4632
    %v4672 = vunpack.c.l.b16 %v4633
    %v4673 = vunpack.c.l.b16 %v4634
    %v4674 = vunpack.c.l.b16 %v4635
    %v4675 = vunpack.c.l.b16 %v4636
    %v4676 = vunpack.c.l.b16 %v4637
    %v4677 = vunpack.c.l.b16 %v4638
    %v4678 = vunpack.c.l.b16 %v4639
    %v4679 = vunpack.c.l.b16 %v4640
    %v4680 = vunpack.c.l.b16 %v4641
    %v4681 = vunpack.c.l.b16 %v4642
    %v4682 = vunpack.c.l.b16 %v4643
    %v4683 = vunpack.c.l.b16 %v4644
    %v4684 = vunpack.c.l.b16 %v4645
    %v4685 = vunpack.c.l.b16 %v4646
    %v4686 = vpack.c.b16 %v4671, %v4670
    %v4687 = vpack.c.b16 %v4673, %v4672
    %v4688 = vpack.c.b16 %v4675, %v4674
    %v4689 = vpack.c.b16 %v4677, %v4676
    %v4690 = vpack.c.b16 %v4679, %v4678
    %v4691 = vpack.c.b16 %v4681, %v4680
    %v4692 = vpack.c.b16 %v4683, %v4682
    %v4693 = vpack.c.b16 %v4685, %v4684
    %4702 = vmatprep.subr.bf16.mxu0 0
    %4703 = vmatpush1.bf16.msra.mxu0 %v4686
    %4704 = vmatprep.subr.bf16.mxu0 0
    %4705 = vmatpush1.bf16.msra.mxu0 %v4687
    %4706 = vmatprep.subr.bf16.mxu0 0
    %4707 = vmatpush1.bf16.msra.mxu0 %v4688
    %4708 = vmatprep.subr.bf16.mxu0 0
    %4709 = vmatpush1.bf16.msra.mxu0 %v4689
    %4710 = vmatprep.subr.bf16.mxu0 0
    %4711 = vmatpush1.bf16.msra.mxu0 %v4690
    %4712 = vmatprep.subr.bf16.mxu0 0
    %4713 = vmatpush1.bf16.msra.mxu0 %v4691
    %4714 = vmatprep.subr.bf16.mxu0 0
    %4715 = vmatpush1.bf16.msra.mxu0 %v4692
    %4716 = vmatprep.subr.bf16.mxu0 0
    %4717 = vmatpush1.bf16.msra.mxu0 %v4693
    %4718 = vmatprep.subr.bf16.mxu0 0
    %4719 = vmatpush1.bf16.msra.mxu0 0
    %4720 = vmatprep.subr.bf16.mxu0 0
    %4721 = vmatpush1.bf16.msra.mxu0 0
    %4722 = vmatprep.subr.bf16.mxu0 0
    %4723 = vmatpush1.bf16.msra.mxu0 0
    %4724 = vmatprep.subr.bf16.mxu0 0
    %4725 = vmatpush1.bf16.msra.mxu0 0
    %4726 = vmatprep.subr.bf16.mxu0 0
    %4727 = vmatpush1.bf16.msra.mxu0 0
    %4728 = vmatprep.subr.bf16.mxu0 0
    %4729 = vmatpush1.bf16.msra.mxu0 0
    %4730 = vmatprep.subr.bf16.mxu0 0
    %4731 = vmatpush1.bf16.msra.mxu0 0
    %4732 = vmatprep.subr.bf16.mxu0 0
    %4733 = vmatpush1.bf16.msra.mxu0 0
    %4734 = vmatprep.mubr.bf16.mxu0 0
    %4735 = vmatmul.mubr.bf16.gmra.mrb[0].mxu0 %v4629
    %v4736 = vpop.f32.mrb[0].mxu0
    %v4737 = vadd.f32 %v4652, %v4736
    %v4738 = vpop.f32.mrb[0].mxu0
    %v4739 = vpop.f32.mrb[0].mxu0
    %v4740 = vadd.f32 %v4652, %v4739
    %v4741 = vpop.f32.mrb[0].mxu0
    %4742 = vmatprep.mubr.bf16.mxu0 0
    %4743 = vmatmul.mubr.bf16.gmra.mrb[0].mxu0 %v4630
    %v4744 = vpop.f32.mrb[0].mxu0
    %v4745 = vadd.f32 %v4652, %v4744
    %v4746 = vpop.f32.mrb[0].mxu0
    %v4747 = vpop.f32.mrb[0].mxu0
    %v4748 = vadd.f32 %v4652, %v4747
    %v4749 = vpop.f32.mrb[0].mxu0
    %4750 = vdwg.mxu0
    %v4751 = vadd.f32 %v3062, %v4737
    %v4752 = vadd.f32 %v3063, %v4740
    %v4753 = vadd.f32 %v3064, %v4745
    %v4754 = vadd.f32 %v3065, %v4748
    %v4755 = vld [vmem:[%s51] sm:$0x1]
    %v4756 = vld [vmem:[%s53] sm:$0x1]
    %4757 = vadd.xlane.f32.xlu0 %v4751
    %v4758 = vpop.xlane.xlu0 %4757
    %4759 = vadd.xlane.f32.xlu0 %v4752
    %v4760 = vpop.xlane.xlu0 %4759
    %4761 = vadd.xlane.f32.xlu0 %v4753
    %v4762 = vpop.xlane.xlu0 %4761
    %4763 = vadd.xlane.f32.xlu0 %v4754
    %v4764 = vpop.xlane.xlu0 %4763
    %v4765 = vmul.f32 %v4758, %v606
    %v4766 = vmul.f32 %v4760, %v606
    %v4767 = vmul.f32 %v4762, %v606
    %v4768 = vmul.f32 %v4764, %v606
    %v4769 = vsub.f32 %v4751, %v4765
    %v4770 = vsub.f32 %v4752, %v4766
    %v4771 = vsub.f32 %v4753, %v4767
    %v4772 = vsub.f32 %v4754, %v4768
    %v4773 = vmul.f32 %v4769, %v4769
    %v4774 = vmul.f32 %v4770, %v4770
    %v4775 = vmul.f32 %v4771, %v4771
    %v4776 = vmul.f32 %v4772, %v4772
    %4777 = vadd.xlane.f32.xlu0 %v4773
    %v4778 = vpop.xlane.xlu0 %4777
    %4779 = vadd.xlane.f32.xlu0 %v4774
    %v4780 = vpop.xlane.xlu0 %4779
    %4781 = vadd.xlane.f32.xlu0 %v4775
    %v4782 = vpop.xlane.xlu0 %4781
    %4783 = vadd.xlane.f32.xlu0 %v4776
    %v4784 = vpop.xlane.xlu0 %4783
    %v4785 = vmul.f32 %v4778, %v606
    %v4786 = vmul.f32 %v4780, %v606
    %v4787 = vmul.f32 %v4782, %v606
    %v4788 = vmul.f32 %v4784, %v606
    %v4789 = vadd.f32 %v4785, 1e-05
    %v4790 = vadd.f32 %v4786, 1e-05
    %v4791 = vadd.f32 %v4787, 1e-05
    %v4792 = vadd.f32 %v4788, 1e-05
    %v4793 = vrsqrt.pop %v4789
    %v4794 = vrsqrt.pop %v4790
    %v4795 = vrsqrt.pop %v4791
    %v4796 = vrsqrt.pop %v4792
    %v4797 = vmul.f32 %v4769, %v4793
    %v4798 = vmul.f32 %v4770, %v4794
    %v4799 = vmul.f32 %v4771, %v4795
    %v4800 = vmul.f32 %v4772, %v4796
    %v4802 = vlaneseq
    %v4803 = vshrl.u32 %v4802, 7
    %v4804 = vsub.s32 0, %v4803
    %v4805 = vrot.slane %v4755, %v4804
    %v4807 = vmul.f32 %v4797, %v4805
    %v4808 = vmul.f32 %v4798, %v4805
    %v4809 = vmul.f32 %v4799, %v4805
    %v4810 = vmul.f32 %v4800, %v4805
    %v4812 = vlaneseq
    %v4813 = vshrl.u32 %v4812, 7
    %v4814 = vsub.s32 0, %v4813
    %v4815 = vrot.slane %v4756, %v4814
    %v4817 = vadd.f32 %v4807, %v4815
    %v4818 = vadd.f32 %v4808, %v4815
    %v4819 = vadd.f32 %v4809, %v4815
    %v4820 = vadd.f32 %v4810, %v4815
    %v4821 = vpack.c.bf16 %v4818, %v4817
    %v4822 = vpack.c.bf16 %v4820, %v4819
    %v4823 = vld [vmem:[#allocation17] sm:$0xff]
    %v4824 = vld [vmem:[#allocation17 + $0x8] sm:$0xff]
    %v4825 = vld [vmem:[#allocation17 + $0x10] sm:$0xff]
    %v4826 = vld [vmem:[#allocation17 + $0x18] sm:$0xff]
    %v4827 = vld [vmem:[#allocation17 + $0x20] sm:$0xff]
    %v4828 = vld [vmem:[#allocation17 + $0x28] sm:$0xff]
    %v4829 = vld [vmem:[#allocation17 + $0x30] sm:$0xff]
    %v4830 = vld [vmem:[#allocation17 + $0x38] sm:$0xff]
    %v4831 = vld [vmem:[#allocation17 + $0x40] sm:$0xff]
    %v4832 = vld [vmem:[#allocation17 + $0x48] sm:$0xff]
    %v4833 = vld [vmem:[#allocation17 + $0x50] sm:$0xff]
    %v4834 = vld [vmem:[#allocation17 + $0x58] sm:$0xff]
    %v4835 = vld [vmem:[#allocation17 + $0x60] sm:$0xff]
    %v4836 = vld [vmem:[#allocation17 + $0x68] sm:$0xff]
    %v4837 = vld [vmem:[#allocation17 + $0x70] sm:$0xff]
    %v4838 = vld [vmem:[#allocation17 + $0x78] sm:$0xff]
    %v4839 = vld [vmem:[#allocation17 + $0x80] sm:$0xff]
    %v4840 = vld [vmem:[#allocation17 + $0x88] sm:$0xff]
    %v4841 = vld [vmem:[#allocation17 + $0x90] sm:$0xff]
    %v4842 = vld [vmem:[#allocation17 + $0x98] sm:$0xff]
    %v4843 = vld [vmem:[#allocation17 + $0xa0] sm:$0xff]
    %v4844 = vld [vmem:[#allocation17 + $0xa8] sm:$0xff]
    %v4845 = vld [vmem:[#allocation17 + $0xb0] sm:$0xff]
    %v4846 = vld [vmem:[#allocation17 + $0xb8] sm:$0xff]
    %v4847 = vld [vmem:[#allocation17 + $0xc0] sm:$0xff]
    %v4848 = vld [vmem:[#allocation17 + $0xc8] sm:$0xff]
    %v4849 = vld [vmem:[#allocation17 + $0xd0] sm:$0xff]
    %v4850 = vld [vmem:[#allocation17 + $0xd8] sm:$0xff]
    %v4851 = vld [vmem:[#allocation17 + $0xe0] sm:$0xff]
    %v4852 = vld [vmem:[#allocation17 + $0xe8] sm:$0xff]
    %v4853 = vld [vmem:[#allocation17 + $0xf0] sm:$0xff]
    %v4854 = vld [vmem:[#allocation17 + $0xf8] sm:$0xff]
    %v4855 = vld [vmem:[%s57] sm:$0xf]
    %v4857 = vlaneseq
    %v4858 = vshrl.u32 %v4857, 7
    %v4859 = vsub.s32 0, %v4858
    %v4860 = vrot.slane %v4855, %v4859
    %v4861 = vlaneseq
    %v4862 = vshrl.u32 %v4861, 7
    %v4863 = vsub.s32 1, %v4862
    %v4864 = vrot.slane %v4855, %v4863
    %v4865 = vlaneseq
    %v4866 = vshrl.u32 %v4865, 7
    %v4867 = vsub.s32 2, %v4866
    %v4868 = vrot.slane %v4855, %v4867
    %v4869 = vlaneseq
    %v4870 = vshrl.u32 %v4869, 7
    %v4871 = vsub.s32 3, %v4870
    %v4872 = vrot.slane %v4855, %v4871
    %v4909 = vunpack.c.l.b16 %v4823
    %v4910 = vunpack.c.h.b16 %v4823
    %v4911 = vunpack.c.l.b16 %v4824
    %v4912 = vunpack.c.h.b16 %v4824
    %v4913 = vunpack.c.l.b16 %v4825
    %v4914 = vunpack.c.h.b16 %v4825
    %v4915 = vunpack.c.l.b16 %v4826
    %v4916 = vunpack.c.h.b16 %v4826
    %v4917 = vunpack.c.l.b16 %v4827
    %v4918 = vunpack.c.h.b16 %v4827
    %v4919 = vunpack.c.l.b16 %v4828
    %v4920 = vunpack.c.h.b16 %v4828
    %v4921 = vunpack.c.l.b16 %v4829
    %v4922 = vunpack.c.h.b16 %v4829
    %v4923 = vunpack.c.l.b16 %v4830
    %v4924 = vunpack.c.h.b16 %v4830
    %v4925 = vunpack.c.l.b16 %v4831
    %v4926 = vunpack.c.h.b16 %v4831
    %v4927 = vunpack.c.l.b16 %v4832
    %v4928 = vunpack.c.h.b16 %v4832
    %v4929 = vunpack.c.l.b16 %v4833
    %v4930 = vunpack.c.h.b16 %v4833
    %v4931 = vunpack.c.l.b16 %v4834
    %v4932 = vunpack.c.h.b16 %v4834
    %v4933 = vunpack.c.l.b16 %v4835
    %v4934 = vunpack.c.h.b16 %v4835
    %v4935 = vunpack.c.l.b16 %v4836
    %v4936 = vunpack.c.h.b16 %v4836
    %v4937 = vunpack.c.l.b16 %v4837
    %v4938 = vunpack.c.h.b16 %v4837
    %v4939 = vunpack.c.l.b16 %v4838
    %v4940 = vunpack.c.h.b16 %v4838
    %v4941 = vunpack.c.l.b16 %v4839
    %v4942 = vunpack.c.h.b16 %v4839
    %v4943 = vunpack.c.l.b16 %v4840
    %v4944 = vunpack.c.h.b16 %v4840
    %v4945 = vunpack.c.l.b16 %v4841
    %v4946 = vunpack.c.h.b16 %v4841
    %v4947 = vunpack.c.l.b16 %v4842
    %v4948 = vunpack.c.h.b16 %v4842
    %v4949 = vunpack.c.l.b16 %v4843
    %v4950 = vunpack.c.h.b16 %v4843
    %v4951 = vunpack.c.l.b16 %v4844
    %v4952 = vunpack.c.h.b16 %v4844
    %v4953 = vunpack.c.l.b16 %v4845
    %v4954 = vunpack.c.h.b16 %v4845
    %v4955 = vunpack.c.l.b16 %v4846
    %v4956 = vunpack.c.h.b16 %v4846
    %v4957 = vunpack.c.l.b16 %v4847
    %v4958 = vunpack.c.h.b16 %v4847
    %v4959 = vunpack.c.l.b16 %v4848
    %v4960 = vunpack.c.h.b16 %v4848
    %v4961 = vunpack.c.l.b16 %v4849
    %v4962 = vunpack.c.h.b16 %v4849
    %v4963 = vunpack.c.l.b16 %v4850
    %v4964 = vunpack.c.h.b16 %v4850
    %v4965 = vunpack.c.l.b16 %v4851
    %v4966 = vunpack.c.h.b16 %v4851
    %v4967 = vunpack.c.l.b16 %v4852
    %v4968 = vunpack.c.h.b16 %v4852
    %v4969 = vunpack.c.l.b16 %v4853
    %v4970 = vunpack.c.h.b16 %v4853
    %v4971 = vunpack.c.l.b16 %v4854
    %v4972 = vunpack.c.h.b16 %v4854
    %v4973 = vpack.c.b16 %v4913, %v4909
    %v4974 = vpack.c.b16 %v4914, %v4910
    %v4975 = vpack.c.b16 %v4915, %v4911
    %v4976 = vpack.c.b16 %v4916, %v4912
    %v4977 = vpack.c.b16 %v4921, %v4917
    %v4978 = vpack.c.b16 %v4922, %v4918
    %v4979 = vpack.c.b16 %v4923, %v4919
    %v4980 = vpack.c.b16 %v4924, %v4920
    %v4981 = vpack.c.b16 %v4929, %v4925
    %v4982 = vpack.c.b16 %v4930, %v4926
    %v4983 = vpack.c.b16 %v4931, %v4927
    %v4984 = vpack.c.b16 %v4932, %v4928
    %v4985 = vpack.c.b16 %v4937, %v4933
    %v4986 = vpack.c.b16 %v4938, %v4934
    %v4987 = vpack.c.b16 %v4939, %v4935
    %v4988 = vpack.c.b16 %v4940, %v4936
    %v4989 = vpack.c.b16 %v4945, %v4941
    %v4990 = vpack.c.b16 %v4946, %v4942
    %v4991 = vpack.c.b16 %v4947, %v4943
    %v4992 = vpack.c.b16 %v4948, %v4944
    %v4993 = vpack.c.b16 %v4953, %v4949
    %v4994 = vpack.c.b16 %v4954, %v4950
    %v4995 = vpack.c.b16 %v4955, %v4951
    %v4996 = vpack.c.b16 %v4956, %v4952
    %v4997 = vpack.c.b16 %v4961, %v4957
    %v4998 = vpack.c.b16 %v4962, %v4958
    %v4999 = vpack.c.b16 %v4963, %v4959
    %v5000 = vpack.c.b16 %v4964, %v4960
    %v5001 = vpack.c.b16 %v4969, %v4965
    %v5002 = vpack.c.b16 %v4970, %v4966
    %v5003 = vpack.c.b16 %v4971, %v4967
    %v5004 = vpack.c.b16 %v4972, %v4968
    %5037 = vmatprep.subr.bf16.mxu0 %v4974
    %5038 = vmatpush1.bf16.msra.mxu0 %v4973
    %5039 = vmatprep.subr.bf16.mxu0 %v4978
    %5040 = vmatpush1.bf16.msra.mxu0 %v4977
    %5041 = vmatprep.subr.bf16.mxu0 %v4982
    %5042 = vmatpush1.bf16.msra.mxu0 %v4981
    %5043 = vmatprep.subr.bf16.mxu0 %v4986
    %5044 = vmatpush1.bf16.msra.mxu0 %v4985
    %5045 = vmatprep.subr.bf16.mxu0 %v4990
    %5046 = vmatpush1.bf16.msra.mxu0 %v4989
    %5047 = vmatprep.subr.bf16.mxu0 %v4994
    %5048 = vmatpush1.bf16.msra.mxu0 %v4993
    %5049 = vmatprep.subr.bf16.mxu0 %v4998
    %5050 = vmatpush1.bf16.msra.mxu0 %v4997
    %5051 = vmatprep.subr.bf16.mxu0 %v5002
    %5052 = vmatpush1.bf16.msra.mxu0 %v5001
    %5053 = vmatprep.subr.bf16.mxu0 0
    %5054 = vmatpush1.bf16.msra.mxu0 0
    %5055 = vmatprep.subr.bf16.mxu0 0
    %5056 = vmatpush1.bf16.msra.mxu0 0
    %5057 = vmatprep.subr.bf16.mxu0 0
    %5058 = vmatpush1.bf16.msra.mxu0 0
    %5059 = vmatprep.subr.bf16.mxu0 0
    %5060 = vmatpush1.bf16.msra.mxu0 0
    %5061 = vmatprep.subr.bf16.mxu0 0
    %5062 = vmatpush1.bf16.msra.mxu0 0
    %5063 = vmatprep.subr.bf16.mxu0 0
    %5064 = vmatpush1.bf16.msra.mxu0 0
    %5065 = vmatprep.subr.bf16.mxu0 0
    %5066 = vmatpush1.bf16.msra.mxu0 0
    %5067 = vmatprep.subr.bf16.mxu0 0
    %5068 = vmatpush1.bf16.msra.mxu0 0
    %5069 = vmatprep.mubr.bf16.mxu0 0
    %5070 = vmatmul.mubr.bf16.gmra.mrb[0].mxu0 %v4821
    %v5071 = vpop.f32.mrb[0].mxu0
    %v5072 = vadd.f32 %v4860, %v5071
    %v5073 = vpop.f32.mrb[0].mxu0
    %v5074 = vadd.f32 %v4864, %v5073
    %v5075 = vpop.f32.mrb[0].mxu0
    %v5076 = vadd.f32 %v4860, %v5075
    %v5077 = vpop.f32.mrb[0].mxu0
    %v5078 = vadd.f32 %v4864, %v5077
    %5079 = vmatprep.mubr.bf16.mxu0 0
    %5080 = vmatmul.mubr.bf16.gmra.mrb[0].mxu0 %v4822
    %v5081 = vpop.f32.mrb[0].mxu0
    %v5082 = vadd.f32 %v4860, %v5081
    %v5083 = vpop.f32.mrb[0].mxu0
    %v5084 = vadd.f32 %v4864, %v5083
    %v5085 = vpop.f32.mrb[0].mxu0
    %v5086 = vadd.f32 %v4860, %v5085
    %v5087 = vpop.f32.mrb[0].mxu0
    %v5088 = vadd.f32 %v4864, %v5087
    %5089 = vdwg.mxu0
    %5090 = vmatprep.subr.bf16.mxu0 %v4976
    %5091 = vmatpush1.bf16.msra.mxu0 %v4975
    %5092 = vmatprep.subr.bf16.mxu0 %v4980
    %5093 = vmatpush1.bf16.msra.mxu0 %v4979
    %5094 = vmatprep.subr.bf16.mxu0 %v4984
    %5095 = vmatpush1.bf16.msra.mxu0 %v4983
    %5096 = vmatprep.subr.bf16.mxu0 %v4988
    %5097 = vmatpush1.bf16.msra.mxu0 %v4987
    %5098 = vmatprep.subr.bf16.mxu0 %v4992
    %5099 = vmatpush1.bf16.msra.mxu0 %v4991
    %5100 = vmatprep.subr.bf16.mxu0 %v4996
    %5101 = vmatpush1.bf16.msra.mxu0 %v4995
    %5102 = vmatprep.subr.bf16.mxu0 %v5000
    %5103 = vmatpush1.bf16.msra.mxu0 %v4999
    %5104 = vmatprep.subr.bf16.mxu0 %v5004
    %5105 = vmatpush1.bf16.msra.mxu0 %v5003
    %5106 = vmatprep.subr.bf16.mxu0 0
    %5107 = vmatpush1.bf16.msra.mxu0 0
    %5108 = vmatprep.subr.bf16.mxu0 0
    %5109 = vmatpush1.bf16.msra.mxu0 0
    %5110 = vmatprep.subr.bf16.mxu0 0
    %5111 = vmatpush1.bf16.msra.mxu0 0
    %5112 = vmatprep.subr.bf16.mxu0 0
    %5113 = vmatpush1.bf16.msra.mxu0 0
    %5114 = vmatprep.subr.bf16.mxu0 0
    %5115 = vmatpush1.bf16.msra.mxu0 0
    %5116 = vmatprep.subr.bf16.mxu0 0
    %5117 = vmatpush1.bf16.msra.mxu0 0
    %5118 = vmatprep.subr.bf16.mxu0 0
    %5119 = vmatpush1.bf16.msra.mxu0 0
    %5120 = vmatprep.subr.bf16.mxu0 0
    %5121 = vmatpush1.bf16.msra.mxu0 0
    %5122 = vmatprep.mubr.bf16.mxu0 0
    %5123 = vmatmul.mubr.bf16.gmra.mrb[0].mxu0 %v4821
    %v5124 = vpop.f32.mrb[0].mxu0
    %v5125 = vadd.f32 %v4868, %v5124
    %v5126 = vpop.f32.mrb[0].mxu0
    %v5127 = vadd.f32 %v4872, %v5126
    %v5128 = vpop.f32.mrb[0].mxu0
    %v5129 = vadd.f32 %v4868, %v5128
    %v5130 = vpop.f32.mrb[0].mxu0
    %v5131 = vadd.f32 %v4872, %v5130
    %5132 = vmatprep.mubr.bf16.mxu0 0
    %5133 = vmatmul.mubr.bf16.gmra.mrb[0].mxu0 %v4822
    %v5134 = vpop.f32.mrb[0].mxu0
    %v5135 = vadd.f32 %v4868, %v5134
    %v5136 = vpop.f32.mrb[0].mxu0
    %v5137 = vadd.f32 %v4872, %v5136
    %v5138 = vpop.f32.mrb[0].mxu0
    %v5139 = vadd.f32 %v4868, %v5138
    %v5140 = vpop.f32.mrb[0].mxu0
    %v5141 = vadd.f32 %v4872, %v5140
    %5142 = vdwg.mxu0
    %v5143 = vmax.f32 %v5072, 0.0
    %v5144 = vmax.f32 %v5074, 0.0
    %v5145 = vmax.f32 %v5125, 0.0
    %v5146 = vmax.f32 %v5127, 0.0
    %v5147 = vmax.f32 %v5076, 0.0
    %v5148 = vmax.f32 %v5078, 0.0
    %v5149 = vmax.f32 %v5129, 0.0
    %v5150 = vmax.f32 %v5131, 0.0
    %v5151 = vmax.f32 %v5082, 0.0
    %v5152 = vmax.f32 %v5084, 0.0
    %v5153 = vmax.f32 %v5135, 0.0
    %v5154 = vmax.f32 %v5137, 0.0
    %v5155 = vmax.f32 %v5086, 0.0
    %v5156 = vmax.f32 %v5088, 0.0
    %v5157 = vmax.f32 %v5139, 0.0
    %v5158 = vmax.f32 %v5141, 0.0
    %v5159 = vpack.c.bf16 %v5147, %v5143
    %v5160 = vpack.c.bf16 %v5148, %v5144
    %v5161 = vpack.c.bf16 %v5149, %v5145
    %v5162 = vpack.c.bf16 %v5150, %v5146
    %v5163 = vpack.c.bf16 %v5155, %v5151
    %v5164 = vpack.c.bf16 %v5156, %v5152
    %v5165 = vpack.c.bf16 %v5157, %v5153
    %v5166 = vpack.c.bf16 %v5158, %v5154
    %v5167 = vld [vmem:[#allocation19] sm:$0xf]
    %v5168 = vld [vmem:[#allocation19 + $0x4] sm:$0xf]
    %v5169 = vld [vmem:[#allocation19 + $0x8] sm:$0xf]
    %v5170 = vld [vmem:[#allocation19 + $0xc] sm:$0xf]
    %v5171 = vld [vmem:[#allocation19 + $0x10] sm:$0xf]
    %v5172 = vld [vmem:[#allocation19 + $0x14] sm:$0xf]
    %v5173 = vld [vmem:[#allocation19 + $0x18] sm:$0xf]
    %v5174 = vld [vmem:[#allocation19 + $0x1c] sm:$0xf]
    %v5175 = vld [vmem:[#allocation19 + $0x20] sm:$0xf]
    %v5176 = vld [vmem:[#allocation19 + $0x24] sm:$0xf]
    %v5177 = vld [vmem:[#allocation19 + $0x28] sm:$0xf]
    %v5178 = vld [vmem:[#allocation19 + $0x2c] sm:$0xf]
    %v5179 = vld [vmem:[#allocation19 + $0x30] sm:$0xf]
    %v5180 = vld [vmem:[#allocation19 + $0x34] sm:$0xf]
    %v5181 = vld [vmem:[#allocation19 + $0x38] sm:$0xf]
    %v5182 = vld [vmem:[#allocation19 + $0x3c] sm:$0xf]
    %v5183 = vld [vmem:[#allocation19 + $0x40] sm:$0xf]
    %v5184 = vld [vmem:[#allocation19 + $0x44] sm:$0xf]
    %v5185 = vld [vmem:[#allocation19 + $0x48] sm:$0xf]
    %v5186 = vld [vmem:[#allocation19 + $0x4c] sm:$0xf]
    %v5187 = vld [vmem:[#allocation19 + $0x50] sm:$0xf]
    %v5188 = vld [vmem:[#allocation19 + $0x54] sm:$0xf]
    %v5189 = vld [vmem:[#allocation19 + $0x58] sm:$0xf]
    %v5190 = vld [vmem:[#allocation19 + $0x5c] sm:$0xf]
    %v5191 = vld [vmem:[#allocation19 + $0x60] sm:$0xf]
    %v5192 = vld [vmem:[#allocation19 + $0x64] sm:$0xf]
    %v5193 = vld [vmem:[#allocation19 + $0x68] sm:$0xf]
    %v5194 = vld [vmem:[#allocation19 + $0x6c] sm:$0xf]
    %v5195 = vld [vmem:[#allocation19 + $0x70] sm:$0xf]
    %v5196 = vld [vmem:[#allocation19 + $0x74] sm:$0xf]
    %v5197 = vld [vmem:[#allocation19 + $0x78] sm:$0xf]
    %v5198 = vld [vmem:[#allocation19 + $0x7c] sm:$0xf]
    %v5199 = vld [vmem:[#allocation19 + $0x80] sm:$0xf]
    %v5200 = vld [vmem:[#allocation19 + $0x84] sm:$0xf]
    %v5201 = vld [vmem:[#allocation19 + $0x88] sm:$0xf]
    %v5202 = vld [vmem:[#allocation19 + $0x8c] sm:$0xf]
    %v5203 = vld [vmem:[#allocation19 + $0x90] sm:$0xf]
    %v5204 = vld [vmem:[#allocation19 + $0x94] sm:$0xf]
    %v5205 = vld [vmem:[#allocation19 + $0x98] sm:$0xf]
    %v5206 = vld [vmem:[#allocation19 + $0x9c] sm:$0xf]
    %v5207 = vld [vmem:[#allocation19 + $0xa0] sm:$0xf]
    %v5208 = vld [vmem:[#allocation19 + $0xa4] sm:$0xf]
    %v5209 = vld [vmem:[#allocation19 + $0xa8] sm:$0xf]
    %v5210 = vld [vmem:[#allocation19 + $0xac] sm:$0xf]
    %v5211 = vld [vmem:[#allocation19 + $0xb0] sm:$0xf]
    %v5212 = vld [vmem:[#allocation19 + $0xb4] sm:$0xf]
    %v5213 = vld [vmem:[#allocation19 + $0xb8] sm:$0xf]
    %v5214 = vld [vmem:[#allocation19 + $0xbc] sm:$0xf]
    %v5215 = vld [vmem:[#allocation19 + $0xc0] sm:$0xf]
    %v5216 = vld [vmem:[#allocation19 + $0xc4] sm:$0xf]
    %v5217 = vld [vmem:[#allocation19 + $0xc8] sm:$0xf]
    %v5218 = vld [vmem:[#allocation19 + $0xcc] sm:$0xf]
    %v5219 = vld [vmem:[#allocation19 + $0xd0] sm:$0xf]
    %v5220 = vld [vmem:[#allocation19 + $0xd4] sm:$0xf]
    %v5221 = vld [vmem:[#allocation19 + $0xd8] sm:$0xf]
    %v5222 = vld [vmem:[#allocation19 + $0xdc] sm:$0xf]
    %v5223 = vld [vmem:[#allocation19 + $0xe0] sm:$0xf]
    %v5224 = vld [vmem:[#allocation19 + $0xe4] sm:$0xf]
    %v5225 = vld [vmem:[#allocation19 + $0xe8] sm:$0xf]
    %v5226 = vld [vmem:[#allocation19 + $0xec] sm:$0xf]
    %v5227 = vld [vmem:[#allocation19 + $0xf0] sm:$0xf]
    %v5228 = vld [vmem:[#allocation19 + $0xf4] sm:$0xf]
    %v5229 = vld [vmem:[#allocation19 + $0xf8] sm:$0xf]
    %v5230 = vld [vmem:[#allocation19 + $0xfc] sm:$0xf]
    %v5231 = vld [vmem:[#allocation20] sm:$0x1]
    %v5233 = vlaneseq
    %v5234 = vshrl.u32 %v5233, 7
    %v5235 = vsub.s32 0, %v5234
    %v5236 = vrot.slane %v5231, %v5235
    %v5302 = vunpack.c.l.b16 %v5167
    %v5303 = vunpack.c.l.b16 %v5168
    %v5304 = vunpack.c.l.b16 %v5169
    %v5305 = vunpack.c.l.b16 %v5170
    %v5306 = vunpack.c.l.b16 %v5171
    %v5307 = vunpack.c.l.b16 %v5172
    %v5308 = vunpack.c.l.b16 %v5173
    %v5309 = vunpack.c.l.b16 %v5174
    %v5310 = vunpack.c.l.b16 %v5175
    %v5311 = vunpack.c.l.b16 %v5176
    %v5312 = vunpack.c.l.b16 %v5177
    %v5313 = vunpack.c.l.b16 %v5178
    %v5314 = vunpack.c.l.b16 %v5179
    %v5315 = vunpack.c.l.b16 %v5180
    %v5316 = vunpack.c.l.b16 %v5181
    %v5317 = vunpack.c.l.b16 %v5182
    %v5318 = vunpack.c.l.b16 %v5183
    %v5319 = vunpack.c.l.b16 %v5184
    %v5320 = vunpack.c.l.b16 %v5185
    %v5321 = vunpack.c.l.b16 %v5186
    %v5322 = vunpack.c.l.b16 %v5187
    %v5323 = vunpack.c.l.b16 %v5188
    %v5324 = vunpack.c.l.b16 %v5189
    %v5325 = vunpack.c.l.b16 %v5190
    %v5326 = vunpack.c.l.b16 %v5191
    %v5327 = vunpack.c.l.b16 %v5192
    %v5328 = vunpack.c.l.b16 %v5193
    %v5329 = vunpack.c.l.b16 %v5194
    %v5330 = vunpack.c.l.b16 %v5195
    %v5331 = vunpack.c.l.b16 %v5196
    %v5332 = vunpack.c.l.b16 %v5197
    %v5333 = vunpack.c.l.b16 %v5198
    %v5334 = vunpack.c.l.b16 %v5199
    %v5335 = vunpack.c.l.b16 %v5200
    %v5336 = vunpack.c.l.b16 %v5201
    %v5337 = vunpack.c.l.b16 %v5202
    %v5338 = vunpack.c.l.b16 %v5203
    %v5339 = vunpack.c.l.b16 %v5204
    %v5340 = vunpack.c.l.b16 %v5205
    %v5341 = vunpack.c.l.b16 %v5206
    %v5342 = vunpack.c.l.b16 %v5207
    %v5343 = vunpack.c.l.b16 %v5208
    %v5344 = vunpack.c.l.b16 %v5209
    %v5345 = vunpack.c.l.b16 %v5210
    %v5346 = vunpack.c.l.b16 %v5211
    %v5347 = vunpack.c.l.b16 %v5212
    %v5348 = vunpack.c.l.b16 %v5213
    %v5349 = vunpack.c.l.b16 %v5214
    %v5350 = vunpack.c.l.b16 %v5215
    %v5351 = vunpack.c.l.b16 %v5216
    %v5352 = vunpack.c.l.b16 %v5217
    %v5353 = vunpack.c.l.b16 %v5218
    %v5354 = vunpack.c.l.b16 %v5219
    %v5355 = vunpack.c.l.b16 %v5220
    %v5356 = vunpack.c.l.b16 %v5221
    %v5357 = vunpack.c.l.b16 %v5222
    %v5358 = vunpack.c.l.b16 %v5223
    %v5359 = vunpack.c.l.b16 %v5224
    %v5360 = vunpack.c.l.b16 %v5225
    %v5361 = vunpack.c.l.b16 %v5226
    %v5362 = vunpack.c.l.b16 %v5227
    %v5363 = vunpack.c.l.b16 %v5228
    %v5364 = vunpack.c.l.b16 %v5229
    %v5365 = vunpack.c.l.b16 %v5230
    %v5366 = vpack.c.b16 %v5303, %v5302
    %v5367 = vpack.c.b16 %v5305, %v5304
    %v5368 = vpack.c.b16 %v5307, %v5306
    %v5369 = vpack.c.b16 %v5309, %v5308
    %v5370 = vpack.c.b16 %v5311, %v5310
    %v5371 = vpack.c.b16 %v5313, %v5312
    %v5372 = vpack.c.b16 %v5315, %v5314
    %v5373 = vpack.c.b16 %v5317, %v5316
    %v5374 = vpack.c.b16 %v5319, %v5318
    %v5375 = vpack.c.b16 %v5321, %v5320
    %v5376 = vpack.c.b16 %v5323, %v5322
    %v5377 = vpack.c.b16 %v5325, %v5324
    %v5378 = vpack.c.b16 %v5327, %v5326
    %v5379 = vpack.c.b16 %v5329, %v5328
    %v5380 = vpack.c.b16 %v5331, %v5330
    %v5381 = vpack.c.b16 %v5333, %v5332
    %v5382 = vpack.c.b16 %v5335, %v5334
    %v5383 = vpack.c.b16 %v5337, %v5336
    %v5384 = vpack.c.b16 %v5339, %v5338
    %v5385 = vpack.c.b16 %v5341, %v5340
    %v5386 = vpack.c.b16 %v5343, %v5342
    %v5387 = vpack.c.b16 %v5345, %v5344
    %v5388 = vpack.c.b16 %v5347, %v5346
    %v5389 = vpack.c.b16 %v5349, %v5348
    %v5390 = vpack.c.b16 %v5351, %v5350
    %v5391 = vpack.c.b16 %v5353, %v5352
    %v5392 = vpack.c.b16 %v5355, %v5354
    %v5393 = vpack.c.b16 %v5357, %v5356
    %v5394 = vpack.c.b16 %v5359, %v5358
    %v5395 = vpack.c.b16 %v5361, %v5360
    %v5396 = vpack.c.b16 %v5363, %v5362
    %v5397 = vpack.c.b16 %v5365, %v5364
    %5430 = vmatprep.subr.bf16.mxu0 0
    %5431 = vmatpush1.bf16.msra.mxu0 %v5366
    %5432 = vmatprep.subr.bf16.mxu0 0
    %5433 = vmatpush1.bf16.msra.mxu0 %v5367
    %5434 = vmatprep.subr.bf16.mxu0 0
    %5435 = vmatpush1.bf16.msra.mxu0 %v5368
    %5436 = vmatprep.subr.bf16.mxu0 0
    %5437 = vmatpush1.bf16.msra.mxu0 %v5369
    %5438 = vmatprep.subr.bf16.mxu0 0
    %5439 = vmatpush1.bf16.msra.mxu0 %v5370
    %5440 = vmatprep.subr.bf16.mxu0 0
    %5441 = vmatpush1.bf16.msra.mxu0 %v5371
    %5442 = vmatprep.subr.bf16.mxu0 0
    %5443 = vmatpush1.bf16.msra.mxu0 %v5372
    %5444 = vmatprep.subr.bf16.mxu0 0
    %5445 = vmatpush1.bf16.msra.mxu0 %v5373
    %5446 = vmatprep.subr.bf16.mxu0 0
    %5447 = vmatpush1.bf16.msra.mxu0 %v5374
    %5448 = vmatprep.subr.bf16.mxu0 0
    %5449 = vmatpush1.bf16.msra.mxu0 %v5375
    %5450 = vmatprep.subr.bf16.mxu0 0
    %5451 = vmatpush1.bf16.msra.mxu0 %v5376
    %5452 = vmatprep.subr.bf16.mxu0 0
    %5453 = vmatpush1.bf16.msra.mxu0 %v5377
    %5454 = vmatprep.subr.bf16.mxu0 0
    %5455 = vmatpush1.bf16.msra.mxu0 %v5378
    %5456 = vmatprep.subr.bf16.mxu0 0
    %5457 = vmatpush1.bf16.msra.mxu0 %v5379
    %5458 = vmatprep.subr.bf16.mxu0 0
    %5459 = vmatpush1.bf16.msra.mxu0 %v5380
    %5460 = vmatprep.subr.bf16.mxu0 0
    %5461 = vmatpush1.bf16.msra.mxu0 %v5381
    %5462 = vmatprep.mubr.bf16.mxu0 %v5160
    %5463 = vmatmul.mubr.bf16.gmra.mrb[0].mxu0 %v5159
    %v5464 = vpop.f32.mrb[0].mxu0
    %v5465 = vadd.f32 %v5236, %v5464
    %v5466 = vpop.f32.mrb[0].mxu0
    %v5467 = vpop.f32.mrb[0].mxu0
    %v5468 = vadd.f32 %v5236, %v5467
    %v5469 = vpop.f32.mrb[0].mxu0
    %5470 = vmatprep.mubr.bf16.mxu0 %v5164
    %5471 = vmatmul.mubr.bf16.gmra.mrb[0].mxu0 %v5163
    %v5472 = vpop.f32.mrb[0].mxu0
    %v5473 = vadd.f32 %v5236, %v5472
    %v5474 = vpop.f32.mrb[0].mxu0
    %v5475 = vpop.f32.mrb[0].mxu0
    %v5476 = vadd.f32 %v5236, %v5475
    %v5477 = vpop.f32.mrb[0].mxu0
    %5478 = vdwg.mxu0
    %5479 = vmatprep.subr.bf16.mxu0 0
    %5480 = vmatpush1.bf16.msra.mxu0 %v5382
    %5481 = vmatprep.subr.bf16.mxu0 0
    %5482 = vmatpush1.bf16.msra.mxu0 %v5383
    %5483 = vmatprep.subr.bf16.mxu0 0
    %5484 = vmatpush1.bf16.msra.mxu0 %v5384
    %5485 = vmatprep.subr.bf16.mxu0 0
    %5486 = vmatpush1.bf16.msra.mxu0 %v5385
    %5487 = vmatprep.subr.bf16.mxu0 0
    %5488 = vmatpush1.bf16.msra.mxu0 %v5386
    %5489 = vmatprep.subr.bf16.mxu0 0
    %5490 = vmatpush1.bf16.msra.mxu0 %v5387
    %5491 = vmatprep.subr.bf16.mxu0 0
    %5492 = vmatpush1.bf16.msra.mxu0 %v5388
    %5493 = vmatprep.subr.bf16.mxu0 0
    %5494 = vmatpush1.bf16.msra.mxu0 %v5389
    %5495 = vmatprep.subr.bf16.mxu0 0
    %5496 = vmatpush1.bf16.msra.mxu0 %v5390
    %5497 = vmatprep.subr.bf16.mxu0 0
    %5498 = vmatpush1.bf16.msra.mxu0 %v5391
    %5499 = vmatprep.subr.bf16.mxu0 0
    %5500 = vmatpush1.bf16.msra.mxu0 %v5392
    %5501 = vmatprep.subr.bf16.mxu0 0
    %5502 = vmatpush1.bf16.msra.mxu0 %v5393
    %5503 = vmatprep.subr.bf16.mxu0 0
    %5504 = vmatpush1.bf16.msra.mxu0 %v5394
    %5505 = vmatprep.subr.bf16.mxu0 0
    %5506 = vmatpush1.bf16.msra.mxu0 %v5395
    %5507 = vmatprep.subr.bf16.mxu0 0
    %5508 = vmatpush1.bf16.msra.mxu0 %v5396
    %5509 = vmatprep.subr.bf16.mxu0 0
    %5510 = vmatpush1.bf16.msra.mxu0 %v5397
    %5511 = vmatprep.mubr.bf16.mxu0 %v5162
    %5512 = vmatmul.mubr.bf16.gmra.mrb[0].mxu0 %v5161
    %v5513 = vpop.f32.mrb[0].mxu0
    %v5514 = vadd.f32 %v5465, %v5513
    %v5515 = vpop.f32.mrb[0].mxu0
    %v5516 = vpop.f32.mrb[0].mxu0
    %v5517 = vadd.f32 %v5468, %v5516
    %v5518 = vpop.f32.mrb[0].mxu0
    %5519 = vmatprep.mubr.bf16.mxu0 %v5166
    %5520 = vmatmul.mubr.bf16.gmra.mrb[0].mxu0 %v5165
    %v5521 = vpop.f32.mrb[0].mxu0
    %v5522 = vadd.f32 %v5473, %v5521
    %v5523 = vpop.f32.mrb[0].mxu0
    %v5524 = vpop.f32.mrb[0].mxu0
    %v5525 = vadd.f32 %v5476, %v5524
    %v5526 = vpop.f32.mrb[0].mxu0
    %5527 = vdwg.mxu0
    %v5528 = vadd.f32 %v4751, %v5514
    %v5529 = vadd.f32 %v4752, %v5517
    %v5530 = vadd.f32 %v4753, %v5522
    %v5531 = vadd.f32 %v4754, %v5525
    %v5532 = vld [vmem:[#allocation22] sm:$0x1]
    %v5533 = vld [vmem:[#allocation23] sm:$0x1]
    %5534 = vadd.xlane.f32.xlu0 %v5528
    %v5535 = vpop.xlane.xlu0 %5534
    %5536 = vadd.xlane.f32.xlu0 %v5529
    %v5537 = vpop.xlane.xlu0 %5536
    %5538 = vadd.xlane.f32.xlu0 %v5530
    %v5539 = vpop.xlane.xlu0 %5538
    %5540 = vadd.xlane.f32.xlu0 %v5531
    %v5541 = vpop.xlane.xlu0 %5540
    %v5542 = vmul.f32 %v5535, %v606
    %v5543 = vmul.f32 %v5537, %v606
    %v5544 = vmul.f32 %v5539, %v606
    %v5545 = vmul.f32 %v5541, %v606
    %v5546 = vsub.f32 %v5528, %v5542
    %v5547 = vsub.f32 %v5529, %v5543
    %v5548 = vsub.f32 %v5530, %v5544
    %v5549 = vsub.f32 %v5531, %v5545
    %v5550 = vmul.f32 %v5546, %v5546
    %v5551 = vmul.f32 %v5547, %v5547
    %v5552 = vmul.f32 %v5548, %v5548
    %v5553 = vmul.f32 %v5549, %v5549
    %5554 = vadd.xlane.f32.xlu0 %v5550
    %v5555 = vpop.xlane.xlu0 %5554
    %5556 = vadd.xlane.f32.xlu0 %v5551
    %v5557 = vpop.xlane.xlu0 %5556
    %5558 = vadd.xlane.f32.xlu0 %v5552
    %v5559 = vpop.xlane.xlu0 %5558
    %5560 = vadd.xlane.f32.xlu0 %v5553
    %v5561 = vpop.xlane.xlu0 %5560
    %v5562 = vmul.f32 %v5555, %v606
    %v5563 = vmul.f32 %v5557, %v606
    %v5564 = vmul.f32 %v5559, %v606
    %v5565 = vmul.f32 %v5561, %v606
    %v5566 = vadd.f32 %v5562, 1e-05
    %v5567 = vadd.f32 %v5563, 1e-05
    %v5568 = vadd.f32 %v5564, 1e-05
    %v5569 = vadd.f32 %v5565, 1e-05
    %v5570 = vrsqrt.pop %v5566
    %v5571 = vrsqrt.pop %v5567
    %v5572 = vrsqrt.pop %v5568
    %v5573 = vrsqrt.pop %v5569
    %v5574 = vmul.f32 %v5546, %v5570
    %v5575 = vmul.f32 %v5547, %v5571
    %v5576 = vmul.f32 %v5548, %v5572
    %v5577 = vmul.f32 %v5549, %v5573
    %v5579 = vlaneseq
    %v5580 = vshrl.u32 %v5579, 7
    %v5581 = vsub.s32 0, %v5580
    %v5582 = vrot.slane %v5532, %v5581
    %v5584 = vmul.f32 %v5574, %v5582
    %v5585 = vmul.f32 %v5575, %v5582
    %v5586 = vmul.f32 %v5576, %v5582
    %v5587 = vmul.f32 %v5577, %v5582
    %v5589 = vlaneseq
    %v5590 = vshrl.u32 %v5589, 7
    %v5591 = vsub.s32 0, %v5590
    %v5592 = vrot.slane %v5533, %v5591
    %v5594 = vadd.f32 %v5584, %v5592
    %v5595 = vadd.f32 %v5585, %v5592
    %v5596 = vadd.f32 %v5586, %v5592
    %v5597 = vadd.f32 %v5587, %v5592
    %v5598 = vpack.c.bf16 %v5595, %v5594
    %v5599 = vpack.c.bf16 %v5597, %v5596
    %v5600 = vld [vmem:[#allocation25] sm:$0xf]
    %v5601 = vld [vmem:[#allocation25 + $0x4] sm:$0xf]
    %v5602 = vld [vmem:[#allocation25 + $0x8] sm:$0xf]
    %v5603 = vld [vmem:[#allocation25 + $0xc] sm:$0xf]
    %v5604 = vld [vmem:[#allocation25 + $0x10] sm:$0xf]
    %v5605 = vld [vmem:[#allocation25 + $0x14] sm:$0xf]
    %v5606 = vld [vmem:[#allocation25 + $0x18] sm:$0xf]
    %v5607 = vld [vmem:[#allocation25 + $0x1c] sm:$0xf]
    %v5608 = vld [vmem:[#allocation25 + $0x20] sm:$0xf]
    %v5609 = vld [vmem:[#allocation25 + $0x24] sm:$0xf]
    %v5610 = vld [vmem:[#allocation25 + $0x28] sm:$0xf]
    %v5611 = vld [vmem:[#allocation25 + $0x2c] sm:$0xf]
    %v5612 = vld [vmem:[#allocation25 + $0x30] sm:$0xf]
    %v5613 = vld [vmem:[#allocation25 + $0x34] sm:$0xf]
    %v5614 = vld [vmem:[#allocation25 + $0x38] sm:$0xf]
    %v5615 = vld [vmem:[#allocation25 + $0x3c] sm:$0xf]
    %v5616 = vld [vmem:[#allocation26] sm:$0x1]
    %v5618 = vlaneseq
    %v5619 = vshrl.u32 %v5618, 7
    %v5620 = vsub.s32 0, %v5619
    %v5621 = vrot.slane %v5616, %v5620
    %v5639 = vunpack.c.l.b16 %v5600
    %v5640 = vunpack.c.l.b16 %v5601
    %v5641 = vunpack.c.l.b16 %v5602
    %v5642 = vunpack.c.l.b16 %v5603
    %v5643 = vunpack.c.l.b16 %v5604
    %v5644 = vunpack.c.l.b16 %v5605
    %v5645 = vunpack.c.l.b16 %v5606
    %v5646 = vunpack.c.l.b16 %v5607
    %v5647 = vunpack.c.l.b16 %v5608
    %v5648 = vunpack.c.l.b16 %v5609
    %v5649 = vunpack.c.l.b16 %v5610
    %v5650 = vunpack.c.l.b16 %v5611
    %v5651 = vunpack.c.l.b16 %v5612
    %v5652 = vunpack.c.l.b16 %v5613
    %v5653 = vunpack.c.l.b16 %v5614
    %v5654 = vunpack.c.l.b16 %v5615
    %v5655 = vpack.c.b16 %v5640, %v5639
    %v5656 = vpack.c.b16 %v5642, %v5641
    %v5657 = vpack.c.b16 %v5644, %v5643
    %v5658 = vpack.c.b16 %v5646, %v5645
    %v5659 = vpack.c.b16 %v5648, %v5647
    %v5660 = vpack.c.b16 %v5650, %v5649
    %v5661 = vpack.c.b16 %v5652, %v5651
    %v5662 = vpack.c.b16 %v5654, %v5653
    %5671 = vmatprep.subr.bf16.mxu0 0
    %5672 = vmatpush1.bf16.msra.mxu0 %v5655
    %5673 = vmatprep.subr.bf16.mxu0 0
    %5674 = vmatpush1.bf16.msra.mxu0 %v5656
    %5675 = vmatprep.subr.bf16.mxu0 0
    %5676 = vmatpush1.bf16.msra.mxu0 %v5657
    %5677 = vmatprep.subr.bf16.mxu0 0
    %5678 = vmatpush1.bf16.msra.mxu0 %v5658
    %5679 = vmatprep.subr.bf16.mxu0 0
    %5680 = vmatpush1.bf16.msra.mxu0 %v5659
    %5681 = vmatprep.subr.bf16.mxu0 0
    %5682 = vmatpush1.bf16.msra.mxu0 %v5660
    %5683 = vmatprep.subr.bf16.mxu0 0
    %5684 = vmatpush1.bf16.msra.mxu0 %v5661
    %5685 = vmatprep.subr.bf16.mxu0 0
    %5686 = vmatpush1.bf16.msra.mxu0 %v5662
    %5687 = vmatprep.subr.bf16.mxu0 0
    %5688 = vmatpush1.bf16.msra.mxu0 0
    %5689 = vmatprep.subr.bf16.mxu0 0
    %5690 = vmatpush1.bf16.msra.mxu0 0
    %5691 = vmatprep.subr.bf16.mxu0 0
    %5692 = vmatpush1.bf16.msra.mxu0 0
    %5693 = vmatprep.subr.bf16.mxu0 0
    %5694 = vmatpush1.bf16.msra.mxu0 0
    %5695 = vmatprep.subr.bf16.mxu0 0
    %5696 = vmatpush1.bf16.msra.mxu0 0
    %5697 = vmatprep.subr.bf16.mxu0 0
    %5698 = vmatpush1.bf16.msra.mxu0 0
    %5699 = vmatprep.subr.bf16.mxu0 0
    %5700 = vmatpush1.bf16.msra.mxu0 0
    %5701 = vmatprep.subr.bf16.mxu0 0
    %5702 = vmatpush1.bf16.msra.mxu0 0
    %5703 = vmatprep.mubr.bf16.mxu0 0
    %5704 = vmatmul.mubr.bf16.gmra.mrb[0].mxu0 %v5598
    %v5705 = vpop.f32.mrb[0].mxu0
    %v5706 = vadd.f32 %v5621, %v5705
    %v5707 = vpop.f32.mrb[0].mxu0
    %v5708 = vpop.f32.mrb[0].mxu0
    %v5709 = vadd.f32 %v5621, %v5708
    %v5710 = vpop.f32.mrb[0].mxu0
    %5711 = vmatprep.mubr.bf16.mxu0 0
    %5712 = vmatmul.mubr.bf16.gmra.mrb[0].mxu0 %v5599
    %v5713 = vpop.f32.mrb[0].mxu0
    %v5714 = vadd.f32 %v5621, %v5713
    %v5715 = vpop.f32.mrb[0].mxu0
    %v5716 = vpop.f32.mrb[0].mxu0
    %v5717 = vadd.f32 %v5621, %v5716
    %v5718 = vpop.f32.mrb[0].mxu0
    %5719 = vdwg.mxu0
    %5720 = vst [vmem:[#allocation28] sm:$0xff] %v5706
    %5721 = vst [vmem:[#allocation28 + $0x8] sm:$0xff] %v5709
    %5722 = vst [vmem:[#allocation28 + $0x10] sm:$0xff] %v5714
    %5723 = vst [vmem:[#allocation28 + $0x18] sm:$0xff] %v5717
    // Predicated region
    $region206: #{forward.1} parent=1 // pred_check
      _
    $region207: #{forward.1} parent=1 // pred_check_branch
      %5725 = sbr.rel (0) target = $region209
    $region208: #{forward.1} parent=1 // pred_region
      %s5727 = ssub.s32 512, 512
      %5728 = vsyncadd [#allocation4], %s5727
      %s5729 = sshll.u32 [#allocation28], 4
      %s5730 = int_to_ptr.vmem [resolvable:$true] %s5729
      %5735 = dma.vmem_to_hbm [thread:$0]  %s5730, 512, %s71, [#allocation4], 128, 128, 8
    $region209: #{forward.1} parent=1 // pred_fallthru
      _
    // Predicated region
    $region210: #{forward.1} parent=1 // pred_check
      _
    $region211: #{forward.1} parent=1 // pred_check_branch
      %5737 = sbr.rel (0) target = $region213
    $region212: #{forward.1} parent=1 // pred_region
      %5738 = dma.done [#allocation4], 512
    $region213: #{forward.1} parent=1 // pred_fallthru
      _
    %5739 = vsyncpa [#allocation3], 1
    %5740 = vsyncpa [#allocation6], 1
    %5741 = vsyncpa [#allocation9], 1
    %5742 = vsyncpa [#allocation12], 1
    %5743 = vsyncpa [#allocation15], 1
    %5744 = vsyncpa [#allocation18], 1
    %5745 = vsyncpa [#allocation21], 1
    %5746 = vsyncpa [#allocation24], 1
    %5747 = vsyncpa [#allocation27], 1
    %5748 = vsyncpa [#allocation4], 1

</llo_original>
